<compile_context>
chip_gen: v6e
topology: v6e:2x2x1
jax: 0.10.0
libtpu: 0.0.40
codegen_flags: <defaults>
</compile_context>

<pallas_src>
import numpy as np
import jax
import jax.numpy as jnp
from jax.experimental import pallas as pl
from jax.experimental.pallas import tpu as pltpu

ALPHA = 0.2  # LeakyReLU negative slope


# ----------------------------- in-kernel math ------------------------------ #

def _lrelu(x):
    return jnp.where(x > 0, x, ALPHA * x)


def make_encoder_kernel(num_residual_layers, seq_len, row_tile, halo, tile_ext):
    """Kernel over one row tile of the flattened (N*L, C) activations.

    The tile is extended by `halo` rows on each side (recompute halo, >= the
    receptive-field radius of the conv stack); only the central `row_tile`
    rows are written out.
    """
    R = num_residual_layers

    def kernel(x_ref, w1, b1, w2, b2, w3, b3, rw1, rb1, rw2, rb2, o_ref):
        i = pl.program_id(0)
        start = pl.multiple_of(i * row_tile, row_tile)

        # Extended input tile (bf16 in HBM/VMEM, f32 for elementwise math).
        x = x_ref[pl.ds(start, tile_ext), :].astype(jnp.float32)       # (T, Cin)

        # Hoisted per-row masks, computed ONCE and reused by every k=3 conv.
        # g = global flattened row index of each local row; a tap is masked
        # when the neighbour row belongs to a different sample (or padding).
        g = (i * row_tile - halo) + jax.lax.broadcasted_iota(
            jnp.int32, (tile_ext, 1), 0)
        gm = g % seq_len
        has_prev = gm != 0                 # row is not the first row of a sample
        has_next = gm != (seq_len - 1)     # row is not the last row of a sample

        def conv_k3(h, w, b):
            # h: (T, C) f32, w: (3*C, Cout) bf16, b: (1, Cout) f32
            hp = jnp.where(has_prev, pltpu.roll(h, shift=1, axis=0), 0.0)
            hn = jnp.where(has_next, pltpu.roll(h, shift=tile_ext - 1, axis=0), 0.0)
            hc = jnp.concatenate([hp, h, hn], axis=-1).astype(jnp.bfloat16)
            return jnp.dot(hc, w, preferred_element_type=jnp.float32) + b

        # Encoder trunk: conv->lrelu, conv->lrelu, conv (no activation).
        h = _lrelu(conv_k3(x, w1[...], b1[...]))          # (T, H/2)
        h = _lrelu(conv_k3(h, w2[...], b2[...]))          # (T, H)
        h = conv_k3(h, w3[...], b3[...])                  # (T, H)

        # Residual stack: stacked params, unrolled fori_loop over layers.
        def res_body(j, h):
            r = _lrelu(h)
            r = _lrelu(conv_k3(r, rw1[j], rb1[j]))                         # (T, Rh)
            r = jnp.dot(r.astype(jnp.bfloat16), rw2[j],
                        preferred_element_type=jnp.float32) + rb2[j]       # (T, H)
            return h + r

        h = jax.lax.fori_loop(0, R, res_body, h, unroll=True)
        h = _lrelu(h)   # final activation of ResidualStack (LeakyReLU 0.2)

        # Emit only the halo-free central rows of this tile (halo is a
        # multiple of 8 -> sublane-aligned static slice).
        o_ref[...] = h[halo:halo + row_tile, :].astype(o_ref.dtype)

    return kernel


# ------------------------------- wrapper ----------------------------------- #

def _const_spec(shape, single_buffer):
    """BlockSpec for a block whose index never changes across the grid."""
    nd = len(shape)
    index_map = lambda i, _nd=nd: (0,) * _nd
    if single_buffer:
        # Constant-index blocks are fetched once -> single-buffer them.
        return pl.BlockSpec(shape, index_map, pipeline_mode=pl.Buffered(1))
    return pl.BlockSpec(shape, index_map)


def encoder_forward(x_ncl, params, num_residual_layers, *, row_tile=256):
    """x_ncl: (N, Cin, L) float32 -> (N, hidden_dim, L) float32."""
    N, Cin, L = x_ncl.shape
    hidden = params["w3"].shape[-1]
    R = num_residual_layers
    NL = N * L

    # --- static row tiling: fold batch into rows, tile rows for pipelining ---
    TM = int(min(row_tile, ((NL + 7) // 8) * 8))
    TM = max(8, (TM // 8) * 8)                       # sublane-aligned tile
    NT = -(-NL // TM)                                # number of row tiles
    halo_needed = 3 + R                              # receptive-field radius
    HALO = ((halo_needed + 7) // 8) * 8              # 8-aligned halo slices
    TILE_EXT = TM + 2 * HALO

    kernel = make_encoder_kernel(R, L, TM, HALO, TILE_EXT)

    def forward(x_ncl, p, single_buffer):
        bf16 = jnp.bfloat16
        # Weights: fuse the three conv taps into (3*Cin, Cout); bf16 MXU feed;
        # residual-layer params stacked along a leading layer axis.
        flat = (
            p["w1"].reshape(-1, p["w1"].shape[-1]).astype(bf16), p["b1"],
            p["w2"].reshape(-1, p["w2"].shape[-1]).astype(bf16), p["b2"],
            p["w3"].reshape(-1, p["w3"].shape[-1]).astype(bf16), p["b3"],
            jnp.stack(p["rw1"]).reshape(R, -1, p["rw1"][0].shape[-1]).astype(bf16),
            jnp.stack(p["rb1"]),
            jnp.stack(p["rw2"]).astype(bf16),
            jnp.stack(p["rb2"]),
        )
        # Flatten + zero-pad the rows; bf16 feed halves input HBM traffic.
        x_rows = jnp.transpose(x_ncl, (0, 2, 1)).reshape(NL, Cin)
        x_pad = jnp.pad(x_rows, ((HALO, NT * TM - NL + HALO), (0, 0))).astype(bf16)

        in_specs = [_const_spec(x_pad.shape, single_buffer)]
        in_specs += [_const_spec(a.shape, single_buffer) for a in flat]
        out_spec = pl.BlockSpec((TM, hidden), lambda i: (i, 0))

        out_rows = pl.pallas_call(
            kernel,
            out_shape=jax.ShapeDtypeStruct((NT * TM, hidden), jnp.float32),
            grid_spec=pltpu.PrefetchScalarGridSpec(
                num_scalar_prefetch=0,
                grid=(NT,),
                in_specs=in_specs,
                out_specs=out_spec,
            ),
            compiler_params=pltpu.CompilerParams(
                dimension_semantics=("parallel",),
                vmem_limit_bytes=48 * 1024 * 1024,
            ),
        )(x_pad, *flat)

        out = out_rows[:NL].reshape(N, L, hidden)
        return jnp.transpose(out, (0, 2, 1))                 # (N, hidden, L)

    fwd = jax.jit(forward, static_argnums=(2,))
    try:
        return jax.block_until_ready(fwd(x_ncl, params, True))
    except Exception:
        # Fallback for Pallas versions that reject pipeline_mode / Buffered(1).
        return jax.block_until_ready(fwd(x_ncl, params, False))


# -------------------------- pure-JAX reference ------------------------------ #

def _ref_conv_k3(x, w, b):   # x: (N, L, Cin)
    xp = jnp.pad(x, ((0, 0), (1, 1), (0, 0)))
    return xp[:, :-2] @ w[0] + xp[:, 1:-1] @ w[1] + xp[:, 2:] @ w[2] + b


def _ref_lrelu(x):
    return jnp.where(x > 0, x, ALPHA * x)


def encoder_reference(x_ncl, params, num_residual_layers):
    x = jnp.transpose(x_ncl, (0, 2, 1))
    h = _ref_lrelu(_ref_conv_k3(x, params["w1"], params["b1"]))
    h = _ref_lrelu(_ref_conv_k3(h, params["w2"], params["b2"]))
    h = _ref_conv_k3(h, params["w3"], params["b3"])
    for i in range(num_residual_layers):
        r = _ref_lrelu(h)
        r = _ref_lrelu(_ref_conv_k3(r, params["rw1"][i], params["rb1"][i]))
        r = r @ params["rw2"][i] + params["rb2"][i]
        h = h + r
    h = _ref_lrelu(h)
    return jnp.transpose(h, (0, 2, 1))


# ------------------------------- params ------------------------------------ #

def init_params(key, in_channels, hidden_dim, num_residual_layers, residual_hidden_dim):
    """Deterministic synthetic parameters.

    Conv1d weights are stored as (K, Cin, Cout) (PyTorch stores (Cout, Cin, K));
    biases as (1, Cout).
    """
    keys = jax.random.split(key, 6 + 4 * num_residual_layers)
    k = iter(range(len(keys)))

    def w(shape):
        return 0.1 * jax.random.normal(keys[next(k)], shape, dtype=jnp.float32)

    p = {
        "w1": w((3, in_channels, hidden_dim // 2)),
        "b1": w((1, hidden_dim // 2)),
        "w2": w((3, hidden_dim // 2, hidden_dim)),
        "b2": w((1, hidden_dim)),
        "w3": w((3, hidden_dim, hidden_dim)),
        "b3": w((1, hidden_dim)),
        "rw1": [], "rb1": [], "rw2": [], "rb2": [],
    }
    for _ in range(num_residual_layers):
        p["rw1"].append(w((3, hidden_dim, residual_hidden_dim)))   # k3 conv
        p["rb1"].append(w((1, residual_hidden_dim)))
        p["rw2"].append(w((residual_hidden_dim, hidden_dim)))      # k1 conv
        p["rb2"].append(w((1, hidden_dim)))
    return p


# --------------------------------- main ------------------------------------ #

if __name__ == "__main__":
    # Small shapes: batch=2, in_channels=4, seq_len=16,
    # hidden_dim=32, residual_hidden_dim=16, num_residual_layers=2.
    N, Cin, L = 2, 4, 16
    hidden_dim, residual_hidden_dim, num_residual_layers = 32, 16, 2

    key = jax.random.PRNGKey(0)
    kx, kp = jax.random.split(key)
    x = jax.random.normal(kx, (N, Cin, L), dtype=jnp.float32)   # NCL like PyTorch

    params = init_params(kp, Cin, hidden_dim, num_residual_layers, residual_hidden_dim)

    # row_tile=16 so the 32 folded rows run as 2 halo'd tiles (exercises the
    # tiled "parallel" path); production would use row_tile >= 256.
    out = encoder_forward(x, params, num_residual_layers, row_tile=16)
    out = jax.block_until_ready(out)

    ref = encoder_reference(x, params, num_residual_layers)
    assert out.shape == (N, hidden_dim, L), out.shape
    # bf16 MXU feeds (f32 accumulation) -> loosened tolerance vs the f32 reference.
    np.testing.assert_allclose(np.asarray(out), np.asarray(ref), rtol=2e-2, atol=2e-2)

    print("KERNEL_OK")
</pallas_src>

<mosaic_0001>
module attributes {stable_mosaic.version = 11 : i64} {
  func.func @kernel(%arg0: i32, %arg1: memref<48x4xbf16, #tpu.memory_space<vmem>>, %arg2: memref<12x16xbf16, #tpu.memory_space<vmem>>, %arg3: memref<1x16xf32, #tpu.memory_space<vmem>>, %arg4: memref<48x32xbf16, #tpu.memory_space<vmem>>, %arg5: memref<1x32xf32, #tpu.memory_space<vmem>>, %arg6: memref<96x32xbf16, #tpu.memory_space<vmem>>, %arg7: memref<1x32xf32, #tpu.memory_space<vmem>>, %arg8: memref<2x96x16xbf16, #tpu.memory_space<vmem>>, %arg9: memref<2x1x16xf32, #tpu.memory_space<vmem>>, %arg10: memref<2x16x32xbf16, #tpu.memory_space<vmem>>, %arg11: memref<2x1x32xf32, #tpu.memory_space<vmem>>, %arg12: memref<16x32xf32, #tpu.memory_space<vmem>>) attributes {dimension_semantics = [#tpu.dimension_semantics<parallel>], iteration_bounds = array<i64: 2>, scalar_prefetch = 0 : i64, scratch_operands = 0 : i64, tpu.core_type = #tpu.core_type<tc>, window_params = [{pipeline_mode = #tpu.pipeline_mode<synchronous>, transform_indices = @transform_0, window_bounds = array<i64: 48, 4>}, {pipeline_mode = #tpu.pipeline_mode<synchronous>, transform_indices = @transform_1, window_bounds = array<i64: 12, 16>}, {pipeline_mode = #tpu.pipeline_mode<synchronous>, transform_indices = @transform_2, window_bounds = array<i64: 1, 16>}, {pipeline_mode = #tpu.pipeline_mode<synchronous>, transform_indices = @transform_3, window_bounds = array<i64: 48, 32>}, {pipeline_mode = #tpu.pipeline_mode<synchronous>, transform_indices = @transform_4, window_bounds = array<i64: 1, 32>}, {pipeline_mode = #tpu.pipeline_mode<synchronous>, transform_indices = @transform_5, window_bounds = array<i64: 96, 32>}, {pipeline_mode = #tpu.pipeline_mode<synchronous>, transform_indices = @transform_6, window_bounds = array<i64: 1, 32>}, {pipeline_mode = #tpu.pipeline_mode<synchronous>, transform_indices = @transform_7, window_bounds = array<i64: 2, 96, 16>}, {pipeline_mode = #tpu.pipeline_mode<synchronous>, transform_indices = @transform_8, window_bounds = array<i64: 2, 1, 16>}, {pipeline_mode = #tpu.pipeline_mode<synchronous>, transform_indices = @transform_9, window_bounds = array<i64: 2, 16, 32>}, {pipeline_mode = #tpu.pipeline_mode<synchronous>, transform_indices = @transform_10, window_bounds = array<i64: 2, 1, 32>}, {transform_indices = @transform_11, window_bounds = array<i64: 16, 32>}]} {
    %c16_i32 = arith.constant 16 : i32
    %0 = arith.muli %arg0, %c16_i32 : i32
    %1 = tpu.assume_multiple %0, 16 : i32
    %2 = arith.index_cast %1 : i32 to index
    %c0 = arith.constant 0 : index
    %3 = vector.load %arg1[%2, %c0] : memref<48x4xbf16, #tpu.memory_space<vmem>>, vector<32x4xbf16>
    %4 = arith.extf %3 : vector<32x4xbf16> to vector<32x4xf32>
    %c16_i32_0 = arith.constant 16 : i32
    %5 = arith.muli %arg0, %c16_i32_0 : i32
    %c8_i32 = arith.constant 8 : i32
    %6 = arith.subi %5, %c8_i32 : i32
    %7 = tpu.iota {dimensions = array<i32: 0>} : vector<32x1xi32>
    %8 = vector.broadcast %6 : i32 to vector<32x1xi32>
    %9 = arith.addi %8, %7 : vector<32x1xi32>
    %c16_i32_1 = arith.constant 16 : i32
    %c0_i32 = arith.constant 0 : i32
    %10 = arith.cmpi eq, %c16_i32_1, %c0_i32 : i32
    %c1_i32 = arith.constant 1 : i32
    %11 = arith.select %10, %c1_i32, %c16_i32_1 : i32
    %12 = vector.broadcast %11 : i32 to vector<32x1xi32>
    %13 = arith.remsi %9, %12 : vector<32x1xi32>
    %c0_i32_2 = arith.constant 0 : i32
    %14 = vector.broadcast %c0_i32_2 : i32 to vector<32x1xi32>
    %15 = arith.cmpi ne, %13, %14 : vector<32x1xi32>
    %c0_i32_3 = arith.constant 0 : i32
    %16 = vector.broadcast %c0_i32_3 : i32 to vector<32x1xi32>
    %17 = arith.cmpi slt, %13, %16 : vector<32x1xi32>
    %c0_i32_4 = arith.constant 0 : i32
    %18 = arith.cmpi slt, %11, %c0_i32_4 : i32
    %19 = vector.broadcast %18 : i1 to vector<32x1xi1>
    %20 = vector.broadcast %19 : vector<32x1xi1> to vector<32x1xi1>
    %21 = arith.xori %17, %20 : vector<32x1xi1>
    %22 = arith.andi %21, %15 : vector<32x1xi1>
    %23 = vector.broadcast %11 : i32 to vector<32x1xi32>
    %24 = arith.addi %13, %23 : vector<32x1xi32>
    %25 = arith.select %22, %24, %13 : vector<32x1xi1>, vector<32x1xi32>
    %c0_i32_5 = arith.constant 0 : i32
    %26 = vector.broadcast %c0_i32_5 : i32 to vector<32x1xi32>
    %27 = arith.cmpi ne, %25, %26 : vector<32x1xi32>
    %c15_i32 = arith.constant 15 : i32
    %28 = vector.broadcast %c15_i32 : i32 to vector<32x1xi32>
    %29 = arith.cmpi ne, %25, %28 : vector<32x1xi32>
    %c0_6 = arith.constant 0 : index
    %c0_7 = arith.constant 0 : index
    %30 = vector.load %arg2[%c0_6, %c0_7] : memref<12x16xbf16, #tpu.memory_space<vmem>>, vector<12x16xbf16>
    %c0_8 = arith.constant 0 : index
    %c0_9 = arith.constant 0 : index
    %31 = vector.load %arg3[%c0_8, %c0_9] : memref<1x16xf32, #tpu.memory_space<vmem>>, vector<1x16xf32>
    %c1_i32_10 = arith.constant 1 : i32
    %32 = tpu.dynamic_rotate %4 by %c1_i32_10 dim 0 : vector<32x4xf32>, i32 -> vector<32x4xf32>
    %cst = arith.constant 0.000000e+00 : f32
    %33 = vector.shape_cast %27 : vector<32x1xi1> to vector<32x1xi1>
    %34 = vector.broadcast %33 : vector<32x1xi1> to vector<32x4xi1>
    %35 = vector.broadcast %cst : f32 to vector<32x4xf32>
    %36 = arith.select %34, %32, %35 : vector<32x4xi1>, vector<32x4xf32>
    %c31_i32 = arith.constant 31 : i32
    %37 = tpu.dynamic_rotate %4 by %c31_i32 dim 0 : vector<32x4xf32>, i32 -> vector<32x4xf32>
    %cst_11 = arith.constant 0.000000e+00 : f32
    %38 = vector.shape_cast %29 : vector<32x1xi1> to vector<32x1xi1>
    %39 = vector.broadcast %38 : vector<32x1xi1> to vector<32x4xi1>
    %40 = vector.broadcast %cst_11 : f32 to vector<32x4xf32>
    %41 = arith.select %39, %37, %40 : vector<32x4xi1>, vector<32x4xf32>
    %42 = tpu.concatenate %36, %4, %41 in 1 : vector<32x4xf32>, vector<32x4xf32>, vector<32x4xf32> -> vector<32x12xf32>
    %43 = arith.truncf %42 : vector<32x12xf32> to vector<32x12xbf16>
    %cst_12 = arith.constant dense<0.000000e+00> : vector<32x16xf32>
    %44 = tpu.matmul %43, %30, %cst_12 {dimension_numbers = #tpu.dot_dimension_numbers<[1], [0], [0], [1], [0, 0, 1, 1], [], []>} : vector<32x12xbf16>, vector<12x16xbf16>, vector<32x16xf32> -> vector<32x16xf32>
    %45 = vector.broadcast %31 : vector<1x16xf32> to vector<32x16xf32>
    %46 = arith.addf %44, %45 : vector<32x16xf32>
    %cst_13 = arith.constant 0.000000e+00 : f32
    %47 = vector.broadcast %cst_13 : f32 to vector<32x16xf32>
    %48 = arith.cmpf ogt, %46, %47 : vector<32x16xf32>
    %cst_14 = arith.constant 2.000000e-01 : f32
    %49 = vector.broadcast %cst_14 : f32 to vector<32x16xf32>
    %50 = arith.mulf %49, %46 : vector<32x16xf32>
    %51 = arith.select %48, %46, %50 : vector<32x16xi1>, vector<32x16xf32>
    %c0_15 = arith.constant 0 : index
    %c0_16 = arith.constant 0 : index
    %52 = vector.load %arg4[%c0_15, %c0_16] : memref<48x32xbf16, #tpu.memory_space<vmem>>, vector<48x32xbf16>
    %c0_17 = arith.constant 0 : index
    %c0_18 = arith.constant 0 : index
    %53 = vector.load %arg5[%c0_17, %c0_18] : memref<1x32xf32, #tpu.memory_space<vmem>>, vector<1x32xf32>
    %c1_i32_19 = arith.constant 1 : i32
    %54 = tpu.dynamic_rotate %51 by %c1_i32_19 dim 0 : vector<32x16xf32>, i32 -> vector<32x16xf32>
    %cst_20 = arith.constant 0.000000e+00 : f32
    %55 = vector.shape_cast %27 : vector<32x1xi1> to vector<32x1xi1>
    %56 = vector.broadcast %55 : vector<32x1xi1> to vector<32x16xi1>
    %57 = vector.broadcast %cst_20 : f32 to vector<32x16xf32>
    %58 = arith.select %56, %54, %57 : vector<32x16xi1>, vector<32x16xf32>
    %c31_i32_21 = arith.constant 31 : i32
    %59 = tpu.dynamic_rotate %51 by %c31_i32_21 dim 0 : vector<32x16xf32>, i32 -> vector<32x16xf32>
    %cst_22 = arith.constant 0.000000e+00 : f32
    %60 = vector.shape_cast %29 : vector<32x1xi1> to vector<32x1xi1>
    %61 = vector.broadcast %60 : vector<32x1xi1> to vector<32x16xi1>
    %62 = vector.broadcast %cst_22 : f32 to vector<32x16xf32>
    %63 = arith.select %61, %59, %62 : vector<32x16xi1>, vector<32x16xf32>
    %64 = tpu.concatenate %58, %51, %63 in 1 : vector<32x16xf32>, vector<32x16xf32>, vector<32x16xf32> -> vector<32x48xf32>
    %65 = arith.truncf %64 : vector<32x48xf32> to vector<32x48xbf16>
    %cst_23 = arith.constant dense<0.000000e+00> : vector<32x32xf32>
    %66 = tpu.matmul %65, %52, %cst_23 {dimension_numbers = #tpu.dot_dimension_numbers<[1], [0], [0], [1], [0, 0, 1, 1], [], []>} : vector<32x48xbf16>, vector<48x32xbf16>, vector<32x32xf32> -> vector<32x32xf32>
    %67 = vector.broadcast %53 : vector<1x32xf32> to vector<32x32xf32>
    %68 = arith.addf %66, %67 : vector<32x32xf32>
    %cst_24 = arith.constant 0.000000e+00 : f32
    %69 = vector.broadcast %cst_24 : f32 to vector<32x32xf32>
    %70 = arith.cmpf ogt, %68, %69 : vector<32x32xf32>
    %cst_25 = arith.constant 2.000000e-01 : f32
    %71 = vector.broadcast %cst_25 : f32 to vector<32x32xf32>
    %72 = arith.mulf %71, %68 : vector<32x32xf32>
    %73 = arith.select %70, %68, %72 : vector<32x32xi1>, vector<32x32xf32>
    %c0_26 = arith.constant 0 : index
    %c0_27 = arith.constant 0 : index
    %74 = vector.load %arg6[%c0_26, %c0_27] : memref<96x32xbf16, #tpu.memory_space<vmem>>, vector<96x32xbf16>
    %c0_28 = arith.constant 0 : index
    %c0_29 = arith.constant 0 : index
    %75 = vector.load %arg7[%c0_28, %c0_29] : memref<1x32xf32, #tpu.memory_space<vmem>>, vector<1x32xf32>
    %c1_i32_30 = arith.constant 1 : i32
    %76 = tpu.dynamic_rotate %73 by %c1_i32_30 dim 0 : vector<32x32xf32>, i32 -> vector<32x32xf32>
    %cst_31 = arith.constant 0.000000e+00 : f32
    %77 = vector.shape_cast %27 : vector<32x1xi1> to vector<32x1xi1>
    %78 = vector.broadcast %77 : vector<32x1xi1> to vector<32x32xi1>
    %79 = vector.broadcast %cst_31 : f32 to vector<32x32xf32>
    %80 = arith.select %78, %76, %79 : vector<32x32xi1>, vector<32x32xf32>
    %c31_i32_32 = arith.constant 31 : i32
    %81 = tpu.dynamic_rotate %73 by %c31_i32_32 dim 0 : vector<32x32xf32>, i32 -> vector<32x32xf32>
    %cst_33 = arith.constant 0.000000e+00 : f32
    %82 = vector.shape_cast %29 : vector<32x1xi1> to vector<32x1xi1>
    %83 = vector.broadcast %82 : vector<32x1xi1> to vector<32x32xi1>
    %84 = vector.broadcast %cst_33 : f32 to vector<32x32xf32>
    %85 = arith.select %83, %81, %84 : vector<32x32xi1>, vector<32x32xf32>
    %86 = tpu.concatenate %80, %73, %85 in 1 : vector<32x32xf32>, vector<32x32xf32>, vector<32x32xf32> -> vector<32x96xf32>
    %87 = arith.truncf %86 : vector<32x96xf32> to vector<32x96xbf16>
    %cst_34 = arith.constant dense<0.000000e+00> : vector<32x32xf32>
    %88 = tpu.matmul %87, %74, %cst_34 {dimension_numbers = #tpu.dot_dimension_numbers<[1], [0], [0], [1], [0, 0, 1, 1], [], []>} : vector<32x96xbf16>, vector<96x32xbf16>, vector<32x32xf32> -> vector<32x32xf32>
    %89 = vector.broadcast %75 : vector<1x32xf32> to vector<32x32xf32>
    %90 = arith.addf %88, %89 : vector<32x32xf32>
    %c0_i32_35 = arith.constant 0 : i32
    %cst_36 = arith.constant 0.000000e+00 : f32
    %91 = vector.broadcast %cst_36 : f32 to vector<32x32xf32>
    %92 = arith.cmpf ogt, %90, %91 : vector<32x32xf32>
    %cst_37 = arith.constant 2.000000e-01 : f32
    %93 = vector.broadcast %cst_37 : f32 to vector<32x32xf32>
    %94 = arith.mulf %93, %90 : vector<32x32xf32>
    %95 = arith.select %92, %90, %94 : vector<32x32xi1>, vector<32x32xf32>
    %96 = arith.index_cast %c0_i32_35 : i32 to index
    %c0_38 = arith.constant 0 : index
    %c0_39 = arith.constant 0 : index
    %97 = vector.load %arg8[%96, %c0_38, %c0_39] : memref<2x96x16xbf16, #tpu.memory_space<vmem>>, vector<1x96x16xbf16>
    %98 = vector.shape_cast %97 : vector<1x96x16xbf16> to vector<96x16xbf16>
    %99 = arith.index_cast %c0_i32_35 : i32 to index
    %c0_40 = arith.constant 0 : index
    %c0_41 = arith.constant 0 : index
    %100 = vector.load %arg9[%99, %c0_40, %c0_41] : memref<2x1x16xf32, #tpu.memory_space<vmem>>, vector<1x1x16xf32>
    %101 = vector.shape_cast %100 : vector<1x1x16xf32> to vector<1x16xf32>
    %c1_i32_42 = arith.constant 1 : i32
    %102 = tpu.dynamic_rotate %95 by %c1_i32_42 dim 0 : vector<32x32xf32>, i32 -> vector<32x32xf32>
    %cst_43 = arith.constant 0.000000e+00 : f32
    %103 = vector.shape_cast %27 : vector<32x1xi1> to vector<32x1xi1>
    %104 = vector.broadcast %103 : vector<32x1xi1> to vector<32x32xi1>
    %105 = vector.broadcast %cst_43 : f32 to vector<32x32xf32>
    %106 = arith.select %104, %102, %105 : vector<32x32xi1>, vector<32x32xf32>
    %c31_i32_44 = arith.constant 31 : i32
    %107 = tpu.dynamic_rotate %95 by %c31_i32_44 dim 0 : vector<32x32xf32>, i32 -> vector<32x32xf32>
    %cst_45 = arith.constant 0.000000e+00 : f32
    %108 = vector.shape_cast %29 : vector<32x1xi1> to vector<32x1xi1>
    %109 = vector.broadcast %108 : vector<32x1xi1> to vector<32x32xi1>
    %110 = vector.broadcast %cst_45 : f32 to vector<32x32xf32>
    %111 = arith.select %109, %107, %110 : vector<32x32xi1>, vector<32x32xf32>
    %112 = tpu.concatenate %106, %95, %111 in 1 : vector<32x32xf32>, vector<32x32xf32>, vector<32x32xf32> -> vector<32x96xf32>
    %113 = arith.truncf %112 : vector<32x96xf32> to vector<32x96xbf16>
    %cst_46 = arith.constant dense<0.000000e+00> : vector<32x16xf32>
    %114 = tpu.matmul %113, %98, %cst_46 {dimension_numbers = #tpu.dot_dimension_numbers<[1], [0], [0], [1], [0, 0, 1, 1], [], []>} : vector<32x96xbf16>, vector<96x16xbf16>, vector<32x16xf32> -> vector<32x16xf32>
    %115 = vector.broadcast %101 : vector<1x16xf32> to vector<32x16xf32>
    %116 = arith.addf %114, %115 : vector<32x16xf32>
    %cst_47 = arith.constant 0.000000e+00 : f32
    %117 = vector.broadcast %cst_47 : f32 to vector<32x16xf32>
    %118 = arith.cmpf ogt, %116, %117 : vector<32x16xf32>
    %cst_48 = arith.constant 2.000000e-01 : f32
    %119 = vector.broadcast %cst_48 : f32 to vector<32x16xf32>
    %120 = arith.mulf %119, %116 : vector<32x16xf32>
    %121 = arith.select %118, %116, %120 : vector<32x16xi1>, vector<32x16xf32>
    %122 = arith.truncf %121 : vector<32x16xf32> to vector<32x16xbf16>
    %123 = arith.index_cast %c0_i32_35 : i32 to index
    %c0_49 = arith.constant 0 : index
    %c0_50 = arith.constant 0 : index
    %124 = vector.load %arg10[%123, %c0_49, %c0_50] : memref<2x16x32xbf16, #tpu.memory_space<vmem>>, vector<1x16x32xbf16>
    %125 = vector.shape_cast %124 : vector<1x16x32xbf16> to vector<16x32xbf16>
    %cst_51 = arith.constant dense<0.000000e+00> : vector<32x32xf32>
    %126 = tpu.matmul %122, %125, %cst_51 {dimension_numbers = #tpu.dot_dimension_numbers<[1], [0], [0], [1], [0, 0, 1, 1], [], []>} : vector<32x16xbf16>, vector<16x32xbf16>, vector<32x32xf32> -> vector<32x32xf32>
    %127 = arith.index_cast %c0_i32_35 : i32 to index
    %c0_52 = arith.constant 0 : index
    %c0_53 = arith.constant 0 : index
    %128 = vector.load %arg11[%127, %c0_52, %c0_53] : memref<2x1x32xf32, #tpu.memory_space<vmem>>, vector<1x1x32xf32>
    %129 = vector.shape_cast %128 : vector<1x1x32xf32> to vector<1x32xf32>
    %130 = vector.broadcast %129 : vector<1x32xf32> to vector<32x32xf32>
    %131 = arith.addf %126, %130 : vector<32x32xf32>
    %132 = arith.addf %90, %131 : vector<32x32xf32>
    %c1_i32_54 = arith.constant 1 : i32
    %cst_55 = arith.constant 0.000000e+00 : f32
    %133 = vector.broadcast %cst_55 : f32 to vector<32x32xf32>
    %134 = arith.cmpf ogt, %132, %133 : vector<32x32xf32>
    %cst_56 = arith.constant 2.000000e-01 : f32
    %135 = vector.broadcast %cst_56 : f32 to vector<32x32xf32>
    %136 = arith.mulf %135, %132 : vector<32x32xf32>
    %137 = arith.select %134, %132, %136 : vector<32x32xi1>, vector<32x32xf32>
    %138 = arith.index_cast %c1_i32_54 : i32 to index
    %c0_57 = arith.constant 0 : index
    %c0_58 = arith.constant 0 : index
    %139 = vector.load %arg8[%138, %c0_57, %c0_58] : memref<2x96x16xbf16, #tpu.memory_space<vmem>>, vector<1x96x16xbf16>
    %140 = vector.shape_cast %139 : vector<1x96x16xbf16> to vector<96x16xbf16>
    %141 = arith.index_cast %c1_i32_54 : i32 to index
    %c0_59 = arith.constant 0 : index
    %c0_60 = arith.constant 0 : index
    %142 = vector.load %arg9[%141, %c0_59, %c0_60] : memref<2x1x16xf32, #tpu.memory_space<vmem>>, vector<1x1x16xf32>
    %143 = vector.shape_cast %142 : vector<1x1x16xf32> to vector<1x16xf32>
    %c1_i32_61 = arith.constant 1 : i32
    %144 = tpu.dynamic_rotate %137 by %c1_i32_61 dim 0 : vector<32x32xf32>, i32 -> vector<32x32xf32>
    %cst_62 = arith.constant 0.000000e+00 : f32
    %145 = vector.shape_cast %27 : vector<32x1xi1> to vector<32x1xi1>
    %146 = vector.broadcast %145 : vector<32x1xi1> to vector<32x32xi1>
    %147 = vector.broadcast %cst_62 : f32 to vector<32x32xf32>
    %148 = arith.select %146, %144, %147 : vector<32x32xi1>, vector<32x32xf32>
    %c31_i32_63 = arith.constant 31 : i32
    %149 = tpu.dynamic_rotate %137 by %c31_i32_63 dim 0 : vector<32x32xf32>, i32 -> vector<32x32xf32>
    %cst_64 = arith.constant 0.000000e+00 : f32
    %150 = vector.shape_cast %29 : vector<32x1xi1> to vector<32x1xi1>
    %151 = vector.broadcast %150 : vector<32x1xi1> to vector<32x32xi1>
    %152 = vector.broadcast %cst_64 : f32 to vector<32x32xf32>
    %153 = arith.select %151, %149, %152 : vector<32x32xi1>, vector<32x32xf32>
    %154 = tpu.concatenate %148, %137, %153 in 1 : vector<32x32xf32>, vector<32x32xf32>, vector<32x32xf32> -> vector<32x96xf32>
    %155 = arith.truncf %154 : vector<32x96xf32> to vector<32x96xbf16>
    %cst_65 = arith.constant dense<0.000000e+00> : vector<32x16xf32>
    %156 = tpu.matmul %155, %140, %cst_65 {dimension_numbers = #tpu.dot_dimension_numbers<[1], [0], [0], [1], [0, 0, 1, 1], [], []>} : vector<32x96xbf16>, vector<96x16xbf16>, vector<32x16xf32> -> vector<32x16xf32>
    %157 = vector.broadcast %143 : vector<1x16xf32> to vector<32x16xf32>
    %158 = arith.addf %156, %157 : vector<32x16xf32>
    %cst_66 = arith.constant 0.000000e+00 : f32
    %159 = vector.broadcast %cst_66 : f32 to vector<32x16xf32>
    %160 = arith.cmpf ogt, %158, %159 : vector<32x16xf32>
    %cst_67 = arith.constant 2.000000e-01 : f32
    %161 = vector.broadcast %cst_67 : f32 to vector<32x16xf32>
    %162 = arith.mulf %161, %158 : vector<32x16xf32>
    %163 = arith.select %160, %158, %162 : vector<32x16xi1>, vector<32x16xf32>
    %164 = arith.truncf %163 : vector<32x16xf32> to vector<32x16xbf16>
    %165 = arith.index_cast %c1_i32_54 : i32 to index
    %c0_68 = arith.constant 0 : index
    %c0_69 = arith.constant 0 : index
    %166 = vector.load %arg10[%165, %c0_68, %c0_69] : memref<2x16x32xbf16, #tpu.memory_space<vmem>>, vector<1x16x32xbf16>
    %167 = vector.shape_cast %166 : vector<1x16x32xbf16> to vector<16x32xbf16>
    %cst_70 = arith.constant dense<0.000000e+00> : vector<32x32xf32>
    %168 = tpu.matmul %164, %167, %cst_70 {dimension_numbers = #tpu.dot_dimension_numbers<[1], [0], [0], [1], [0, 0, 1, 1], [], []>} : vector<32x16xbf16>, vector<16x32xbf16>, vector<32x32xf32> -> vector<32x32xf32>
    %169 = arith.index_cast %c1_i32_54 : i32 to index
    %c0_71 = arith.constant 0 : index
    %c0_72 = arith.constant 0 : index
    %170 = vector.load %arg11[%169, %c0_71, %c0_72] : memref<2x1x32xf32, #tpu.memory_space<vmem>>, vector<1x1x32xf32>
    %171 = vector.shape_cast %170 : vector<1x1x32xf32> to vector<1x32xf32>
    %172 = vector.broadcast %171 : vector<1x32xf32> to vector<32x32xf32>
    %173 = arith.addf %168, %172 : vector<32x32xf32>
    %174 = arith.addf %132, %173 : vector<32x32xf32>
    %c2_i32 = arith.constant 2 : i32
    %cst_73 = arith.constant 0.000000e+00 : f32
    %175 = vector.broadcast %cst_73 : f32 to vector<32x32xf32>
    %176 = arith.cmpf ogt, %174, %175 : vector<32x32xf32>
    %cst_74 = arith.constant 2.000000e-01 : f32
    %177 = vector.broadcast %cst_74 : f32 to vector<32x32xf32>
    %178 = arith.mulf %177, %174 : vector<32x32xf32>
    %179 = arith.select %176, %174, %178 : vector<32x32xi1>, vector<32x32xf32>
    %180 = vector.extract_strided_slice %179 {offsets = [8, 0], sizes = [16, 32], strides = [1, 1]} : vector<32x32xf32> to vector<16x32xf32>
    %c0_75 = arith.constant 0 : index
    %c0_76 = arith.constant 0 : index
    %181 = vector.load %arg12[%c0_75, %c0_76] : memref<16x32xf32, #tpu.memory_space<vmem>>, vector<16x32xf32>
    tpu.vector_store %arg12[%c0_75, %c0_76], %180 {strides = array<i32>} : memref<16x32xf32, #tpu.memory_space<vmem>>, vector<16x32xf32>,
    return
  }
  func.func @transform_0(%arg0: i32) -> (i32, i32) {
    %c0_i32 = arith.constant 0 : i32
    %c0_i32_0 = arith.constant 0 : i32
    %c0_i32_1 = arith.constant 0 : i32
    return %c0_i32, %c0_i32_0 : i32, i32
  }
  func.func @transform_1(%arg0: i32) -> (i32, i32) {
    %c0_i32 = arith.constant 0 : i32
    %c0_i32_0 = arith.constant 0 : i32
    %c0_i32_1 = arith.constant 0 : i32
    return %c0_i32, %c0_i32_0 : i32, i32
  }
  func.func @transform_2(%arg0: i32) -> (i32, i32) {
    %c0_i32 = arith.constant 0 : i32
    %c0_i32_0 = arith.constant 0 : i32
    %c0_i32_1 = arith.constant 0 : i32
    return %c0_i32, %c0_i32_0 : i32, i32
  }
  func.func @transform_3(%arg0: i32) -> (i32, i32) {
    %c0_i32 = arith.constant 0 : i32
    %c0_i32_0 = arith.constant 0 : i32
    %c0_i32_1 = arith.constant 0 : i32
    return %c0_i32, %c0_i32_0 : i32, i32
  }
  func.func @transform_4(%arg0: i32) -> (i32, i32) {
    %c0_i32 = arith.constant 0 : i32
    %c0_i32_0 = arith.constant 0 : i32
    %c0_i32_1 = arith.constant 0 : i32
    return %c0_i32, %c0_i32_0 : i32, i32
  }
  func.func @transform_5(%arg0: i32) -> (i32, i32) {
    %c0_i32 = arith.constant 0 : i32
    %c0_i32_0 = arith.constant 0 : i32
    %c0_i32_1 = arith.constant 0 : i32
    return %c0_i32, %c0_i32_0 : i32, i32
  }
  func.func @transform_6(%arg0: i32) -> (i32, i32) {
    %c0_i32 = arith.constant 0 : i32
    %c0_i32_0 = arith.constant 0 : i32
    %c0_i32_1 = arith.constant 0 : i32
    return %c0_i32, %c0_i32_0 : i32, i32
  }
  func.func @transform_7(%arg0: i32) -> (i32, i32, i32) {
    %c0_i32 = arith.constant 0 : i32
    %c0_i32_0 = arith.constant 0 : i32
    %c0_i32_1 = arith.constant 0 : i32
    %c0_i32_2 = arith.constant 0 : i32
    return %c0_i32, %c0_i32_0, %c0_i32_1 : i32, i32, i32
  }
  func.func @transform_8(%arg0: i32) -> (i32, i32, i32) {
    %c0_i32 = arith.constant 0 : i32
    %c0_i32_0 = arith.constant 0 : i32
    %c0_i32_1 = arith.constant 0 : i32
    %c0_i32_2 = arith.constant 0 : i32
    return %c0_i32, %c0_i32_0, %c0_i32_1 : i32, i32, i32
  }
  func.func @transform_9(%arg0: i32) -> (i32, i32, i32) {
    %c0_i32 = arith.constant 0 : i32
    %c0_i32_0 = arith.constant 0 : i32
    %c0_i32_1 = arith.constant 0 : i32
    %c0_i32_2 = arith.constant 0 : i32
    return %c0_i32, %c0_i32_0, %c0_i32_1 : i32, i32, i32
  }
  func.func @transform_10(%arg0: i32) -> (i32, i32, i32) {
    %c0_i32 = arith.constant 0 : i32
    %c0_i32_0 = arith.constant 0 : i32
    %c0_i32_1 = arith.constant 0 : i32
    %c0_i32_2 = arith.constant 0 : i32
    return %c0_i32, %c0_i32_0, %c0_i32_1 : i32, i32, i32
  }
  func.func @transform_11(%arg0: i32) -> (i32, i32) {
    %c0_i32 = arith.constant 0 : i32
    %c0_i32_0 = arith.constant 0 : i32
    return %arg0, %c0_i32 : i32, i32
  }
}

module attributes {stable_mosaic.version = 11 : i64} {
  func.func @kernel(%arg0: i32, %arg1: memref<48x4xbf16, #tpu.memory_space<vmem>>, %arg2: memref<12x16xbf16, #tpu.memory_space<vmem>>, %arg3: memref<1x16xf32, #tpu.memory_space<vmem>>, %arg4: memref<48x32xbf16, #tpu.memory_space<vmem>>, %arg5: memref<1x32xf32, #tpu.memory_space<vmem>>, %arg6: memref<96x32xbf16, #tpu.memory_space<vmem>>, %arg7: memref<1x32xf32, #tpu.memory_space<vmem>>, %arg8: memref<2x96x16xbf16, #tpu.memory_space<vmem>>, %arg9: memref<2x1x16xf32, #tpu.memory_space<vmem>>, %arg10: memref<2x16x32xbf16, #tpu.memory_space<vmem>>, %arg11: memref<2x1x32xf32, #tpu.memory_space<vmem>>, %arg12: memref<16x32xf32, #tpu.memory_space<vmem>>) attributes {dimension_semantics = [#tpu.dimension_semantics<parallel>], iteration_bounds = array<i64: 2>, scalar_prefetch = 0 : i64, scratch_operands = 0 : i64, tpu.core_type = #tpu.core_type<tc>, window_params = [{pipeline_mode = #tpu.pipeline_mode<synchronous>, transform_indices = @transform_0, window_bounds = array<i64: 48, 4>}, {pipeline_mode = #tpu.pipeline_mode<synchronous>, transform_indices = @transform_1, window_bounds = array<i64: 12, 16>}, {pipeline_mode = #tpu.pipeline_mode<synchronous>, transform_indices = @transform_2, window_bounds = array<i64: 1, 16>}, {pipeline_mode = #tpu.pipeline_mode<synchronous>, transform_indices = @transform_3, window_bounds = array<i64: 48, 32>}, {pipeline_mode = #tpu.pipeline_mode<synchronous>, transform_indices = @transform_4, window_bounds = array<i64: 1, 32>}, {pipeline_mode = #tpu.pipeline_mode<synchronous>, transform_indices = @transform_5, window_bounds = array<i64: 96, 32>}, {pipeline_mode = #tpu.pipeline_mode<synchronous>, transform_indices = @transform_6, window_bounds = array<i64: 1, 32>}, {pipeline_mode = #tpu.pipeline_mode<synchronous>, transform_indices = @transform_7, window_bounds = array<i64: 2, 96, 16>}, {pipeline_mode = #tpu.pipeline_mode<synchronous>, transform_indices = @transform_8, window_bounds = array<i64: 2, 1, 16>}, {pipeline_mode = #tpu.pipeline_mode<synchronous>, transform_indices = @transform_9, window_bounds = array<i64: 2, 16, 32>}, {pipeline_mode = #tpu.pipeline_mode<synchronous>, transform_indices = @transform_10, window_bounds = array<i64: 2, 1, 32>}, {transform_indices = @transform_11, window_bounds = array<i64: 16, 32>}]} {
    %c16_i32 = arith.constant 16 : i32
    %0 = arith.muli %arg0, %c16_i32 : i32
    %1 = tpu.assume_multiple %0, 16 : i32
    %2 = arith.index_cast %1 : i32 to index
    %c0 = arith.constant 0 : index
    %3 = vector.load %arg1[%2, %c0] : memref<48x4xbf16, #tpu.memory_space<vmem>>, vector<32x4xbf16>
    %4 = arith.extf %3 : vector<32x4xbf16> to vector<32x4xf32>
    %c16_i32_0 = arith.constant 16 : i32
    %5 = arith.muli %arg0, %c16_i32_0 : i32
    %c8_i32 = arith.constant 8 : i32
    %6 = arith.subi %5, %c8_i32 : i32
    %7 = tpu.iota {dimensions = array<i32: 0>} : vector<32x1xi32>
    %8 = vector.broadcast %6 : i32 to vector<32x1xi32>
    %9 = arith.addi %8, %7 : vector<32x1xi32>
    %c16_i32_1 = arith.constant 16 : i32
    %c0_i32 = arith.constant 0 : i32
    %10 = arith.cmpi eq, %c16_i32_1, %c0_i32 : i32
    %c1_i32 = arith.constant 1 : i32
    %11 = arith.select %10, %c1_i32, %c16_i32_1 : i32
    %12 = vector.broadcast %11 : i32 to vector<32x1xi32>
    %13 = arith.remsi %9, %12 : vector<32x1xi32>
    %c0_i32_2 = arith.constant 0 : i32
    %14 = vector.broadcast %c0_i32_2 : i32 to vector<32x1xi32>
    %15 = arith.cmpi ne, %13, %14 : vector<32x1xi32>
    %c0_i32_3 = arith.constant 0 : i32
    %16 = vector.broadcast %c0_i32_3 : i32 to vector<32x1xi32>
    %17 = arith.cmpi slt, %13, %16 : vector<32x1xi32>
    %c0_i32_4 = arith.constant 0 : i32
    %18 = arith.cmpi slt, %11, %c0_i32_4 : i32
    %19 = vector.broadcast %18 : i1 to vector<32x1xi1>
    %20 = vector.broadcast %19 : vector<32x1xi1> to vector<32x1xi1>
    %21 = arith.xori %17, %20 : vector<32x1xi1>
    %22 = arith.andi %21, %15 : vector<32x1xi1>
    %23 = vector.broadcast %11 : i32 to vector<32x1xi32>
    %24 = arith.addi %13, %23 : vector<32x1xi32>
    %25 = arith.select %22, %24, %13 : vector<32x1xi1>, vector<32x1xi32>
    %c0_i32_5 = arith.constant 0 : i32
    %26 = vector.broadcast %c0_i32_5 : i32 to vector<32x1xi32>
    %27 = arith.cmpi ne, %25, %26 : vector<32x1xi32>
    %c15_i32 = arith.constant 15 : i32
    %28 = vector.broadcast %c15_i32 : i32 to vector<32x1xi32>
    %29 = arith.cmpi ne, %25, %28 : vector<32x1xi32>
    %c0_6 = arith.constant 0 : index
    %c0_7 = arith.constant 0 : index
    %30 = vector.load %arg2[%c0_6, %c0_7] : memref<12x16xbf16, #tpu.memory_space<vmem>>, vector<12x16xbf16>
    %c0_8 = arith.constant 0 : index
    %c0_9 = arith.constant 0 : index
    %31 = vector.load %arg3[%c0_8, %c0_9] : memref<1x16xf32, #tpu.memory_space<vmem>>, vector<1x16xf32>
    %c1_i32_10 = arith.constant 1 : i32
    %32 = tpu.dynamic_rotate %4 by %c1_i32_10 dim 0 : vector<32x4xf32>, i32 -> vector<32x4xf32>
    %cst = arith.constant 0.000000e+00 : f32
    %33 = vector.shape_cast %27 : vector<32x1xi1> to vector<32x1xi1>
    %34 = vector.broadcast %33 : vector<32x1xi1> to vector<32x4xi1>
    %35 = vector.broadcast %cst : f32 to vector<32x4xf32>
    %36 = arith.select %34, %32, %35 : vector<32x4xi1>, vector<32x4xf32>
    %c31_i32 = arith.constant 31 : i32
    %37 = tpu.dynamic_rotate %4 by %c31_i32 dim 0 : vector<32x4xf32>, i32 -> vector<32x4xf32>
    %cst_11 = arith.constant 0.000000e+00 : f32
    %38 = vector.shape_cast %29 : vector<32x1xi1> to vector<32x1xi1>
    %39 = vector.broadcast %38 : vector<32x1xi1> to vector<32x4xi1>
    %40 = vector.broadcast %cst_11 : f32 to vector<32x4xf32>
    %41 = arith.select %39, %37, %40 : vector<32x4xi1>, vector<32x4xf32>
    %42 = tpu.concatenate %36, %4, %41 in 1 : vector<32x4xf32>, vector<32x4xf32>, vector<32x4xf32> -> vector<32x12xf32>
    %43 = arith.truncf %42 : vector<32x12xf32> to vector<32x12xbf16>
    %cst_12 = arith.constant dense<0.000000e+00> : vector<32x16xf32>
    %44 = tpu.matmul %43, %30, %cst_12 {dimension_numbers = #tpu.dot_dimension_numbers<[1], [0], [0], [1], [0, 0, 1, 1], [], []>} : vector<32x12xbf16>, vector<12x16xbf16>, vector<32x16xf32> -> vector<32x16xf32>
    %45 = vector.broadcast %31 : vector<1x16xf32> to vector<32x16xf32>
    %46 = arith.addf %44, %45 : vector<32x16xf32>
    %cst_13 = arith.constant 0.000000e+00 : f32
    %47 = vector.broadcast %cst_13 : f32 to vector<32x16xf32>
    %48 = arith.cmpf ogt, %46, %47 : vector<32x16xf32>
    %cst_14 = arith.constant 2.000000e-01 : f32
    %49 = vector.broadcast %cst_14 : f32 to vector<32x16xf32>
    %50 = arith.mulf %49, %46 : vector<32x16xf32>
    %51 = arith.select %48, %46, %50 : vector<32x16xi1>, vector<32x16xf32>
    %c0_15 = arith.constant 0 : index
    %c0_16 = arith.constant 0 : index
    %52 = vector.load %arg4[%c0_15, %c0_16] : memref<48x32xbf16, #tpu.memory_space<vmem>>, vector<48x32xbf16>
    %c0_17 = arith.constant 0 : index
    %c0_18 = arith.constant 0 : index
    %53 = vector.load %arg5[%c0_17, %c0_18] : memref<1x32xf32, #tpu.memory_space<vmem>>, vector<1x32xf32>
    %c1_i32_19 = arith.constant 1 : i32
    %54 = tpu.dynamic_rotate %51 by %c1_i32_19 dim 0 : vector<32x16xf32>, i32 -> vector<32x16xf32>
    %cst_20 = arith.constant 0.000000e+00 : f32
    %55 = vector.shape_cast %27 : vector<32x1xi1> to vector<32x1xi1>
    %56 = vector.broadcast %55 : vector<32x1xi1> to vector<32x16xi1>
    %57 = vector.broadcast %cst_20 : f32 to vector<32x16xf32>
    %58 = arith.select %56, %54, %57 : vector<32x16xi1>, vector<32x16xf32>
    %c31_i32_21 = arith.constant 31 : i32
    %59 = tpu.dynamic_rotate %51 by %c31_i32_21 dim 0 : vector<32x16xf32>, i32 -> vector<32x16xf32>
    %cst_22 = arith.constant 0.000000e+00 : f32
    %60 = vector.shape_cast %29 : vector<32x1xi1> to vector<32x1xi1>
    %61 = vector.broadcast %60 : vector<32x1xi1> to vector<32x16xi1>
    %62 = vector.broadcast %cst_22 : f32 to vector<32x16xf32>
    %63 = arith.select %61, %59, %62 : vector<32x16xi1>, vector<32x16xf32>
    %64 = tpu.concatenate %58, %51, %63 in 1 : vector<32x16xf32>, vector<32x16xf32>, vector<32x16xf32> -> vector<32x48xf32>
    %65 = arith.truncf %64 : vector<32x48xf32> to vector<32x48xbf16>
    %cst_23 = arith.constant dense<0.000000e+00> : vector<32x32xf32>
    %66 = tpu.matmul %65, %52, %cst_23 {dimension_numbers = #tpu.dot_dimension_numbers<[1], [0], [0], [1], [0, 0, 1, 1], [], []>} : vector<32x48xbf16>, vector<48x32xbf16>, vector<32x32xf32> -> vector<32x32xf32>
    %67 = vector.broadcast %53 : vector<1x32xf32> to vector<32x32xf32>
    %68 = arith.addf %66, %67 : vector<32x32xf32>
    %cst_24 = arith.constant 0.000000e+00 : f32
    %69 = vector.broadcast %cst_24 : f32 to vector<32x32xf32>
    %70 = arith.cmpf ogt, %68, %69 : vector<32x32xf32>
    %cst_25 = arith.constant 2.000000e-01 : f32
    %71 = vector.broadcast %cst_25 : f32 to vector<32x32xf32>
    %72 = arith.mulf %71, %68 : vector<32x32xf32>
    %73 = arith.select %70, %68, %72 : vector<32x32xi1>, vector<32x32xf32>
    %c0_26 = arith.constant 0 : index
    %c0_27 = arith.constant 0 : index
    %74 = vector.load %arg6[%c0_26, %c0_27] : memref<96x32xbf16, #tpu.memory_space<vmem>>, vector<96x32xbf16>
    %c0_28 = arith.constant 0 : index
    %c0_29 = arith.constant 0 : index
    %75 = vector.load %arg7[%c0_28, %c0_29] : memref<1x32xf32, #tpu.memory_space<vmem>>, vector<1x32xf32>
    %c1_i32_30 = arith.constant 1 : i32
    %76 = tpu.dynamic_rotate %73 by %c1_i32_30 dim 0 : vector<32x32xf32>, i32 -> vector<32x32xf32>
    %cst_31 = arith.constant 0.000000e+00 : f32
    %77 = vector.shape_cast %27 : vector<32x1xi1> to vector<32x1xi1>
    %78 = vector.broadcast %77 : vector<32x1xi1> to vector<32x32xi1>
    %79 = vector.broadcast %cst_31 : f32 to vector<32x32xf32>
    %80 = arith.select %78, %76, %79 : vector<32x32xi1>, vector<32x32xf32>
    %c31_i32_32 = arith.constant 31 : i32
    %81 = tpu.dynamic_rotate %73 by %c31_i32_32 dim 0 : vector<32x32xf32>, i32 -> vector<32x32xf32>
    %cst_33 = arith.constant 0.000000e+00 : f32
    %82 = vector.shape_cast %29 : vector<32x1xi1> to vector<32x1xi1>
    %83 = vector.broadcast %82 : vector<32x1xi1> to vector<32x32xi1>
    %84 = vector.broadcast %cst_33 : f32 to vector<32x32xf32>
    %85 = arith.select %83, %81, %84 : vector<32x32xi1>, vector<32x32xf32>
    %86 = tpu.concatenate %80, %73, %85 in 1 : vector<32x32xf32>, vector<32x32xf32>, vector<32x32xf32> -> vector<32x96xf32>
    %87 = arith.truncf %86 : vector<32x96xf32> to vector<32x96xbf16>
    %cst_34 = arith.constant dense<0.000000e+00> : vector<32x32xf32>
    %88 = tpu.matmul %87, %74, %cst_34 {dimension_numbers = #tpu.dot_dimension_numbers<[1], [0], [0], [1], [0, 0, 1, 1], [], []>} : vector<32x96xbf16>, vector<96x32xbf16>, vector<32x32xf32> -> vector<32x32xf32>
    %89 = vector.broadcast %75 : vector<1x32xf32> to vector<32x32xf32>
    %90 = arith.addf %88, %89 : vector<32x32xf32>
    %c0_i32_35 = arith.constant 0 : i32
    %cst_36 = arith.constant 0.000000e+00 : f32
    %91 = vector.broadcast %cst_36 : f32 to vector<32x32xf32>
    %92 = arith.cmpf ogt, %90, %91 : vector<32x32xf32>
    %cst_37 = arith.constant 2.000000e-01 : f32
    %93 = vector.broadcast %cst_37 : f32 to vector<32x32xf32>
    %94 = arith.mulf %93, %90 : vector<32x32xf32>
    %95 = arith.select %92, %90, %94 : vector<32x32xi1>, vector<32x32xf32>
    %96 = arith.index_cast %c0_i32_35 : i32 to index
    %c0_38 = arith.constant 0 : index
    %c0_39 = arith.constant 0 : index
    %97 = vector.load %arg8[%96, %c0_38, %c0_39] : memref<2x96x16xbf16, #tpu.memory_space<vmem>>, vector<1x96x16xbf16>
    %98 = vector.shape_cast %97 : vector<1x96x16xbf16> to vector<96x16xbf16>
    %99 = arith.index_cast %c0_i32_35 : i32 to index
    %c0_40 = arith.constant 0 : index
    %c0_41 = arith.constant 0 : index
    %100 = vector.load %arg9[%99, %c0_40, %c0_41] : memref<2x1x16xf32, #tpu.memory_space<vmem>>, vector<1x1x16xf32>
    %101 = vector.shape_cast %100 : vector<1x1x16xf32> to vector<1x16xf32>
    %c1_i32_42 = arith.constant 1 : i32
    %102 = tpu.dynamic_rotate %95 by %c1_i32_42 dim 0 : vector<32x32xf32>, i32 -> vector<32x32xf32>
    %cst_43 = arith.constant 0.000000e+00 : f32
    %103 = vector.shape_cast %27 : vector<32x1xi1> to vector<32x1xi1>
    %104 = vector.broadcast %103 : vector<32x1xi1> to vector<32x32xi1>
    %105 = vector.broadcast %cst_43 : f32 to vector<32x32xf32>
    %106 = arith.select %104, %102, %105 : vector<32x32xi1>, vector<32x32xf32>
    %c31_i32_44 = arith.constant 31 : i32
    %107 = tpu.dynamic_rotate %95 by %c31_i32_44 dim 0 : vector<32x32xf32>, i32 -> vector<32x32xf32>
    %cst_45 = arith.constant 0.000000e+00 : f32
    %108 = vector.shape_cast %29 : vector<32x1xi1> to vector<32x1xi1>
    %109 = vector.broadcast %108 : vector<32x1xi1> to vector<32x32xi1>
    %110 = vector.broadcast %cst_45 : f32 to vector<32x32xf32>
    %111 = arith.select %109, %107, %110 : vector<32x32xi1>, vector<32x32xf32>
    %112 = tpu.concatenate %106, %95, %111 in 1 : vector<32x32xf32>, vector<32x32xf32>, vector<32x32xf32> -> vector<32x96xf32>
    %113 = arith.truncf %112 : vector<32x96xf32> to vector<32x96xbf16>
    %cst_46 = arith.constant dense<0.000000e+00> : vector<32x16xf32>
    %114 = tpu.matmul %113, %98, %cst_46 {dimension_numbers = #tpu.dot_dimension_numbers<[1], [0], [0], [1], [0, 0, 1, 1], [], []>} : vector<32x96xbf16>, vector<96x16xbf16>, vector<32x16xf32> -> vector<32x16xf32>
    %115 = vector.broadcast %101 : vector<1x16xf32> to vector<32x16xf32>
    %116 = arith.addf %114, %115 : vector<32x16xf32>
    %cst_47 = arith.constant 0.000000e+00 : f32
    %117 = vector.broadcast %cst_47 : f32 to vector<32x16xf32>
    %118 = arith.cmpf ogt, %116, %117 : vector<32x16xf32>
    %cst_48 = arith.constant 2.000000e-01 : f32
    %119 = vector.broadcast %cst_48 : f32 to vector<32x16xf32>
    %120 = arith.mulf %119, %116 : vector<32x16xf32>
    %121 = arith.select %118, %116, %120 : vector<32x16xi1>, vector<32x16xf32>
    %122 = arith.truncf %121 : vector<32x16xf32> to vector<32x16xbf16>
    %123 = arith.index_cast %c0_i32_35 : i32 to index
    %c0_49 = arith.constant 0 : index
    %c0_50 = arith.constant 0 : index
    %124 = vector.load %arg10[%123, %c0_49, %c0_50] : memref<2x16x32xbf16, #tpu.memory_space<vmem>>, vector<1x16x32xbf16>
    %125 = vector.shape_cast %124 : vector<1x16x32xbf16> to vector<16x32xbf16>
    %cst_51 = arith.constant dense<0.000000e+00> : vector<32x32xf32>
    %126 = tpu.matmul %122, %125, %cst_51 {dimension_numbers = #tpu.dot_dimension_numbers<[1], [0], [0], [1], [0, 0, 1, 1], [], []>} : vector<32x16xbf16>, vector<16x32xbf16>, vector<32x32xf32> -> vector<32x32xf32>
    %127 = arith.index_cast %c0_i32_35 : i32 to index
    %c0_52 = arith.constant 0 : index
    %c0_53 = arith.constant 0 : index
    %128 = vector.load %arg11[%127, %c0_52, %c0_53] : memref<2x1x32xf32, #tpu.memory_space<vmem>>, vector<1x1x32xf32>
    %129 = vector.shape_cast %128 : vector<1x1x32xf32> to vector<1x32xf32>
    %130 = vector.broadcast %129 : vector<1x32xf32> to vector<32x32xf32>
    %131 = arith.addf %126, %130 : vector<32x32xf32>
    %132 = arith.addf %90, %131 : vector<32x32xf32>
    %c1_i32_54 = arith.constant 1 : i32
    %cst_55 = arith.constant 0.000000e+00 : f32
    %133 = vector.broadcast %cst_55 : f32 to vector<32x32xf32>
    %134 = arith.cmpf ogt, %132, %133 : vector<32x32xf32>
    %cst_56 = arith.constant 2.000000e-01 : f32
    %135 = vector.broadcast %cst_56 : f32 to vector<32x32xf32>
    %136 = arith.mulf %135, %132 : vector<32x32xf32>
    %137 = arith.select %134, %132, %136 : vector<32x32xi1>, vector<32x32xf32>
    %138 = arith.index_cast %c1_i32_54 : i32 to index
    %c0_57 = arith.constant 0 : index
    %c0_58 = arith.constant 0 : index
    %139 = vector.load %arg8[%138, %c0_57, %c0_58] : memref<2x96x16xbf16, #tpu.memory_space<vmem>>, vector<1x96x16xbf16>
    %140 = vector.shape_cast %139 : vector<1x96x16xbf16> to vector<96x16xbf16>
    %141 = arith.index_cast %c1_i32_54 : i32 to index
    %c0_59 = arith.constant 0 : index
    %c0_60 = arith.constant 0 : index
    %142 = vector.load %arg9[%141, %c0_59, %c0_60] : memref<2x1x16xf32, #tpu.memory_space<vmem>>, vector<1x1x16xf32>
    %143 = vector.shape_cast %142 : vector<1x1x16xf32> to vector<1x16xf32>
    %c1_i32_61 = arith.constant 1 : i32
    %144 = tpu.dynamic_rotate %137 by %c1_i32_61 dim 0 : vector<32x32xf32>, i32 -> vector<32x32xf32>
    %cst_62 = arith.constant 0.000000e+00 : f32
    %145 = vector.shape_cast %27 : vector<32x1xi1> to vector<32x1xi1>
    %146 = vector.broadcast %145 : vector<32x1xi1> to vector<32x32xi1>
    %147 = vector.broadcast %cst_62 : f32 to vector<32x32xf32>
    %148 = arith.select %146, %144, %147 : vector<32x32xi1>, vector<32x32xf32>
    %c31_i32_63 = arith.constant 31 : i32
    %149 = tpu.dynamic_rotate %137 by %c31_i32_63 dim 0 : vector<32x32xf32>, i32 -> vector<32x32xf32>
    %cst_64 = arith.constant 0.000000e+00 : f32
    %150 = vector.shape_cast %29 : vector<32x1xi1> to vector<32x1xi1>
    %151 = vector.broadcast %150 : vector<32x1xi1> to vector<32x32xi1>
    %152 = vector.broadcast %cst_64 : f32 to vector<32x32xf32>
    %153 = arith.select %151, %149, %152 : vector<32x32xi1>, vector<32x32xf32>
    %154 = tpu.concatenate %148, %137, %153 in 1 : vector<32x32xf32>, vector<32x32xf32>, vector<32x32xf32> -> vector<32x96xf32>
    %155 = arith.truncf %154 : vector<32x96xf32> to vector<32x96xbf16>
    %cst_65 = arith.constant dense<0.000000e+00> : vector<32x16xf32>
    %156 = tpu.matmul %155, %140, %cst_65 {dimension_numbers = #tpu.dot_dimension_numbers<[1], [0], [0], [1], [0, 0, 1, 1], [], []>} : vector<32x96xbf16>, vector<96x16xbf16>, vector<32x16xf32> -> vector<32x16xf32>
    %157 = vector.broadcast %143 : vector<1x16xf32> to vector<32x16xf32>
    %158 = arith.addf %156, %157 : vector<32x16xf32>
    %cst_66 = arith.constant 0.000000e+00 : f32
    %159 = vector.broadcast %cst_66 : f32 to vector<32x16xf32>
    %160 = arith.cmpf ogt, %158, %159 : vector<32x16xf32>
    %cst_67 = arith.constant 2.000000e-01 : f32
    %161 = vector.broadcast %cst_67 : f32 to vector<32x16xf32>
    %162 = arith.mulf %161, %158 : vector<32x16xf32>
    %163 = arith.select %160, %158, %162 : vector<32x16xi1>, vector<32x16xf32>
    %164 = arith.truncf %163 : vector<32x16xf32> to vector<32x16xbf16>
    %165 = arith.index_cast %c1_i32_54 : i32 to index
    %c0_68 = arith.constant 0 : index
    %c0_69 = arith.constant 0 : index
    %166 = vector.load %arg10[%165, %c0_68, %c0_69] : memref<2x16x32xbf16, #tpu.memory_space<vmem>>, vector<1x16x32xbf16>
    %167 = vector.shape_cast %166 : vector<1x16x32xbf16> to vector<16x32xbf16>
    %cst_70 = arith.constant dense<0.000000e+00> : vector<32x32xf32>
    %168 = tpu.matmul %164, %167, %cst_70 {dimension_numbers = #tpu.dot_dimension_numbers<[1], [0], [0], [1], [0, 0, 1, 1], [], []>} : vector<32x16xbf16>, vector<16x32xbf16>, vector<32x32xf32> -> vector<32x32xf32>
    %169 = arith.index_cast %c1_i32_54 : i32 to index
    %c0_71 = arith.constant 0 : index
    %c0_72 = arith.constant 0 : index
    %170 = vector.load %arg11[%169, %c0_71, %c0_72] : memref<2x1x32xf32, #tpu.memory_space<vmem>>, vector<1x1x32xf32>
    %171 = vector.shape_cast %170 : vector<1x1x32xf32> to vector<1x32xf32>
    %172 = vector.broadcast %171 : vector<1x32xf32> to vector<32x32xf32>
    %173 = arith.addf %168, %172 : vector<32x32xf32>
    %174 = arith.addf %132, %173 : vector<32x32xf32>
    %c2_i32 = arith.constant 2 : i32
    %cst_73 = arith.constant 0.000000e+00 : f32
    %175 = vector.broadcast %cst_73 : f32 to vector<32x32xf32>
    %176 = arith.cmpf ogt, %174, %175 : vector<32x32xf32>
    %cst_74 = arith.constant 2.000000e-01 : f32
    %177 = vector.broadcast %cst_74 : f32 to vector<32x32xf32>
    %178 = arith.mulf %177, %174 : vector<32x32xf32>
    %179 = arith.select %176, %174, %178 : vector<32x32xi1>, vector<32x32xf32>
    %180 = vector.extract_strided_slice %179 {offsets = [8, 0], sizes = [16, 32], strides = [1, 1]} : vector<32x32xf32> to vector<16x32xf32>
    %c0_75 = arith.constant 0 : index
    %c0_76 = arith.constant 0 : index
    %181 = vector.load %arg12[%c0_75, %c0_76] : memref<16x32xf32, #tpu.memory_space<vmem>>, vector<16x32xf32>
    tpu.vector_store %arg12[%c0_75, %c0_76], %180 {strides = array<i32>} : memref<16x32xf32, #tpu.memory_space<vmem>>, vector<16x32xf32>,
    return
  }
  func.func @transform_0(%arg0: i32) -> (i32, i32) {
    %c0_i32 = arith.constant 0 : i32
    %c0_i32_0 = arith.constant 0 : i32
    %c0_i32_1 = arith.constant 0 : i32
    return %c0_i32, %c0_i32_0 : i32, i32
  }
  func.func @transform_1(%arg0: i32) -> (i32, i32) {
    %c0_i32 = arith.constant 0 : i32
    %c0_i32_0 = arith.constant 0 : i32
    %c0_i32_1 = arith.constant 0 : i32
    return %c0_i32, %c0_i32_0 : i32, i32
  }
  func.func @transform_2(%arg0: i32) -> (i32, i32) {
    %c0_i32 = arith.constant 0 : i32
    %c0_i32_0 = arith.constant 0 : i32
    %c0_i32_1 = arith.constant 0 : i32
    return %c0_i32, %c0_i32_0 : i32, i32
  }
  func.func @transform_3(%arg0: i32) -> (i32, i32) {
    %c0_i32 = arith.constant 0 : i32
    %c0_i32_0 = arith.constant 0 : i32
    %c0_i32_1 = arith.constant 0 : i32
    return %c0_i32, %c0_i32_0 : i32, i32
  }
  func.func @transform_4(%arg0: i32) -> (i32, i32) {
    %c0_i32 = arith.constant 0 : i32
    %c0_i32_0 = arith.constant 0 : i32
    %c0_i32_1 = arith.constant 0 : i32
    return %c0_i32, %c0_i32_0 : i32, i32
  }
  func.func @transform_5(%arg0: i32) -> (i32, i32) {
    %c0_i32 = arith.constant 0 : i32
    %c0_i32_0 = arith.constant 0 : i32
    %c0_i32_1 = arith.constant 0 : i32
    return %c0_i32, %c0_i32_0 : i32, i32
  }
  func.func @transform_6(%arg0: i32) -> (i32, i32) {
    %c0_i32 = arith.constant 0 : i32
    %c0_i32_0 = arith.constant 0 : i32
    %c0_i32_1 = arith.constant 0 : i32
    return %c0_i32, %c0_i32_0 : i32, i32
  }
  func.func @transform_7(%arg0: i32) -> (i32, i32, i32) {
    %c0_i32 = arith.constant 0 : i32
    %c0_i32_0 = arith.constant 0 : i32
    %c0_i32_1 = arith.constant 0 : i32
    %c0_i32_2 = arith.constant 0 : i32
    return %c0_i32, %c0_i32_0, %c0_i32_1 : i32, i32, i32
  }
  func.func @transform_8(%arg0: i32) -> (i32, i32, i32) {
    %c0_i32 = arith.constant 0 : i32
    %c0_i32_0 = arith.constant 0 : i32
    %c0_i32_1 = arith.constant 0 : i32
    %c0_i32_2 = arith.constant 0 : i32
    return %c0_i32, %c0_i32_0, %c0_i32_1 : i32, i32, i32
  }
  func.func @transform_9(%arg0: i32) -> (i32, i32, i32) {
    %c0_i32 = arith.constant 0 : i32
    %c0_i32_0 = arith.constant 0 : i32
    %c0_i32_1 = arith.constant 0 : i32
    %c0_i32_2 = arith.constant 0 : i32
    return %c0_i32, %c0_i32_0, %c0_i32_1 : i32, i32, i32
  }
  func.func @transform_10(%arg0: i32) -> (i32, i32, i32) {
    %c0_i32 = arith.constant 0 : i32
    %c0_i32_0 = arith.constant 0 : i32
    %c0_i32_1 = arith.constant 0 : i32
    %c0_i32_2 = arith.constant 0 : i32
    return %c0_i32, %c0_i32_0, %c0_i32_1 : i32, i32, i32
  }
  func.func @transform_11(%arg0: i32) -> (i32, i32) {
    %c0_i32 = arith.constant 0 : i32
    %c0_i32_0 = arith.constant 0 : i32
    return %arg0, %c0_i32 : i32, i32
  }
}

</mosaic_0001>

<llo_original>
// kernel: forward.1
$region0: #{forward.1}
  #allocation0 [shape = 'u32[]', space=smem, size = 0x4, offset = 0x4, fixed_abs, tag = 'smem constant byte address 0x4 - core index']
  #allocation1 [shape = 'u32[144,128]{1,0:T(1,128)}', space=vmem, size = 0x12000, scoped, tag = 'internal scratch']
  %s0 = inlined_call_operand.vmem [shape: bf16[48,4], index: 0, kind: input, shape index: {}]
  %s1 = inlined_call_operand.vmem [shape: bf16[12,16], index: 1, kind: input, shape index: {}]
  %s2 = inlined_call_operand.vmem [shape: f32[1,16], index: 2, kind: input, shape index: {}]
  %s3 = inlined_call_operand.vmem [shape: bf16[48,32], index: 3, kind: input, shape index: {}]
  %s4 = inlined_call_operand.vmem [shape: f32[1,32], index: 4, kind: input, shape index: {}]
  %s5 = inlined_call_operand.vmem [shape: bf16[96,32], index: 5, kind: input, shape index: {}]
  %s6 = inlined_call_operand.vmem [shape: f32[1,32], index: 6, kind: input, shape index: {}]
  %s7 = inlined_call_operand.vmem [shape: bf16[2,96,16], index: 7, kind: input, shape index: {}]
  %s8 = inlined_call_operand.vmem [shape: f32[2,1,16], index: 8, kind: input, shape index: {}]
  %s9 = inlined_call_operand.vmem [shape: bf16[2,16,32], index: 9, kind: input, shape index: {}]
  %s10 = inlined_call_operand.vmem [shape: f32[2,1,32], index: 10, kind: input, shape index: {}]
  %s11 = inlined_call_operand.hbm [shape: f32[32,32], index: 11, kind: output, shape index: {}]
  %s12 = sld [smem:[#allocation0]]
  $region77: #{forward.1} parent=0
    _
  %s14 = ssub.s32 1, %s12
  %s15 = scalar_select 0, %s14, %s12
  $region1: #{forward.1} parent=0
    #allocation2 [shape = 'u8[16384]{0}', space=vmem, size = 0x4000, scoped, tag = 'output window, operand 0']
    #allocation3 [shape = 's32[2]{0}', space=sflag, size = 0x8, scoped, tag = 'scoped memory for forward.1']
    %16 = vsyncpa [#allocation3], 0
    %s17 = scalar_lea.sflag [#allocation3], 1
    %18 = vsyncpa %s17, 0
    loop: start=0, step=1, limit=4
    $region2: #{forward.1} parent=1 // loop_pre_header
      _
    $region3: #{forward.1} parent=1 // loop_header
      %s20 = sphi 0, %s24
      %p21 = scmp.ge.s32.totalorder %s20, 4
      %s28 = sphi 0, %s28
      %s30 = sphi 0, %s28
      %s31 = sphi 0, %s30
      %s45 = sphi 0, %s31
      %s49 = sphi 0, %s49
      %s51 = sphi 0, %s49
      %s52 = sphi 0, %s51
      %s66 = sphi 0, %s52
      %s70 = sphi 0, %s70
      %s72 = sphi 0, %s70
      %s73 = sphi 0, %s72
      %s87 = sphi 0, %s73
      %s91 = sphi 0, %s91
      %s93 = sphi 0, %s91
      %s94 = sphi 0, %s93
      %s108 = sphi 0, %s94
      %s112 = sphi 0, %s112
      %s114 = sphi 0, %s112
      %s115 = sphi 0, %s114
      %s129 = sphi 0, %s115
      %s133 = sphi 0, %s133
      %s135 = sphi 0, %s133
      %s136 = sphi 0, %s135
      %s150 = sphi 0, %s136
      %s154 = sphi 0, %s154
      %s156 = sphi 0, %s154
      %s157 = sphi 0, %s156
      %s171 = sphi 0, %s157
      %s175 = sphi 0, %s175
      %s177 = sphi 0, %s175
      %s178 = sphi 0, %s177
      %s192 = sphi 0, %s178
      %s196 = sphi 0, %s196
      %s198 = sphi 0, %s196
      %s199 = sphi 0, %s198
      %s213 = sphi 0, %s199
      %s217 = sphi 0, %s217
      %s219 = sphi 0, %s217
      %s220 = sphi 0, %s219
      %s234 = sphi 0, %s220
      %s238 = sphi 0, %s238
      %s240 = sphi 0, %s238
      %s241 = sphi 0, %s240
      %s255 = sphi 0, %s241
      %s261 = sphi 0, %s263
      %s264 = sphi 0, %s261
      %s265 = sphi 0, %s264
      %s281 = sphi 0, %s265
    $region4: #{forward.1} parent=1 // loop_header_branch
      %23 = sbr.rel (%p21) target = $region8
    $region5: #{forward.1} parent=1 // loop_body
      %s25 = ssub.s32 %s20, 1
      %s26 = ssub.s32 %s20, 2
      %s27 = sadd.s32 %s20, 1
      %s29 = sadd.s32 %s28, 1
      %p32 = scmp.eq.s32.totalorder %s20, 1
      %p33 = scmp.ne.s32.totalorder %s28, %s30
      %p34 = scmp.eq.s32.totalorder %s20, 0
      %p35 = por %p33, %p34
      %p36 = scmp.ne.s32.totalorder %s28, %s30
      %p37 = scmp.eq.s32.totalorder %s25, 1
      %p38 = por %p36, %p37
      %p39 = scmp.ne.s32.totalorder %s30, %s31
      %p40 = scmp.eq.s32.totalorder %s25, 0
      %p41 = por %p39, %p40
      %p42 = scmp.ne.s32.totalorder %s30, %s31
      %p43 = scmp.eq.s32.totalorder %s26, 1
      %p44 = por %p42, %p43
      %p46 = scmp.ne.s32.totalorder %s31, %s45
      %p47 = scmp.eq.s32.totalorder %s26, 0
      %p48 = por %p46, %p47
      %s50 = sadd.s32 %s49, 1
      %p53 = scmp.eq.s32.totalorder %s20, 1
      %p54 = scmp.ne.s32.totalorder %s49, %s51
      %p55 = scmp.eq.s32.totalorder %s20, 0
      %p56 = por %p54, %p55
      %p57 = scmp.ne.s32.totalorder %s49, %s51
      %p58 = scmp.eq.s32.totalorder %s25, 1
      %p59 = por %p57, %p58
      %p60 = scmp.ne.s32.totalorder %s51, %s52
      %p61 = scmp.eq.s32.totalorder %s25, 0
      %p62 = por %p60, %p61
      %p63 = scmp.ne.s32.totalorder %s51, %s52
      %p64 = scmp.eq.s32.totalorder %s26, 1
      %p65 = por %p63, %p64
      %p67 = scmp.ne.s32.totalorder %s52, %s66
      %p68 = scmp.eq.s32.totalorder %s26, 0
      %p69 = por %p67, %p68
      %s71 = sadd.s32 %s70, 1
      %p74 = scmp.eq.s32.totalorder %s20, 1
      %p75 = scmp.ne.s32.totalorder %s70, %s72
      %p76 = scmp.eq.s32.totalorder %s20, 0
      %p77 = por %p75, %p76
      %p78 = scmp.ne.s32.totalorder %s70, %s72
      %p79 = scmp.eq.s32.totalorder %s25, 1
      %p80 = por %p78, %p79
      %p81 = scmp.ne.s32.totalorder %s72, %s73
      %p82 = scmp.eq.s32.totalorder %s25, 0
      %p83 = por %p81, %p82
      %p84 = scmp.ne.s32.totalorder %s72, %s73
      %p85 = scmp.eq.s32.totalorder %s26, 1
      %p86 = por %p84, %p85
      %p88 = scmp.ne.s32.totalorder %s73, %s87
      %p89 = scmp.eq.s32.totalorder %s26, 0
      %p90 = por %p88, %p89
      %s92 = sadd.s32 %s91, 1
      %p95 = scmp.eq.s32.totalorder %s20, 1
      %p96 = scmp.ne.s32.totalorder %s91, %s93
      %p97 = scmp.eq.s32.totalorder %s20, 0
      %p98 = por %p96, %p97
      %p99 = scmp.ne.s32.totalorder %s91, %s93
      %p100 = scmp.eq.s32.totalorder %s25, 1
      %p101 = por %p99, %p100
      %p102 = scmp.ne.s32.totalorder %s93, %s94
      %p103 = scmp.eq.s32.totalorder %s25, 0
      %p104 = por %p102, %p103
      %p105 = scmp.ne.s32.totalorder %s93, %s94
      %p106 = scmp.eq.s32.totalorder %s26, 1
      %p107 = por %p105, %p106
      %p109 = scmp.ne.s32.totalorder %s94, %s108
      %p110 = scmp.eq.s32.totalorder %s26, 0
      %p111 = por %p109, %p110
      %s113 = sadd.s32 %s112, 1
      %p116 = scmp.eq.s32.totalorder %s20, 1
      %p117 = scmp.ne.s32.totalorder %s112, %s114
      %p118 = scmp.eq.s32.totalorder %s20, 0
      %p119 = por %p117, %p118
      %p120 = scmp.ne.s32.totalorder %s112, %s114
      %p121 = scmp.eq.s32.totalorder %s25, 1
      %p122 = por %p120, %p121
      %p123 = scmp.ne.s32.totalorder %s114, %s115
      %p124 = scmp.eq.s32.totalorder %s25, 0
      %p125 = por %p123, %p124
      %p126 = scmp.ne.s32.totalorder %s114, %s115
      %p127 = scmp.eq.s32.totalorder %s26, 1
      %p128 = por %p126, %p127
      %p130 = scmp.ne.s32.totalorder %s115, %s129
      %p131 = scmp.eq.s32.totalorder %s26, 0
      %p132 = por %p130, %p131
      %s134 = sadd.s32 %s133, 1
      %p137 = scmp.eq.s32.totalorder %s20, 1
      %p138 = scmp.ne.s32.totalorder %s133, %s135
      %p139 = scmp.eq.s32.totalorder %s20, 0
      %p140 = por %p138, %p139
      %p141 = scmp.ne.s32.totalorder %s133, %s135
      %p142 = scmp.eq.s32.totalorder %s25, 1
      %p143 = por %p141, %p142
      %p144 = scmp.ne.s32.totalorder %s135, %s136
      %p145 = scmp.eq.s32.totalorder %s25, 0
      %p146 = por %p144, %p145
      %p147 = scmp.ne.s32.totalorder %s135, %s136
      %p148 = scmp.eq.s32.totalorder %s26, 1
      %p149 = por %p147, %p148
      %p151 = scmp.ne.s32.totalorder %s136, %s150
      %p152 = scmp.eq.s32.totalorder %s26, 0
      %p153 = por %p151, %p152
      %s155 = sadd.s32 %s154, 1
      %p158 = scmp.eq.s32.totalorder %s20, 1
      %p159 = scmp.ne.s32.totalorder %s154, %s156
      %p160 = scmp.eq.s32.totalorder %s20, 0
      %p161 = por %p159, %p160
      %p162 = scmp.ne.s32.totalorder %s154, %s156
      %p163 = scmp.eq.s32.totalorder %s25, 1
      %p164 = por %p162, %p163
      %p165 = scmp.ne.s32.totalorder %s156, %s157
      %p166 = scmp.eq.s32.totalorder %s25, 0
      %p167 = por %p165, %p166
      %p168 = scmp.ne.s32.totalorder %s156, %s157
      %p169 = scmp.eq.s32.totalorder %s26, 1
      %p170 = por %p168, %p169
      %p172 = scmp.ne.s32.totalorder %s157, %s171
      %p173 = scmp.eq.s32.totalorder %s26, 0
      %p174 = por %p172, %p173
      %s176 = sadd.s32 %s175, 1
      %p179 = scmp.eq.s32.totalorder %s20, 1
      %p180 = scmp.ne.s32.totalorder %s175, %s177
      %p181 = scmp.eq.s32.totalorder %s20, 0
      %p182 = por %p180, %p181
      %p183 = scmp.ne.s32.totalorder %s175, %s177
      %p184 = scmp.eq.s32.totalorder %s25, 1
      %p185 = por %p183, %p184
      %p186 = scmp.ne.s32.totalorder %s177, %s178
      %p187 = scmp.eq.s32.totalorder %s25, 0
      %p188 = por %p186, %p187
      %p189 = scmp.ne.s32.totalorder %s177, %s178
      %p190 = scmp.eq.s32.totalorder %s26, 1
      %p191 = por %p189, %p190
      %p193 = scmp.ne.s32.totalorder %s178, %s192
      %p194 = scmp.eq.s32.totalorder %s26, 0
      %p195 = por %p193, %p194
      %s197 = sadd.s32 %s196, 1
      %p200 = scmp.eq.s32.totalorder %s20, 1
      %p201 = scmp.ne.s32.totalorder %s196, %s198
      %p202 = scmp.eq.s32.totalorder %s20, 0
      %p203 = por %p201, %p202
      %p204 = scmp.ne.s32.totalorder %s196, %s198
      %p205 = scmp.eq.s32.totalorder %s25, 1
      %p206 = por %p204, %p205
      %p207 = scmp.ne.s32.totalorder %s198, %s199
      %p208 = scmp.eq.s32.totalorder %s25, 0
      %p209 = por %p207, %p208
      %p210 = scmp.ne.s32.totalorder %s198, %s199
      %p211 = scmp.eq.s32.totalorder %s26, 1
      %p212 = por %p210, %p211
      %p214 = scmp.ne.s32.totalorder %s199, %s213
      %p215 = scmp.eq.s32.totalorder %s26, 0
      %p216 = por %p214, %p215
      %s218 = sadd.s32 %s217, 1
      %p221 = scmp.eq.s32.totalorder %s20, 1
      %p222 = scmp.ne.s32.totalorder %s217, %s219
      %p223 = scmp.eq.s32.totalorder %s20, 0
      %p224 = por %p222, %p223
      %p225 = scmp.ne.s32.totalorder %s217, %s219
      %p226 = scmp.eq.s32.totalorder %s25, 1
      %p227 = por %p225, %p226
      %p228 = scmp.ne.s32.totalorder %s219, %s220
      %p229 = scmp.eq.s32.totalorder %s25, 0
      %p230 = por %p228, %p229
      %p231 = scmp.ne.s32.totalorder %s219, %s220
      %p232 = scmp.eq.s32.totalorder %s26, 1
      %p233 = por %p231, %p232
      %p235 = scmp.ne.s32.totalorder %s220, %s234
      %p236 = scmp.eq.s32.totalorder %s26, 0
      %p237 = por %p235, %p236
      %s239 = sadd.s32 %s238, 1
      %p242 = scmp.eq.s32.totalorder %s20, 1
      %p243 = scmp.ne.s32.totalorder %s238, %s240
      %p244 = scmp.eq.s32.totalorder %s20, 0
      %p245 = por %p243, %p244
      %p246 = scmp.ne.s32.totalorder %s238, %s240
      %p247 = scmp.eq.s32.totalorder %s25, 1
      %p248 = por %p246, %p247
      %p249 = scmp.ne.s32.totalorder %s240, %s241
      %p250 = scmp.eq.s32.totalorder %s25, 0
      %p251 = por %p249, %p250
      %p252 = scmp.ne.s32.totalorder %s240, %s241
      %p253 = scmp.eq.s32.totalorder %s26, 1
      %p254 = por %p252, %p253
      %p256 = scmp.ne.s32.totalorder %s241, %s255
      %p257 = scmp.eq.s32.totalorder %s26, 0
      %p258 = por %p256, %p257
      %s259 = ssub.s32 %s20, %s27
      %p260 = scmp.eq.s32.totalorder %s259, 0
      %s262 = sadd.s32 %s261, 1
      %s263 = scalar_select %p260, %s261, %s262
      %p266 = pneg %p260
      %p267 = scmp.eq.s32.totalorder %s20, 1
      %p268 = por %p266, %p267
      %p269 = scmp.ne.s32.totalorder %s261, %s264
      %p270 = scmp.eq.s32.totalorder %s20, 0
      %p271 = por %p269, %p270
      %p272 = scmp.ne.s32.totalorder %s261, %s264
      %p273 = scmp.eq.s32.totalorder %s25, 1
      %p274 = por %p272, %p273
      %p275 = scmp.ne.s32.totalorder %s264, %s265
      %p276 = scmp.eq.s32.totalorder %s25, 0
      %p277 = por %p275, %p276
      %p278 = scmp.ne.s32.totalorder %s264, %s265
      %p279 = scmp.eq.s32.totalorder %s26, 1
      %p280 = por %p278, %p279
      %p282 = scmp.ne.s32.totalorder %s265, %s281
      %p283 = scmp.eq.s32.totalorder %s26, 0
      %p284 = por %p282, %p283
      %p285 = scmp.le.s32.totalorder 1, %s20
      %p286 = scmp.lt.s32.totalorder %s20, 3
      %p287 = pnand %p285, %p286
      %p288 = pneg %p287
      // Predicated region
      $region9: #{forward.1} parent=5 // pred_check
        _
      $region10: #{forward.1} parent=5 // pred_check_branch
        %290 = sbr.rel (%p287) target = $region12
      $region11: #{forward.1} parent=5 // pred_region
        %s291 = ssub.s32 %s20, 1
        // Predicated region
        $region13: #{forward.1} parent=11 // pred_check
          %p292 = pneg %p41
        $region14: #{forward.1} parent=11 // pred_check_branch
          %294 = sbr.rel (%p292) target = $region16
        $region15: #{forward.1} parent=11 // pred_region
          _
        $region16: #{forward.1} parent=11 // pred_fallthru
          _
        // Predicated region
        $region17: #{forward.1} parent=11 // pred_check
          %p295 = pneg %p62
        $region18: #{forward.1} parent=11 // pred_check_branch
          %297 = sbr.rel (%p295) target = $region20
        $region19: #{forward.1} parent=11 // pred_region
          _
        $region20: #{forward.1} parent=11 // pred_fallthru
          _
        // Predicated region
        $region21: #{forward.1} parent=11 // pred_check
          %p298 = pneg %p83
        $region22: #{forward.1} parent=11 // pred_check_branch
          %300 = sbr.rel (%p298) target = $region24
        $region23: #{forward.1} parent=11 // pred_region
          _
        $region24: #{forward.1} parent=11 // pred_fallthru
          _
        // Predicated region
        $region25: #{forward.1} parent=11 // pred_check
          %p301 = pneg %p104
        $region26: #{forward.1} parent=11 // pred_check_branch
          %303 = sbr.rel (%p301) target = $region28
        $region27: #{forward.1} parent=11 // pred_region
          _
        $region28: #{forward.1} parent=11 // pred_fallthru
          _
        // Predicated region
        $region29: #{forward.1} parent=11 // pred_check
          %p304 = pneg %p125
        $region30: #{forward.1} parent=11 // pred_check_branch
          %306 = sbr.rel (%p304) target = $region32
        $region31: #{forward.1} parent=11 // pred_region
          _
        $region32: #{forward.1} parent=11 // pred_fallthru
          _
        // Predicated region
        $region33: #{forward.1} parent=11 // pred_check
          %p307 = pneg %p146
        $region34: #{forward.1} parent=11 // pred_check_branch
          %309 = sbr.rel (%p307) target = $region36
        $region35: #{forward.1} parent=11 // pred_region
          _
        $region36: #{forward.1} parent=11 // pred_fallthru
          _
        // Predicated region
        $region37: #{forward.1} parent=11 // pred_check
          %p310 = pneg %p167
        $region38: #{forward.1} parent=11 // pred_check_branch
          %312 = sbr.rel (%p310) target = $region40
        $region39: #{forward.1} parent=11 // pred_region
          _
        $region40: #{forward.1} parent=11 // pred_fallthru
          _
        // Predicated region
        $region41: #{forward.1} parent=11 // pred_check
          %p313 = pneg %p188
        $region42: #{forward.1} parent=11 // pred_check_branch
          %315 = sbr.rel (%p313) target = $region44
        $region43: #{forward.1} parent=11 // pred_region
          _
        $region44: #{forward.1} parent=11 // pred_fallthru
          _
        // Predicated region
        $region45: #{forward.1} parent=11 // pred_check
          %p316 = pneg %p209
        $region46: #{forward.1} parent=11 // pred_check_branch
          %318 = sbr.rel (%p316) target = $region48
        $region47: #{forward.1} parent=11 // pred_region
          _
        $region48: #{forward.1} parent=11 // pred_fallthru
          _
        // Predicated region
        $region49: #{forward.1} parent=11 // pred_check
          %p319 = pneg %p230
        $region50: #{forward.1} parent=11 // pred_check_branch
          %321 = sbr.rel (%p319) target = $region52
        $region51: #{forward.1} parent=11 // pred_region
          _
        $region52: #{forward.1} parent=11 // pred_fallthru
          _
        // Predicated region
        $region53: #{forward.1} parent=11 // pred_check
          %p322 = pneg %p251
        $region54: #{forward.1} parent=11 // pred_check_branch
          %324 = sbr.rel (%p322) target = $region56
        $region55: #{forward.1} parent=11 // pred_region
          _
        $region56: #{forward.1} parent=11 // pred_fallthru
          _
      $region12: #{forward.1} parent=5 // pred_fallthru
        _
      %p325 = scmp.lt.s32.totalorder %s20, 2
      // Predicated region
      $region57: #{forward.1} parent=5 // pred_check
        %p326 = pneg %p325
      $region58: #{forward.1} parent=5 // pred_check_branch
        %328 = sbr.rel (%p326) target = $region60
      $region59: #{forward.1} parent=5 // pred_region
        _
      $region60: #{forward.1} parent=5 // pred_fallthru
        _
      %p329 = scmp.le.s32.totalorder 1, %s20
      %p330 = scmp.lt.s32.totalorder %s20, 3
      %p331 = pnand %p329, %p330
      %p332 = pneg %p331
      // Predicated region
      $region61: #{forward.1} parent=5 // pred_check
        _
      $region62: #{forward.1} parent=5 // pred_check_branch
        %334 = sbr.rel (%p331) target = $region64
      $region63: #{forward.1} parent=5 // pred_region
        %s335 = ssub.s32 %s20, 1
        %p336 = pneg %p41
        %p337 = pneg %p38
        %p338 = pneg %p62
        %p339 = pneg %p59
        %p340 = pneg %p83
        %p341 = pneg %p80
        %p342 = pneg %p104
        %p343 = pneg %p101
        %p344 = pneg %p125
        %p345 = pneg %p122
        %p346 = pneg %p146
        %p347 = pneg %p143
        %p348 = pneg %p167
        %p349 = pneg %p164
        %p350 = pneg %p188
        %p351 = pneg %p185
        %p352 = pneg %p209
        %p353 = pneg %p206
        %p354 = pneg %p230
        %p355 = pneg %p227
        %p356 = pneg %p251
        %p357 = pneg %p248
        %p358 = pneg %p277
        %p359 = pneg %p274
        %s360 = sand.u32 %s264, 1
        %s361 = scalar_lea.sflag [#allocation3], %s360
        %s362 = sand.u32 %s264, 1
        %s363 = smul.addr %s362, 16
        %s364 = scalar_lea.vmem [#allocation2], %s363
        %s365 = smul.u32 2, %s25
        %s367 = smul.u32 %s25, 16
        %s368 = sshra.s32 %s367, 3
        %s369 = sand.u32 %s367, 7
        %s370 = smul.addr %s368, 4
        %s371 = scalar_lea.vmem %s0, %s370
        %v372 = vld [vmem:[%s371] sm:$0xf]
        %v373 = vld [vmem:[%s371 + $0x4] sm:$0xf]
        %v374 = vld [vmem:[%s371 + $0x8] sm:$0xf]
        %v375 = vld [vmem:[%s371 + $0xc] sm:$0xf]
        %v376 = vunpack.c.l.bf16 %v372
        %v377 = vunpack.c.l.bf16 %v373
        %v378 = vunpack.c.l.bf16 %v374
        %v379 = vunpack.c.l.bf16 %v375
        %s380 = ssub.s32 %s367, 8
        %v381 = vlaneseq
        %v382 = vshrl.u32 %v381, 7
        %v383 = vadd.s32 %v382, 8
        %v384 = vadd.s32 %v382, 16
        %v385 = vadd.s32 %v382, 24
        %v386 = vstv %s380
        %v387 = vadd.s32 %v386, %v382
        %v388 = vadd.s32 %v386, %v383
        %v389 = vadd.s32 %v386, %v384
        %v390 = vadd.s32 %v386, %v385
        %vm391 = vcmp.lt.s32.totalorder %v387, 0
        %v392 = vsub.s32 0, %v387
        %v393 = vsel %vm391, %v392, %v387
        %v394 = vshrl.u32 %v393, 4
        %v395 = vand.u32 %v393, 15
        %v396 = vsub.s32 0, %v395
        %v397 = vsel %vm391, %v396, %v395
        %vm398 = vcmp.lt.s32.totalorder %v388, 0
        %v399 = vsub.s32 0, %v388
        %v400 = vsel %vm398, %v399, %v388
        %v401 = vshrl.u32 %v400, 4
        %v402 = vand.u32 %v400, 15
        %v403 = vsub.s32 0, %v402
        %v404 = vsel %vm398, %v403, %v402
        %vm405 = vcmp.lt.s32.totalorder %v389, 0
        %v406 = vsub.s32 0, %v389
        %v407 = vsel %vm405, %v406, %v389
        %v408 = vshrl.u32 %v407, 4
        %v409 = vand.u32 %v407, 15
        %v410 = vsub.s32 0, %v409
        %v411 = vsel %vm405, %v410, %v409
        %vm412 = vcmp.lt.s32.totalorder %v390, 0
        %v413 = vsub.s32 0, %v390
        %v414 = vsel %vm412, %v413, %v390
        %v415 = vshrl.u32 %v414, 4
        %v416 = vand.u32 %v414, 15
        %v417 = vsub.s32 0, %v416
        %v418 = vsel %vm412, %v417, %v416
        %vm419 = vcmp.ne.s32.totalorder %v397, 0
        %vm420 = vcmp.ne.s32.totalorder %v404, 0
        %vm421 = vcmp.ne.s32.totalorder %v411, 0
        %vm422 = vcmp.ne.s32.totalorder %v418, 0
        %vm423 = vcmp.lt.s32.totalorder %v397, 0
        %vm424 = vcmp.lt.s32.totalorder %v404, 0
        %vm425 = vcmp.lt.s32.totalorder %v411, 0
        %vm426 = vcmp.lt.s32.totalorder %v418, 0
        %vm427 = vmand %vm423, %vm419
        %vm428 = vmand %vm424, %vm420
        %vm429 = vmand %vm425, %vm421
        %vm430 = vmand %vm426, %vm422
        %v431 = vadd.s32 %v397, 16
        %v432 = vadd.s32 %v404, 16
        %v433 = vadd.s32 %v411, 16
        %v434 = vadd.s32 %v418, 16
        %v435 = vsel %vm427, %v431, %v397
        %v436 = vsel %vm428, %v432, %v404
        %v437 = vsel %vm429, %v433, %v411
        %v438 = vsel %vm430, %v434, %v418
        %vm439 = vcmp.ne.s32.totalorder %v435, 0
        %vm440 = vcmp.ne.s32.totalorder %v436, 0
        %vm441 = vcmp.ne.s32.totalorder %v437, 0
        %vm442 = vcmp.ne.s32.totalorder %v438, 0
        %vm443 = vcmp.ne.s32.totalorder %v435, 15
        %vm444 = vcmp.ne.s32.totalorder %v436, 15
        %vm445 = vcmp.ne.s32.totalorder %v437, 15
        %vm446 = vcmp.ne.s32.totalorder %v438, 15
        %v447 = vld [vmem:[%s1] sm:$0xf]
        %v448 = vld [vmem:[%s1 + $0x4] sm:$0x3]
        %v449 = vld [vmem:[%s2] sm:$0x1]
        %v450 = vrot.slane %v376, 7
        %v451 = vrot.slane %v377, 7
        %v452 = vrot.slane %v378, 7
        %v453 = vrot.slane %v379, 7
        %vm454 = vcmp.lt.s32.totalorder %v382, 1
        %v455 = vsel %vm454, %v452, %v453
        %v456 = vsel %vm454, %v451, %v452
        %v457 = vsel %vm454, %v450, %v451
        %v458 = vsel %vm454, %v453, %v450
        %v459 = vsel %vm439, 1, 0
        %v460 = vsel %vm440, 1, 0
        %v461 = vsel %vm441, 1, 0
        %v462 = vsel %vm442, 1, 0
        %vm463 = vcmp.eq.s32.totalorder %v459, 1
        %vm464 = vcmp.eq.s32.totalorder %v460, 1
        %vm465 = vcmp.eq.s32.totalorder %v461, 1
        %vm466 = vcmp.eq.s32.totalorder %v462, 1
        %v467 = vsel %vm463, %v458, 0.0
        %v468 = vsel %vm464, %v457, 0.0
        %v469 = vsel %vm465, %v456, 0.0
        %v470 = vsel %vm466, %v455, 0.0
        %v471 = vrot.slane %v376, 1
        %v472 = vrot.slane %v377, 1
        %v473 = vrot.slane %v378, 1
        %v474 = vrot.slane %v379, 1
        %vm475 = vcmp.lt.s32.totalorder %v382, 7
        %v476 = vsel %vm475, %v473, %v474
        %v477 = vsel %vm475, %v472, %v473
        %v478 = vsel %vm475, %v471, %v472
        %v479 = vsel %vm475, %v474, %v471
        %v480 = vsel %vm443, 1, 0
        %v481 = vsel %vm444, 1, 0
        %v482 = vsel %vm445, 1, 0
        %v483 = vsel %vm446, 1, 0
        %vm484 = vcmp.eq.s32.totalorder %v480, 1
        %vm485 = vcmp.eq.s32.totalorder %v481, 1
        %vm486 = vcmp.eq.s32.totalorder %v482, 1
        %vm487 = vcmp.eq.s32.totalorder %v483, 1
        %v488 = vsel %vm484, %v478, 0.0
        %v489 = vsel %vm485, %v477, 0.0
        %v490 = vsel %vm486, %v476, 0.0
        %v491 = vsel %vm487, %v479, 0.0
        %496 = vrot.lane.b32.xlu0 %v376, 4
        %v497 = vpop.permute.xlu0 %496
        %498 = vrot.lane.b32.xlu0 %v377, 4
        %v499 = vpop.permute.xlu0 %498
        %500 = vrot.lane.b32.xlu0 %v378, 4
        %v501 = vpop.permute.xlu0 %500
        %502 = vrot.lane.b32.xlu0 %v379, 4
        %v503 = vpop.permute.xlu0 %502
        %512 = vrot.lane.b32.xlu0 %v488, 8
        %v513 = vpop.permute.xlu0 %512
        %514 = vrot.lane.b32.xlu0 %v489, 8
        %v515 = vpop.permute.xlu0 %514
        %516 = vrot.lane.b32.xlu0 %v490, 8
        %v517 = vpop.permute.xlu0 %516
        %518 = vrot.lane.b32.xlu0 %v491, 8
        %v519 = vpop.permute.xlu0 %518
        %vm524 = vcmask 31744
        %v525 = vsel %vm524, %v467, %v497
        %v526 = vsel %vm524, %v468, %v499
        %v527 = vsel %vm524, %v469, %v501
        %v528 = vsel %vm524, %v470, %v503
        %vm529 = vcmask 64512
        %v530 = vsel %vm529, %v525, %v513
        %v531 = vsel %vm529, %v526, %v515
        %v532 = vsel %vm529, %v527, %v517
        %v533 = vsel %vm529, %v528, %v519
        %v534 = vpack.c.bf16 %v531, %v530
        %v535 = vpack.c.bf16 %v533, %v532
        %v537 = vlaneseq
        %v538 = vshrl.u32 %v537, 7
        %v539 = vsub.s32 0, %v538
        %v540 = vrot.slane %v449, %v539
        %v544 = vunpack.c.l.b16 %v447
        %v545 = vunpack.c.l.b16 %v448
        %v546 = vpack.c.b16 %v545, %v544
        %vm547 = vcmask 97280
        %v549 = vsel %vm547, %v534, 0
        %v552 = vsel %vm547, %v535, 0
        %vm554 = vcmask 1045504
        %v556 = vsel %vm554, %v546, 0
        %558 = vmatprep.subr.bf16.mxu0 0
        %559 = vmatpush1.bf16.msra.mxu0 0
        %560 = vmatprep.subr.bf16.mxu0 0
        %561 = vmatpush1.bf16.msra.mxu0 0
        %562 = vmatprep.subr.bf16.mxu0 0
        %563 = vmatpush1.bf16.msra.mxu0 0
        %564 = vmatprep.subr.bf16.mxu0 0
        %565 = vmatpush1.bf16.msra.mxu0 0
        %566 = vmatprep.subr.bf16.mxu0 0
        %567 = vmatpush1.bf16.msra.mxu0 0
        %568 = vmatprep.subr.bf16.mxu0 0
        %569 = vmatpush1.bf16.msra.mxu0 0
        %570 = vmatprep.subr.bf16.mxu0 0
        %571 = vmatpush1.bf16.msra.mxu0 0
        %572 = vmatprep.subr.bf16.mxu0 0
        %573 = vmatpush1.bf16.msra.mxu0 %v556
        %574 = vmatprep.subr.bf16.mxu0 0
        %575 = vmatpush2.bf16.msra.mxu0 0
        %576 = vmatprep.subr.bf16.mxu0 0
        %577 = vmatpush2.bf16.msra.mxu0 0
        %578 = vmatprep.subr.bf16.mxu0 0
        %579 = vmatpush2.bf16.msra.mxu0 0
        %580 = vmatprep.subr.bf16.mxu0 0
        %581 = vmatpush2.bf16.msra.mxu0 0
        %582 = vmatprep.subr.bf16.mxu0 0
        %583 = vmatpush2.bf16.msra.mxu0 0
        %584 = vmatprep.subr.bf16.mxu0 0
        %585 = vmatpush2.bf16.msra.mxu0 0
        %586 = vmatprep.subr.bf16.mxu0 0
        %587 = vmatpush2.bf16.msra.mxu0 0
        %588 = vmatprep.subr.bf16.mxu0 0
        %589 = vmatpush2.bf16.msra.mxu0 0
        %590 = vmatprep.mubr.bf16.mxu0 0
        %591 = vmatmul.mubr.bf16.gmra.mxu0 %v549
        %v592 = vpop.f32.mrf.mxu0
        %v593 = vadd.f32 %v540, %v592
        %v594 = vpop.f32.mrf.mxu0
        %v595 = vpop.f32.mrf.mxu0
        %v596 = vadd.f32 %v540, %v595
        %v597 = vpop.f32.mrf.mxu0
        %598 = vmatprep.mubr.bf16.mxu0 0
        %599 = vmatmul.mubr.bf16.gmra.mxu0 %v552
        %v600 = vpop.f32.mrf.mxu0
        %v601 = vadd.f32 %v540, %v600
        %v602 = vpop.f32.mrf.mxu0
        %v603 = vpop.f32.mrf.mxu0
        %v604 = vadd.f32 %v540, %v603
        %v605 = vpop.f32.mrf.mxu0
        %606 = vdwg.mxu0
        %vm607 = vcmp.gt.f32.partialorder %v593, 0.0
        %vm608 = vcmp.gt.f32.partialorder %v596, 0.0
        %vm609 = vcmp.gt.f32.partialorder %v601, 0.0
        %vm610 = vcmp.gt.f32.partialorder %v604, 0.0
        %v611 = vmul.f32 %v593, 0.2
        %v612 = vmul.f32 %v596, 0.2
        %v613 = vmul.f32 %v601, 0.2
        %v614 = vmul.f32 %v604, 0.2
        %v615 = vsel %vm607, %v593, %v611
        %v616 = vsel %vm608, %v596, %v612
        %v617 = vsel %vm609, %v601, %v613
        %v618 = vsel %vm610, %v604, %v614
        %v619 = vld [vmem:[%s3] sm:$0xf]
        %v620 = vld [vmem:[%s3 + $0x4] sm:$0xf]
        %v621 = vld [vmem:[%s3 + $0x8] sm:$0xf]
        %v622 = vld [vmem:[%s3 + $0xc] sm:$0xf]
        %v623 = vld [vmem:[%s3 + $0x10] sm:$0xf]
        %v624 = vld [vmem:[%s3 + $0x14] sm:$0xf]
        %v625 = vld [vmem:[%s4] sm:$0x1]
        %v626 = vrot.slane %v615, 7
        %v627 = vrot.slane %v616, 7
        %v628 = vrot.slane %v617, 7
        %v629 = vrot.slane %v618, 7
        %v630 = vsel %vm454, %v628, %v629
        %v631 = vsel %vm454, %v627, %v628
        %v632 = vsel %vm454, %v626, %v627
        %v633 = vsel %vm454, %v629, %v626
        %v634 = vsel %vm463, %v633, 0.0
        %v635 = vsel %vm464, %v632, 0.0
        %v636 = vsel %vm465, %v631, 0.0
        %v637 = vsel %vm466, %v630, 0.0
        %v638 = vrot.slane %v615, 1
        %v639 = vrot.slane %v616, 1
        %v640 = vrot.slane %v617, 1
        %v641 = vrot.slane %v618, 1
        %v642 = vsel %vm475, %v640, %v641
        %v643 = vsel %vm475, %v639, %v640
        %v644 = vsel %vm475, %v638, %v639
        %v645 = vsel %vm475, %v641, %v638
        %v646 = vsel %vm484, %v644, 0.0
        %v647 = vsel %vm485, %v643, 0.0
        %v648 = vsel %vm486, %v642, 0.0
        %v649 = vsel %vm487, %v645, 0.0
        %654 = vrot.lane.b32.xlu0 %v615, 16
        %v655 = vpop.permute.xlu0 %654
        %656 = vrot.lane.b32.xlu0 %v616, 16
        %v657 = vpop.permute.xlu0 %656
        %658 = vrot.lane.b32.xlu0 %v617, 16
        %v659 = vpop.permute.xlu0 %658
        %660 = vrot.lane.b32.xlu0 %v618, 16
        %v661 = vpop.permute.xlu0 %660
        %670 = vrot.lane.b32.xlu0 %v646, 32
        %v671 = vpop.permute.xlu0 %670
        %672 = vrot.lane.b32.xlu0 %v647, 32
        %v673 = vpop.permute.xlu0 %672
        %674 = vrot.lane.b32.xlu0 %v648, 32
        %v675 = vpop.permute.xlu0 %674
        %676 = vrot.lane.b32.xlu0 %v649, 32
        %v677 = vpop.permute.xlu0 %676
        %vm682 = vcmask 130048
        %v683 = vsel %vm682, %v634, %v655
        %v684 = vsel %vm682, %v635, %v657
        %v685 = vsel %vm682, %v636, %v659
        %v686 = vsel %vm682, %v637, %v661
        %vm687 = vcmask 261120
        %v688 = vsel %vm687, %v683, %v671
        %v689 = vsel %vm687, %v684, %v673
        %v690 = vsel %vm687, %v685, %v675
        %v691 = vsel %vm687, %v686, %v677
        %v692 = vpack.c.bf16 %v689, %v688
        %v693 = vpack.c.bf16 %v691, %v690
        %v695 = vlaneseq
        %v696 = vshrl.u32 %v695, 7
        %v697 = vsub.s32 0, %v696
        %v698 = vrot.slane %v625, %v697
        %v706 = vunpack.c.l.b16 %v619
        %v707 = vunpack.c.l.b16 %v620
        %v708 = vunpack.c.l.b16 %v621
        %v709 = vunpack.c.l.b16 %v622
        %v710 = vunpack.c.l.b16 %v623
        %v711 = vunpack.c.l.b16 %v624
        %v712 = vpack.c.b16 %v707, %v706
        %v713 = vpack.c.b16 %v709, %v708
        %v714 = vpack.c.b16 %v711, %v710
        %vm718 = vcmask 392192
        %v720 = vsel %vm718, %v692, 0
        %v723 = vsel %vm718, %v693, 0
        %725 = vmatprep.subr.bf16.mxu0 0
        %726 = vmatpush1.bf16.msra.mxu0 0
        %727 = vmatprep.subr.bf16.mxu0 0
        %728 = vmatpush1.bf16.msra.mxu0 0
        %729 = vmatprep.subr.bf16.mxu0 0
        %730 = vmatpush1.bf16.msra.mxu0 0
        %731 = vmatprep.subr.bf16.mxu0 0
        %732 = vmatpush1.bf16.msra.mxu0 0
        %733 = vmatprep.subr.bf16.mxu0 0
        %734 = vmatpush1.bf16.msra.mxu0 0
        %735 = vmatprep.subr.bf16.mxu0 0
        %736 = vmatpush1.bf16.msra.mxu0 %v714
        %737 = vmatprep.subr.bf16.mxu0 0
        %738 = vmatpush1.bf16.msra.mxu0 %v713
        %739 = vmatprep.subr.bf16.mxu0 0
        %740 = vmatpush1.bf16.msra.mxu0 %v712
        %741 = vmatprep.subr.bf16.mxu0 0
        %742 = vmatpush2.bf16.msra.mxu0 0
        %743 = vmatprep.subr.bf16.mxu0 0
        %744 = vmatpush2.bf16.msra.mxu0 0
        %745 = vmatprep.subr.bf16.mxu0 0
        %746 = vmatpush2.bf16.msra.mxu0 0
        %747 = vmatprep.subr.bf16.mxu0 0
        %748 = vmatpush2.bf16.msra.mxu0 0
        %749 = vmatprep.subr.bf16.mxu0 0
        %750 = vmatpush2.bf16.msra.mxu0 0
        %751 = vmatprep.subr.bf16.mxu0 0
        %752 = vmatpush2.bf16.msra.mxu0 0
        %753 = vmatprep.subr.bf16.mxu0 0
        %754 = vmatpush2.bf16.msra.mxu0 0
        %755 = vmatprep.subr.bf16.mxu0 0
        %756 = vmatpush2.bf16.msra.mxu0 0
        %757 = vmatprep.mubr.bf16.mxu0 0
        %758 = vmatmul.mubr.bf16.gmra.mxu0 %v720
        %v759 = vpop.f32.mrf.mxu0
        %v760 = vadd.f32 %v698, %v759
        %v761 = vpop.f32.mrf.mxu0
        %v762 = vpop.f32.mrf.mxu0
        %v763 = vadd.f32 %v698, %v762
        %v764 = vpop.f32.mrf.mxu0
        %765 = vmatprep.mubr.bf16.mxu0 0
        %766 = vmatmul.mubr.bf16.gmra.mxu0 %v723
        %v767 = vpop.f32.mrf.mxu0
        %v768 = vadd.f32 %v698, %v767
        %v769 = vpop.f32.mrf.mxu0
        %v770 = vpop.f32.mrf.mxu0
        %v771 = vadd.f32 %v698, %v770
        %v772 = vpop.f32.mrf.mxu0
        %773 = vdwg.mxu0
        %vm774 = vcmp.gt.f32.partialorder %v760, 0.0
        %vm775 = vcmp.gt.f32.partialorder %v763, 0.0
        %vm776 = vcmp.gt.f32.partialorder %v768, 0.0
        %vm777 = vcmp.gt.f32.partialorder %v771, 0.0
        %v778 = vmul.f32 %v760, 0.2
        %v779 = vmul.f32 %v763, 0.2
        %v780 = vmul.f32 %v768, 0.2
        %v781 = vmul.f32 %v771, 0.2
        %v782 = vsel %vm774, %v760, %v778
        %v783 = vsel %vm775, %v763, %v779
        %v784 = vsel %vm776, %v768, %v780
        %v785 = vsel %vm777, %v771, %v781
        %v786 = vld [vmem:[%s5] sm:$0xf]
        %v787 = vld [vmem:[%s5 + $0x4] sm:$0xf]
        %v788 = vld [vmem:[%s5 + $0x8] sm:$0xf]
        %v789 = vld [vmem:[%s5 + $0xc] sm:$0xf]
        %v790 = vld [vmem:[%s5 + $0x10] sm:$0xf]
        %v791 = vld [vmem:[%s5 + $0x14] sm:$0xf]
        %v792 = vld [vmem:[%s5 + $0x18] sm:$0xf]
        %v793 = vld [vmem:[%s5 + $0x1c] sm:$0xf]
        %v794 = vld [vmem:[%s5 + $0x20] sm:$0xf]
        %v795 = vld [vmem:[%s5 + $0x24] sm:$0xf]
        %v796 = vld [vmem:[%s5 + $0x28] sm:$0xf]
        %v797 = vld [vmem:[%s5 + $0x2c] sm:$0xf]
        %v798 = vld [vmem:[%s6] sm:$0x1]
        %v799 = vrot.slane %v782, 7
        %v800 = vrot.slane %v783, 7
        %v801 = vrot.slane %v784, 7
        %v802 = vrot.slane %v785, 7
        %v803 = vsel %vm454, %v801, %v802
        %v804 = vsel %vm454, %v800, %v801
        %v805 = vsel %vm454, %v799, %v800
        %v806 = vsel %vm454, %v802, %v799
        %v807 = vsel %vm463, %v806, 0.0
        %v808 = vsel %vm464, %v805, 0.0
        %v809 = vsel %vm465, %v804, 0.0
        %v810 = vsel %vm466, %v803, 0.0
        %v811 = vrot.slane %v782, 1
        %v812 = vrot.slane %v783, 1
        %v813 = vrot.slane %v784, 1
        %v814 = vrot.slane %v785, 1
        %v815 = vsel %vm475, %v813, %v814
        %v816 = vsel %vm475, %v812, %v813
        %v817 = vsel %vm475, %v811, %v812
        %v818 = vsel %vm475, %v814, %v811
        %v819 = vsel %vm484, %v817, 0.0
        %v820 = vsel %vm485, %v816, 0.0
        %v821 = vsel %vm486, %v815, 0.0
        %v822 = vsel %vm487, %v818, 0.0
        %827 = vrot.lane.b32.xlu0 %v782, 32
        %v828 = vpop.permute.xlu0 %827
        %829 = vrot.lane.b32.xlu0 %v783, 32
        %v830 = vpop.permute.xlu0 %829
        %831 = vrot.lane.b32.xlu0 %v784, 32
        %v832 = vpop.permute.xlu0 %831
        %833 = vrot.lane.b32.xlu0 %v785, 32
        %v834 = vpop.permute.xlu0 %833
        %843 = vrot.lane.b32.xlu0 %v819, 64
        %v844 = vpop.permute.xlu0 %843
        %845 = vrot.lane.b32.xlu0 %v820, 64
        %v846 = vpop.permute.xlu0 %845
        %847 = vrot.lane.b32.xlu0 %v821, 64
        %v848 = vpop.permute.xlu0 %847
        %849 = vrot.lane.b32.xlu0 %v822, 64
        %v850 = vpop.permute.xlu0 %849
        %v855 = vsel %vm687, %v807, %v828
        %v856 = vsel %vm687, %v808, %v830
        %v857 = vsel %vm687, %v809, %v832
        %v858 = vsel %vm687, %v810, %v834
        %vm859 = vcmask 523264
        %v860 = vsel %vm859, %v855, %v844
        %v861 = vsel %vm859, %v856, %v846
        %v862 = vsel %vm859, %v857, %v848
        %v863 = vsel %vm859, %v858, %v850
        %v864 = vpack.c.bf16 %v861, %v860
        %v865 = vpack.c.bf16 %v863, %v862
        %v867 = vlaneseq
        %v868 = vshrl.u32 %v867, 7
        %v869 = vsub.s32 0, %v868
        %v870 = vrot.slane %v798, %v869
        %v884 = vunpack.c.l.b16 %v786
        %v885 = vunpack.c.l.b16 %v787
        %v886 = vunpack.c.l.b16 %v788
        %v887 = vunpack.c.l.b16 %v789
        %v888 = vunpack.c.l.b16 %v790
        %v889 = vunpack.c.l.b16 %v791
        %v890 = vunpack.c.l.b16 %v792
        %v891 = vunpack.c.l.b16 %v793
        %v892 = vunpack.c.l.b16 %v794
        %v893 = vunpack.c.l.b16 %v795
        %v894 = vunpack.c.l.b16 %v796
        %v895 = vunpack.c.l.b16 %v797
        %v896 = vpack.c.b16 %v885, %v884
        %v897 = vpack.c.b16 %v887, %v886
        %v898 = vpack.c.b16 %v889, %v888
        %v899 = vpack.c.b16 %v891, %v890
        %v900 = vpack.c.b16 %v893, %v892
        %v901 = vpack.c.b16 %v895, %v894
        %vm908 = vcmask 785408
        %v910 = vsel %vm908, %v864, 0
        %v913 = vsel %vm908, %v865, 0
        %915 = vmatprep.subr.bf16.mxu0 0
        %916 = vmatpush1.bf16.msra.mxu0 0
        %917 = vmatprep.subr.bf16.mxu0 0
        %918 = vmatpush1.bf16.msra.mxu0 0
        %919 = vmatprep.subr.bf16.mxu0 0
        %920 = vmatpush1.bf16.msra.mxu0 %v901
        %921 = vmatprep.subr.bf16.mxu0 0
        %922 = vmatpush1.bf16.msra.mxu0 %v900
        %923 = vmatprep.subr.bf16.mxu0 0
        %924 = vmatpush1.bf16.msra.mxu0 %v899
        %925 = vmatprep.subr.bf16.mxu0 0
        %926 = vmatpush1.bf16.msra.mxu0 %v898
        %927 = vmatprep.subr.bf16.mxu0 0
        %928 = vmatpush1.bf16.msra.mxu0 %v897
        %929 = vmatprep.subr.bf16.mxu0 0
        %930 = vmatpush1.bf16.msra.mxu0 %v896
        %931 = vmatprep.subr.bf16.mxu0 0
        %932 = vmatpush2.bf16.msra.mxu0 0
        %933 = vmatprep.subr.bf16.mxu0 0
        %934 = vmatpush2.bf16.msra.mxu0 0
        %935 = vmatprep.subr.bf16.mxu0 0
        %936 = vmatpush2.bf16.msra.mxu0 0
        %937 = vmatprep.subr.bf16.mxu0 0
        %938 = vmatpush2.bf16.msra.mxu0 0
        %939 = vmatprep.subr.bf16.mxu0 0
        %940 = vmatpush2.bf16.msra.mxu0 0
        %941 = vmatprep.subr.bf16.mxu0 0
        %942 = vmatpush2.bf16.msra.mxu0 0
        %943 = vmatprep.subr.bf16.mxu0 0
        %944 = vmatpush2.bf16.msra.mxu0 0
        %945 = vmatprep.subr.bf16.mxu0 0
        %946 = vmatpush2.bf16.msra.mxu0 0
        %947 = vmatprep.mubr.bf16.mxu0 0
        %948 = vmatmul.mubr.bf16.gmra.mxu0 %v910
        %v949 = vpop.f32.mrf.mxu0
        %v950 = vadd.f32 %v870, %v949
        %v951 = vpop.f32.mrf.mxu0
        %v952 = vpop.f32.mrf.mxu0
        %v953 = vadd.f32 %v870, %v952
        %v954 = vpop.f32.mrf.mxu0
        %955 = vmatprep.mubr.bf16.mxu0 0
        %956 = vmatmul.mubr.bf16.gmra.mxu0 %v913
        %v957 = vpop.f32.mrf.mxu0
        %v958 = vadd.f32 %v870, %v957
        %v959 = vpop.f32.mrf.mxu0
        %v960 = vpop.f32.mrf.mxu0
        %v961 = vadd.f32 %v870, %v960
        %v962 = vpop.f32.mrf.mxu0
        %963 = vdwg.mxu0
        %vm964 = vcmp.gt.f32.partialorder %v950, 0.0
        %vm965 = vcmp.gt.f32.partialorder %v953, 0.0
        %vm966 = vcmp.gt.f32.partialorder %v958, 0.0
        %vm967 = vcmp.gt.f32.partialorder %v961, 0.0
        %v968 = vmul.f32 %v950, 0.2
        %v969 = vmul.f32 %v953, 0.2
        %v970 = vmul.f32 %v958, 0.2
        %v971 = vmul.f32 %v961, 0.2
        %v972 = vsel %vm964, %v950, %v968
        %v973 = vsel %vm965, %v953, %v969
        %v974 = vsel %vm966, %v958, %v970
        %v975 = vsel %vm967, %v961, %v971
        %v976 = vld [vmem:[%s7] sm:$0xf]
        %v977 = vld [vmem:[%s7 + $0x4] sm:$0xf]
        %v978 = vld [vmem:[%s7 + $0x8] sm:$0xf]
        %v979 = vld [vmem:[%s7 + $0xc] sm:$0xf]
        %v980 = vld [vmem:[%s7 + $0x10] sm:$0xf]
        %v981 = vld [vmem:[%s7 + $0x14] sm:$0xf]
        %v982 = vld [vmem:[%s7 + $0x18] sm:$0xf]
        %v983 = vld [vmem:[%s7 + $0x1c] sm:$0xf]
        %v984 = vld [vmem:[%s7 + $0x20] sm:$0xf]
        %v985 = vld [vmem:[%s7 + $0x24] sm:$0xf]
        %v986 = vld [vmem:[%s7 + $0x28] sm:$0xf]
        %v987 = vld [vmem:[%s7 + $0x2c] sm:$0xf]
        %v988 = vld [vmem:[%s8] sm:$0x1]
        %v989 = vrot.slane %v972, 7
        %v990 = vrot.slane %v973, 7
        %v991 = vrot.slane %v974, 7
        %v992 = vrot.slane %v975, 7
        %v993 = vsel %vm454, %v991, %v992
        %v994 = vsel %vm454, %v990, %v991
        %v995 = vsel %vm454, %v989, %v990
        %v996 = vsel %vm454, %v992, %v989
        %v997 = vsel %vm463, %v996, 0.0
        %v998 = vsel %vm464, %v995, 0.0
        %v999 = vsel %vm465, %v994, 0.0
        %v1000 = vsel %vm466, %v993, 0.0
        %v1001 = vrot.slane %v972, 1
        %v1002 = vrot.slane %v973, 1
        %v1003 = vrot.slane %v974, 1
        %v1004 = vrot.slane %v975, 1
        %v1005 = vsel %vm475, %v1003, %v1004
        %v1006 = vsel %vm475, %v1002, %v1003
        %v1007 = vsel %vm475, %v1001, %v1002
        %v1008 = vsel %vm475, %v1004, %v1001
        %v1009 = vsel %vm484, %v1007, 0.0
        %v1010 = vsel %vm485, %v1006, 0.0
        %v1011 = vsel %vm486, %v1005, 0.0
        %v1012 = vsel %vm487, %v1008, 0.0
        %1017 = vrot.lane.b32.xlu0 %v972, 32
        %v1018 = vpop.permute.xlu0 %1017
        %1019 = vrot.lane.b32.xlu0 %v973, 32
        %v1020 = vpop.permute.xlu0 %1019
        %1021 = vrot.lane.b32.xlu0 %v974, 32
        %v1022 = vpop.permute.xlu0 %1021
        %1023 = vrot.lane.b32.xlu0 %v975, 32
        %v1024 = vpop.permute.xlu0 %1023
        %1033 = vrot.lane.b32.xlu0 %v1009, 64
        %v1034 = vpop.permute.xlu0 %1033
        %1035 = vrot.lane.b32.xlu0 %v1010, 64
        %v1036 = vpop.permute.xlu0 %1035
        %1037 = vrot.lane.b32.xlu0 %v1011, 64
        %v1038 = vpop.permute.xlu0 %1037
        %1039 = vrot.lane.b32.xlu0 %v1012, 64
        %v1040 = vpop.permute.xlu0 %1039
        %v1045 = vsel %vm687, %v997, %v1018
        %v1046 = vsel %vm687, %v998, %v1020
        %v1047 = vsel %vm687, %v999, %v1022
        %v1048 = vsel %vm687, %v1000, %v1024
        %v1049 = vsel %vm859, %v1045, %v1034
        %v1050 = vsel %vm859, %v1046, %v1036
        %v1051 = vsel %vm859, %v1047, %v1038
        %v1052 = vsel %vm859, %v1048, %v1040
        %v1053 = vpack.c.bf16 %v1050, %v1049
        %v1054 = vpack.c.bf16 %v1052, %v1051
        %v1056 = vlaneseq
        %v1057 = vshrl.u32 %v1056, 7
        %v1058 = vsub.s32 0, %v1057
        %v1059 = vrot.slane %v988, %v1058
        %v1073 = vunpack.c.l.b16 %v976
        %v1074 = vunpack.c.l.b16 %v977
        %v1075 = vunpack.c.l.b16 %v978
        %v1076 = vunpack.c.l.b16 %v979
        %v1077 = vunpack.c.l.b16 %v980
        %v1078 = vunpack.c.l.b16 %v981
        %v1079 = vunpack.c.l.b16 %v982
        %v1080 = vunpack.c.l.b16 %v983
        %v1081 = vunpack.c.l.b16 %v984
        %v1082 = vunpack.c.l.b16 %v985
        %v1083 = vunpack.c.l.b16 %v986
        %v1084 = vunpack.c.l.b16 %v987
        %v1085 = vpack.c.b16 %v1074, %v1073
        %v1086 = vpack.c.b16 %v1076, %v1075
        %v1087 = vpack.c.b16 %v1078, %v1077
        %v1088 = vpack.c.b16 %v1080, %v1079
        %v1089 = vpack.c.b16 %v1082, %v1081
        %v1090 = vpack.c.b16 %v1084, %v1083
        %v1098 = vsel %vm908, %v1053, 0
        %v1101 = vsel %vm908, %v1054, 0
        %1103 = vmatprep.subr.bf16.mxu0 0
        %1104 = vmatpush1.bf16.msra.mxu0 0
        %1105 = vmatprep.subr.bf16.mxu0 0
        %1106 = vmatpush1.bf16.msra.mxu0 0
        %1107 = vmatprep.subr.bf16.mxu0 0
        %1108 = vmatpush1.bf16.msra.mxu0 %v1090
        %1109 = vmatprep.subr.bf16.mxu0 0
        %1110 = vmatpush1.bf16.msra.mxu0 %v1089
        %1111 = vmatprep.subr.bf16.mxu0 0
        %1112 = vmatpush1.bf16.msra.mxu0 %v1088
        %1113 = vmatprep.subr.bf16.mxu0 0
        %1114 = vmatpush1.bf16.msra.mxu0 %v1087
        %1115 = vmatprep.subr.bf16.mxu0 0
        %1116 = vmatpush1.bf16.msra.mxu0 %v1086
        %1117 = vmatprep.subr.bf16.mxu0 0
        %1118 = vmatpush1.bf16.msra.mxu0 %v1085
        %1119 = vmatprep.subr.bf16.mxu0 0
        %1120 = vmatpush2.bf16.msra.mxu0 0
        %1121 = vmatprep.subr.bf16.mxu0 0
        %1122 = vmatpush2.bf16.msra.mxu0 0
        %1123 = vmatprep.subr.bf16.mxu0 0
        %1124 = vmatpush2.bf16.msra.mxu0 0
        %1125 = vmatprep.subr.bf16.mxu0 0
        %1126 = vmatpush2.bf16.msra.mxu0 0
        %1127 = vmatprep.subr.bf16.mxu0 0
        %1128 = vmatpush2.bf16.msra.mxu0 0
        %1129 = vmatprep.subr.bf16.mxu0 0
        %1130 = vmatpush2.bf16.msra.mxu0 0
        %1131 = vmatprep.subr.bf16.mxu0 0
        %1132 = vmatpush2.bf16.msra.mxu0 0
        %1133 = vmatprep.subr.bf16.mxu0 0
        %1134 = vmatpush2.bf16.msra.mxu0 0
        %1135 = vmatprep.mubr.bf16.mxu0 0
        %1136 = vmatmul.mubr.bf16.gmra.mxu0 %v1098
        %v1137 = vpop.f32.mrf.mxu0
        %v1138 = vadd.f32 %v1059, %v1137
        %v1139 = vpop.f32.mrf.mxu0
        %v1140 = vpop.f32.mrf.mxu0
        %v1141 = vadd.f32 %v1059, %v1140
        %v1142 = vpop.f32.mrf.mxu0
        %1143 = vmatprep.mubr.bf16.mxu0 0
        %1144 = vmatmul.mubr.bf16.gmra.mxu0 %v1101
        %v1145 = vpop.f32.mrf.mxu0
        %v1146 = vadd.f32 %v1059, %v1145
        %v1147 = vpop.f32.mrf.mxu0
        %v1148 = vpop.f32.mrf.mxu0
        %v1149 = vadd.f32 %v1059, %v1148
        %v1150 = vpop.f32.mrf.mxu0
        %1151 = vdwg.mxu0
        %vm1152 = vcmp.gt.f32.partialorder %v1138, 0.0
        %vm1153 = vcmp.gt.f32.partialorder %v1141, 0.0
        %vm1154 = vcmp.gt.f32.partialorder %v1146, 0.0
        %vm1155 = vcmp.gt.f32.partialorder %v1149, 0.0
        %v1156 = vmul.f32 %v1138, 0.2
        %v1157 = vmul.f32 %v1141, 0.2
        %v1158 = vmul.f32 %v1146, 0.2
        %v1159 = vmul.f32 %v1149, 0.2
        %v1160 = vsel %vm1152, %v1138, %v1156
        %v1161 = vsel %vm1153, %v1141, %v1157
        %v1162 = vsel %vm1154, %v1146, %v1158
        %v1163 = vsel %vm1155, %v1149, %v1159
        %v1164 = vpack.c.bf16 %v1161, %v1160
        %v1165 = vpack.c.bf16 %v1163, %v1162
        %v1166 = vld [vmem:[%s9] sm:$0xf]
        %v1167 = vld [vmem:[%s9 + $0x4] sm:$0xf]
        %v1168 = vld [vmem:[%s10] sm:$0x1]
        %v1170 = vlaneseq
        %v1171 = vshrl.u32 %v1170, 7
        %v1172 = vsub.s32 0, %v1171
        %v1173 = vrot.slane %v1168, %v1172
        %v1177 = vunpack.c.l.b16 %v1166
        %v1178 = vunpack.c.l.b16 %v1167
        %v1179 = vpack.c.b16 %v1178, %v1177
        %v1182 = vsel %vm682, %v1164, 0
        %v1185 = vsel %vm682, %v1165, 0
        %1187 = vmatprep.subr.bf16.mxu0 0
        %1188 = vmatpush1.bf16.msra.mxu0 0
        %1189 = vmatprep.subr.bf16.mxu0 0
        %1190 = vmatpush1.bf16.msra.mxu0 0
        %1191 = vmatprep.subr.bf16.mxu0 0
        %1192 = vmatpush1.bf16.msra.mxu0 0
        %1193 = vmatprep.subr.bf16.mxu0 0
        %1194 = vmatpush1.bf16.msra.mxu0 0
        %1195 = vmatprep.subr.bf16.mxu0 0
        %1196 = vmatpush1.bf16.msra.mxu0 0
        %1197 = vmatprep.subr.bf16.mxu0 0
        %1198 = vmatpush1.bf16.msra.mxu0 0
        %1199 = vmatprep.subr.bf16.mxu0 0
        %1200 = vmatpush1.bf16.msra.mxu0 0
        %1201 = vmatprep.subr.bf16.mxu0 0
        %1202 = vmatpush1.bf16.msra.mxu0 %v1179
        %1203 = vmatprep.subr.bf16.mxu0 0
        %1204 = vmatpush2.bf16.msra.mxu0 0
        %1205 = vmatprep.subr.bf16.mxu0 0
        %1206 = vmatpush2.bf16.msra.mxu0 0
        %1207 = vmatprep.subr.bf16.mxu0 0
        %1208 = vmatpush2.bf16.msra.mxu0 0
        %1209 = vmatprep.subr.bf16.mxu0 0
        %1210 = vmatpush2.bf16.msra.mxu0 0
        %1211 = vmatprep.subr.bf16.mxu0 0
        %1212 = vmatpush2.bf16.msra.mxu0 0
        %1213 = vmatprep.subr.bf16.mxu0 0
        %1214 = vmatpush2.bf16.msra.mxu0 0
        %1215 = vmatprep.subr.bf16.mxu0 0
        %1216 = vmatpush2.bf16.msra.mxu0 0
        %1217 = vmatprep.subr.bf16.mxu0 0
        %1218 = vmatpush2.bf16.msra.mxu0 0
        %1219 = vmatprep.mubr.bf16.mxu0 0
        %1220 = vmatmul.mubr.bf16.gmra.mxu0 %v1182
        %v1221 = vpop.f32.mrf.mxu0
        %v1222 = vadd.f32 %v1173, %v1221
        %v1223 = vpop.f32.mrf.mxu0
        %v1224 = vpop.f32.mrf.mxu0
        %v1225 = vadd.f32 %v1173, %v1224
        %v1226 = vpop.f32.mrf.mxu0
        %1227 = vmatprep.mubr.bf16.mxu0 0
        %1228 = vmatmul.mubr.bf16.gmra.mxu0 %v1185
        %v1229 = vpop.f32.mrf.mxu0
        %v1230 = vadd.f32 %v1173, %v1229
        %v1231 = vpop.f32.mrf.mxu0
        %v1232 = vpop.f32.mrf.mxu0
        %v1233 = vadd.f32 %v1173, %v1232
        %v1234 = vpop.f32.mrf.mxu0
        %1235 = vdwg.mxu0
        %v1236 = vadd.f32 %v950, %v1222
        %v1237 = vadd.f32 %v953, %v1225
        %v1238 = vadd.f32 %v958, %v1230
        %v1239 = vadd.f32 %v961, %v1233
        %vm1240 = vcmp.gt.f32.partialorder %v1236, 0.0
        %vm1241 = vcmp.gt.f32.partialorder %v1237, 0.0
        %vm1242 = vcmp.gt.f32.partialorder %v1238, 0.0
        %vm1243 = vcmp.gt.f32.partialorder %v1239, 0.0
        %v1244 = vmul.f32 %v1236, 0.2
        %v1245 = vmul.f32 %v1237, 0.2
        %v1246 = vmul.f32 %v1238, 0.2
        %v1247 = vmul.f32 %v1239, 0.2
        %v1248 = vsel %vm1240, %v1236, %v1244
        %v1249 = vsel %vm1241, %v1237, %v1245
        %v1250 = vsel %vm1242, %v1238, %v1246
        %v1251 = vsel %vm1243, %v1239, %v1247
        %s1252 = scalar_lea.vmem %s7, 48
        %v1253 = vld [vmem:[%s1252] sm:$0xf]
        %v1254 = vld [vmem:[%s1252 + $0x4] sm:$0xf]
        %v1255 = vld [vmem:[%s1252 + $0x8] sm:$0xf]
        %v1256 = vld [vmem:[%s1252 + $0xc] sm:$0xf]
        %v1257 = vld [vmem:[%s1252 + $0x10] sm:$0xf]
        %v1258 = vld [vmem:[%s1252 + $0x14] sm:$0xf]
        %v1259 = vld [vmem:[%s1252 + $0x18] sm:$0xf]
        %v1260 = vld [vmem:[%s1252 + $0x1c] sm:$0xf]
        %v1261 = vld [vmem:[%s1252 + $0x20] sm:$0xf]
        %v1262 = vld [vmem:[%s1252 + $0x24] sm:$0xf]
        %v1263 = vld [vmem:[%s1252 + $0x28] sm:$0xf]
        %v1264 = vld [vmem:[%s1252 + $0x2c] sm:$0xf]
        %s1265 = scalar_lea.vmem %s8, 1
        %v1266 = vld [vmem:[%s1265] sm:$0x1]
        %v1267 = vrot.slane %v1248, 7
        %v1268 = vrot.slane %v1249, 7
        %v1269 = vrot.slane %v1250, 7
        %v1270 = vrot.slane %v1251, 7
        %v1271 = vsel %vm454, %v1269, %v1270
        %v1272 = vsel %vm454, %v1268, %v1269
        %v1273 = vsel %vm454, %v1267, %v1268
        %v1274 = vsel %vm454, %v1270, %v1267
        %v1275 = vsel %vm463, %v1274, 0.0
        %v1276 = vsel %vm464, %v1273, 0.0
        %v1277 = vsel %vm465, %v1272, 0.0
        %v1278 = vsel %vm466, %v1271, 0.0
        %v1279 = vrot.slane %v1248, 1
        %v1280 = vrot.slane %v1249, 1
        %v1281 = vrot.slane %v1250, 1
        %v1282 = vrot.slane %v1251, 1
        %v1283 = vsel %vm475, %v1281, %v1282
        %v1284 = vsel %vm475, %v1280, %v1281
        %v1285 = vsel %vm475, %v1279, %v1280
        %v1286 = vsel %vm475, %v1282, %v1279
        %v1287 = vsel %vm484, %v1285, 0.0
        %v1288 = vsel %vm485, %v1284, 0.0
        %v1289 = vsel %vm486, %v1283, 0.0
        %v1290 = vsel %vm487, %v1286, 0.0
        %1295 = vrot.lane.b32.xlu0 %v1248, 32
        %v1296 = vpop.permute.xlu0 %1295
        %1297 = vrot.lane.b32.xlu0 %v1249, 32
        %v1298 = vpop.permute.xlu0 %1297
        %1299 = vrot.lane.b32.xlu0 %v1250, 32
        %v1300 = vpop.permute.xlu0 %1299
        %1301 = vrot.lane.b32.xlu0 %v1251, 32
        %v1302 = vpop.permute.xlu0 %1301
        %1311 = vrot.lane.b32.xlu0 %v1287, 64
        %v1312 = vpop.permute.xlu0 %1311
        %1313 = vrot.lane.b32.xlu0 %v1288, 64
        %v1314 = vpop.permute.xlu0 %1313
        %1315 = vrot.lane.b32.xlu0 %v1289, 64
        %v1316 = vpop.permute.xlu0 %1315
        %1317 = vrot.lane.b32.xlu0 %v1290, 64
        %v1318 = vpop.permute.xlu0 %1317
        %v1323 = vsel %vm687, %v1275, %v1296
        %v1324 = vsel %vm687, %v1276, %v1298
        %v1325 = vsel %vm687, %v1277, %v1300
        %v1326 = vsel %vm687, %v1278, %v1302
        %v1327 = vsel %vm859, %v1323, %v1312
        %v1328 = vsel %vm859, %v1324, %v1314
        %v1329 = vsel %vm859, %v1325, %v1316
        %v1330 = vsel %vm859, %v1326, %v1318
        %v1331 = vpack.c.bf16 %v1328, %v1327
        %v1332 = vpack.c.bf16 %v1330, %v1329
        %v1334 = vlaneseq
        %v1335 = vshrl.u32 %v1334, 7
        %v1336 = vsub.s32 0, %v1335
        %v1337 = vrot.slane %v1266, %v1336
        %v1351 = vunpack.c.l.b16 %v1253
        %v1352 = vunpack.c.l.b16 %v1254
        %v1353 = vunpack.c.l.b16 %v1255
        %v1354 = vunpack.c.l.b16 %v1256
        %v1355 = vunpack.c.l.b16 %v1257
        %v1356 = vunpack.c.l.b16 %v1258
        %v1357 = vunpack.c.l.b16 %v1259
        %v1358 = vunpack.c.l.b16 %v1260
        %v1359 = vunpack.c.l.b16 %v1261
        %v1360 = vunpack.c.l.b16 %v1262
        %v1361 = vunpack.c.l.b16 %v1263
        %v1362 = vunpack.c.l.b16 %v1264
        %v1363 = vpack.c.b16 %v1352, %v1351
        %v1364 = vpack.c.b16 %v1354, %v1353
        %v1365 = vpack.c.b16 %v1356, %v1355
        %v1366 = vpack.c.b16 %v1358, %v1357
        %v1367 = vpack.c.b16 %v1360, %v1359
        %v1368 = vpack.c.b16 %v1362, %v1361
        %v1376 = vsel %vm908, %v1331, 0
        %v1379 = vsel %vm908, %v1332, 0
        %1381 = vmatprep.subr.bf16.mxu0 0
        %1382 = vmatpush1.bf16.msra.mxu0 0
        %1383 = vmatprep.subr.bf16.mxu0 0
        %1384 = vmatpush1.bf16.msra.mxu0 0
        %1385 = vmatprep.subr.bf16.mxu0 0
        %1386 = vmatpush1.bf16.msra.mxu0 %v1368
        %1387 = vmatprep.subr.bf16.mxu0 0
        %1388 = vmatpush1.bf16.msra.mxu0 %v1367
        %1389 = vmatprep.subr.bf16.mxu0 0
        %1390 = vmatpush1.bf16.msra.mxu0 %v1366
        %1391 = vmatprep.subr.bf16.mxu0 0
        %1392 = vmatpush1.bf16.msra.mxu0 %v1365
        %1393 = vmatprep.subr.bf16.mxu0 0
        %1394 = vmatpush1.bf16.msra.mxu0 %v1364
        %1395 = vmatprep.subr.bf16.mxu0 0
        %1396 = vmatpush1.bf16.msra.mxu0 %v1363
        %1397 = vmatprep.subr.bf16.mxu0 0
        %1398 = vmatpush2.bf16.msra.mxu0 0
        %1399 = vmatprep.subr.bf16.mxu0 0
        %1400 = vmatpush2.bf16.msra.mxu0 0
        %1401 = vmatprep.subr.bf16.mxu0 0
        %1402 = vmatpush2.bf16.msra.mxu0 0
        %1403 = vmatprep.subr.bf16.mxu0 0
        %1404 = vmatpush2.bf16.msra.mxu0 0
        %1405 = vmatprep.subr.bf16.mxu0 0
        %1406 = vmatpush2.bf16.msra.mxu0 0
        %1407 = vmatprep.subr.bf16.mxu0 0
        %1408 = vmatpush2.bf16.msra.mxu0 0
        %1409 = vmatprep.subr.bf16.mxu0 0
        %1410 = vmatpush2.bf16.msra.mxu0 0
        %1411 = vmatprep.subr.bf16.mxu0 0
        %1412 = vmatpush2.bf16.msra.mxu0 0
        %1413 = vmatprep.mubr.bf16.mxu0 0
        %1414 = vmatmul.mubr.bf16.gmra.mxu0 %v1376
        %v1415 = vpop.f32.mrf.mxu0
        %v1416 = vadd.f32 %v1337, %v1415
        %v1417 = vpop.f32.mrf.mxu0
        %v1418 = vpop.f32.mrf.mxu0
        %v1419 = vadd.f32 %v1337, %v1418
        %v1420 = vpop.f32.mrf.mxu0
        %1421 = vmatprep.mubr.bf16.mxu0 0
        %1422 = vmatmul.mubr.bf16.gmra.mxu0 %v1379
        %v1423 = vpop.f32.mrf.mxu0
        %v1424 = vadd.f32 %v1337, %v1423
        %v1425 = vpop.f32.mrf.mxu0
        %v1426 = vpop.f32.mrf.mxu0
        %v1427 = vadd.f32 %v1337, %v1426
        %v1428 = vpop.f32.mrf.mxu0
        %1429 = vdwg.mxu0
        %vm1430 = vcmp.gt.f32.partialorder %v1416, 0.0
        %vm1431 = vcmp.gt.f32.partialorder %v1419, 0.0
        %vm1432 = vcmp.gt.f32.partialorder %v1424, 0.0
        %vm1433 = vcmp.gt.f32.partialorder %v1427, 0.0
        %v1434 = vmul.f32 %v1416, 0.2
        %v1435 = vmul.f32 %v1419, 0.2
        %v1436 = vmul.f32 %v1424, 0.2
        %v1437 = vmul.f32 %v1427, 0.2
        %v1438 = vsel %vm1430, %v1416, %v1434
        %v1439 = vsel %vm1431, %v1419, %v1435
        %v1440 = vsel %vm1432, %v1424, %v1436
        %v1441 = vsel %vm1433, %v1427, %v1437
        %v1442 = vpack.c.bf16 %v1439, %v1438
        %v1443 = vpack.c.bf16 %v1441, %v1440
        %s1444 = scalar_lea.vmem %s9, 8
        %v1445 = vld [vmem:[%s1444] sm:$0xf]
        %v1446 = vld [vmem:[%s1444 + $0x4] sm:$0xf]
        %s1447 = scalar_lea.vmem %s10, 1
        %v1448 = vld [vmem:[%s1447] sm:$0x1]
        %v1450 = vlaneseq
        %v1451 = vshrl.u32 %v1450, 7
        %v1452 = vsub.s32 0, %v1451
        %v1453 = vrot.slane %v1448, %v1452
        %v1457 = vunpack.c.l.b16 %v1445
        %v1458 = vunpack.c.l.b16 %v1446
        %v1459 = vpack.c.b16 %v1458, %v1457
        %v1462 = vsel %vm682, %v1442, 0
        %v1465 = vsel %vm682, %v1443, 0
        %1467 = vmatprep.subr.bf16.mxu0 0
        %1468 = vmatpush1.bf16.msra.mxu0 0
        %1469 = vmatprep.subr.bf16.mxu0 0
        %1470 = vmatpush1.bf16.msra.mxu0 0
        %1471 = vmatprep.subr.bf16.mxu0 0
        %1472 = vmatpush1.bf16.msra.mxu0 0
        %1473 = vmatprep.subr.bf16.mxu0 0
        %1474 = vmatpush1.bf16.msra.mxu0 0
        %1475 = vmatprep.subr.bf16.mxu0 0
        %1476 = vmatpush1.bf16.msra.mxu0 0
        %1477 = vmatprep.subr.bf16.mxu0 0
        %1478 = vmatpush1.bf16.msra.mxu0 0
        %1479 = vmatprep.subr.bf16.mxu0 0
        %1480 = vmatpush1.bf16.msra.mxu0 0
        %1481 = vmatprep.subr.bf16.mxu0 0
        %1482 = vmatpush1.bf16.msra.mxu0 %v1459
        %1483 = vmatprep.subr.bf16.mxu0 0
        %1484 = vmatpush2.bf16.msra.mxu0 0
        %1485 = vmatprep.subr.bf16.mxu0 0
        %1486 = vmatpush2.bf16.msra.mxu0 0
        %1487 = vmatprep.subr.bf16.mxu0 0
        %1488 = vmatpush2.bf16.msra.mxu0 0
        %1489 = vmatprep.subr.bf16.mxu0 0
        %1490 = vmatpush2.bf16.msra.mxu0 0
        %1491 = vmatprep.subr.bf16.mxu0 0
        %1492 = vmatpush2.bf16.msra.mxu0 0
        %1493 = vmatprep.subr.bf16.mxu0 0
        %1494 = vmatpush2.bf16.msra.mxu0 0
        %1495 = vmatprep.subr.bf16.mxu0 0
        %1496 = vmatpush2.bf16.msra.mxu0 0
        %1497 = vmatprep.subr.bf16.mxu0 0
        %1498 = vmatpush2.bf16.msra.mxu0 0
        %1499 = vmatprep.mubr.bf16.mxu0 0
        %1500 = vmatmul.mubr.bf16.gmra.mxu0 %v1462
        %v1501 = vpop.f32.mrf.mxu0
        %v1502 = vpop.f32.mrf.mxu0
        %v1503 = vpop.f32.mrf.mxu0
        %v1504 = vadd.f32 %v1453, %v1503
        %v1505 = vpop.f32.mrf.mxu0
        %1506 = vmatprep.mubr.bf16.mxu0 0
        %1507 = vmatmul.mubr.bf16.gmra.mxu0 %v1465
        %v1508 = vpop.f32.mrf.mxu0
        %v1509 = vadd.f32 %v1453, %v1508
        %v1510 = vpop.f32.mrf.mxu0
        %v1511 = vpop.f32.mrf.mxu0
        %v1512 = vpop.f32.mrf.mxu0
        %1513 = vdwg.mxu0
        %v1514 = vadd.f32 %v1237, %v1504
        %v1515 = vadd.f32 %v1238, %v1509
        %vm1516 = vcmp.gt.f32.partialorder %v1514, 0.0
        %vm1517 = vcmp.gt.f32.partialorder %v1515, 0.0
        %v1518 = vmul.f32 %v1514, 0.2
        %v1519 = vmul.f32 %v1515, 0.2
        %v1520 = vsel %vm1516, %v1514, %v1518
        %v1521 = vsel %vm1517, %v1515, %v1519
        %1522 = vst.msk [vmem:[%s364] sm:$0xff] %vm687, %v1520
        %1523 = vst.msk [vmem:[%s364 + $0x8] sm:$0xff] %vm687, %v1521
        %s1524 = sand.u32 %s264, 1
        %s1525 = scalar_lea.sflag [#allocation3], %s1524
        %s1526 = sand.u32 %s264, 1
        %s1527 = smul.addr %s1526, 16
        %s1528 = scalar_lea.vmem [#allocation2], %s1527
        // Predicated region
        $region65: #{forward.1} parent=63 // pred_check
          %p1529 = pneg %p274
        $region66: #{forward.1} parent=63 // pred_check_branch
          %1531 = sbr.rel (%p1529) target = $region68
        $region67: #{forward.1} parent=63 // pred_region
          %s1532 = smul.u32 2, %s25
          %s1534 = ssub.s32 256, 256
          %1535 = vsyncadd %s1525, %s1534
          %s1536 = smul.addr %s1532, 128
          %s1537 = scalar_lea.hbm %s11, %s1536
          %s1538 = sshll.u32 %s1528, 4
          %s1539 = int_to_ptr.vmem [resolvable:$true] %s1538
          %1544 = dma.vmem_to_hbm [thread:$0]  %s1539, 256, %s1537, %s1525, 128, 128, 8
        $region68: #{forward.1} parent=63 // pred_fallthru
          _
      $region64: #{forward.1} parent=5 // pred_fallthru
        _
      %p1545 = scmp.le.s32.totalorder 2, %s20
      // Predicated region
      $region69: #{forward.1} parent=5 // pred_check
        %p1546 = pneg %p1545
      $region70: #{forward.1} parent=5 // pred_check_branch
        %1548 = sbr.rel (%p1546) target = $region72
      $region71: #{forward.1} parent=5 // pred_region
        %s1549 = ssub.s32 %s20, 2
        // Predicated region
        $region73: #{forward.1} parent=71 // pred_check
          %p1550 = pneg %p280
        $region74: #{forward.1} parent=71 // pred_check_branch
          %1552 = sbr.rel (%p1550) target = $region76
        $region75: #{forward.1} parent=71 // pred_region
          %s1553 = sand.u32 %s265, 1
          %s1554 = scalar_lea.sflag [#allocation3], %s1553
          %s1555 = sand.u32 %s265, 1
          %s1556 = smul.addr %s1555, 16
          %s1557 = scalar_lea.vmem [#allocation2], %s1556
          %1558 = dma.done %s1554, 256
        $region76: #{forward.1} parent=71 // pred_fallthru
          _
      $region72: #{forward.1} parent=5 // pred_fallthru
        _
    $region6: #{forward.1} parent=1 // loop_footer
      %s24 = sadd.s32 1, %s20
    $region7: #{forward.1} parent=1 // loop_footer_branch
      %19 = sbr.rel target = $region3
    $region8: #{forward.1} parent=1 // loop_exit
      _
    %1559 = vsyncpa [#allocation3], 1
    %s1560 = scalar_lea.sflag [#allocation3], 1
    %1561 = vsyncpa %s1560, 1

// kernel: forward.1
$region0: #{forward.1}
  #allocation0 [shape = 'u32[]', space=smem, size = 0x4, offset = 0x4, fixed_abs, tag = 'smem constant byte address 0x4 - core index']
  #allocation1 [shape = 'u32[144,128]{1,0:T(1,128)}', space=vmem, size = 0x12000, scoped, tag = 'internal scratch']
  %s0 = inlined_call_operand.vmem [shape: bf16[48,4], index: 0, kind: input, shape index: {}]
  %s1 = inlined_call_operand.vmem [shape: bf16[12,16], index: 1, kind: input, shape index: {}]
  %s2 = inlined_call_operand.vmem [shape: f32[1,16], index: 2, kind: input, shape index: {}]
  %s3 = inlined_call_operand.vmem [shape: bf16[48,32], index: 3, kind: input, shape index: {}]
  %s4 = inlined_call_operand.vmem [shape: f32[1,32], index: 4, kind: input, shape index: {}]
  %s5 = inlined_call_operand.vmem [shape: bf16[96,32], index: 5, kind: input, shape index: {}]
  %s6 = inlined_call_operand.vmem [shape: f32[1,32], index: 6, kind: input, shape index: {}]
  %s7 = inlined_call_operand.vmem [shape: bf16[2,96,16], index: 7, kind: input, shape index: {}]
  %s8 = inlined_call_operand.vmem [shape: f32[2,1,16], index: 8, kind: input, shape index: {}]
  %s9 = inlined_call_operand.vmem [shape: bf16[2,16,32], index: 9, kind: input, shape index: {}]
  %s10 = inlined_call_operand.vmem [shape: f32[2,1,32], index: 10, kind: input, shape index: {}]
  %s11 = inlined_call_operand.hbm [shape: f32[32,32], index: 11, kind: output, shape index: {}]
  %s12 = sld [smem:[#allocation0]]
  $region77: #{forward.1} parent=0
    _
  %s14 = ssub.s32 1, %s12
  %s15 = scalar_select 0, %s14, %s12
  $region1: #{forward.1} parent=0
    #allocation2 [shape = 'u8[16384]{0}', space=vmem, size = 0x4000, scoped, tag = 'output window, operand 0']
    #allocation3 [shape = 's32[2]{0}', space=sflag, size = 0x8, scoped, tag = 'scoped memory for forward.1']
    %16 = vsyncpa [#allocation3], 0
    %s17 = scalar_lea.sflag [#allocation3], 1
    %18 = vsyncpa %s17, 0
    loop: start=0, step=1, limit=4
    $region2: #{forward.1} parent=1 // loop_pre_header
      _
    $region3: #{forward.1} parent=1 // loop_header
      %s20 = sphi 0, %s24
      %p21 = scmp.ge.s32.totalorder %s20, 4
      %s28 = sphi 0, %s28
      %s30 = sphi 0, %s28
      %s31 = sphi 0, %s30
      %s45 = sphi 0, %s31
      %s49 = sphi 0, %s49
      %s51 = sphi 0, %s49
      %s52 = sphi 0, %s51
      %s66 = sphi 0, %s52
      %s70 = sphi 0, %s70
      %s72 = sphi 0, %s70
      %s73 = sphi 0, %s72
      %s87 = sphi 0, %s73
      %s91 = sphi 0, %s91
      %s93 = sphi 0, %s91
      %s94 = sphi 0, %s93
      %s108 = sphi 0, %s94
      %s112 = sphi 0, %s112
      %s114 = sphi 0, %s112
      %s115 = sphi 0, %s114
      %s129 = sphi 0, %s115
      %s133 = sphi 0, %s133
      %s135 = sphi 0, %s133
      %s136 = sphi 0, %s135
      %s150 = sphi 0, %s136
      %s154 = sphi 0, %s154
      %s156 = sphi 0, %s154
      %s157 = sphi 0, %s156
      %s171 = sphi 0, %s157
      %s175 = sphi 0, %s175
      %s177 = sphi 0, %s175
      %s178 = sphi 0, %s177
      %s192 = sphi 0, %s178
      %s196 = sphi 0, %s196
      %s198 = sphi 0, %s196
      %s199 = sphi 0, %s198
      %s213 = sphi 0, %s199
      %s217 = sphi 0, %s217
      %s219 = sphi 0, %s217
      %s220 = sphi 0, %s219
      %s234 = sphi 0, %s220
      %s238 = sphi 0, %s238
      %s240 = sphi 0, %s238
      %s241 = sphi 0, %s240
      %s255 = sphi 0, %s241
      %s261 = sphi 0, %s263
      %s264 = sphi 0, %s261
      %s265 = sphi 0, %s264
      %s281 = sphi 0, %s265
    $region4: #{forward.1} parent=1 // loop_header_branch
      %23 = sbr.rel (%p21) target = $region8
    $region5: #{forward.1} parent=1 // loop_body
      %s25 = ssub.s32 %s20, 1
      %s26 = ssub.s32 %s20, 2
      %s27 = sadd.s32 %s20, 1
      %s29 = sadd.s32 %s28, 1
      %p32 = scmp.eq.s32.totalorder %s20, 1
      %p33 = scmp.ne.s32.totalorder %s28, %s30
      %p34 = scmp.eq.s32.totalorder %s20, 0
      %p35 = por %p33, %p34
      %p36 = scmp.ne.s32.totalorder %s28, %s30
      %p37 = scmp.eq.s32.totalorder %s25, 1
      %p38 = por %p36, %p37
      %p39 = scmp.ne.s32.totalorder %s30, %s31
      %p40 = scmp.eq.s32.totalorder %s25, 0
      %p41 = por %p39, %p40
      %p42 = scmp.ne.s32.totalorder %s30, %s31
      %p43 = scmp.eq.s32.totalorder %s26, 1
      %p44 = por %p42, %p43
      %p46 = scmp.ne.s32.totalorder %s31, %s45
      %p47 = scmp.eq.s32.totalorder %s26, 0
      %p48 = por %p46, %p47
      %s50 = sadd.s32 %s49, 1
      %p53 = scmp.eq.s32.totalorder %s20, 1
      %p54 = scmp.ne.s32.totalorder %s49, %s51
      %p55 = scmp.eq.s32.totalorder %s20, 0
      %p56 = por %p54, %p55
      %p57 = scmp.ne.s32.totalorder %s49, %s51
      %p58 = scmp.eq.s32.totalorder %s25, 1
      %p59 = por %p57, %p58
      %p60 = scmp.ne.s32.totalorder %s51, %s52
      %p61 = scmp.eq.s32.totalorder %s25, 0
      %p62 = por %p60, %p61
      %p63 = scmp.ne.s32.totalorder %s51, %s52
      %p64 = scmp.eq.s32.totalorder %s26, 1
      %p65 = por %p63, %p64
      %p67 = scmp.ne.s32.totalorder %s52, %s66
      %p68 = scmp.eq.s32.totalorder %s26, 0
      %p69 = por %p67, %p68
      %s71 = sadd.s32 %s70, 1
      %p74 = scmp.eq.s32.totalorder %s20, 1
      %p75 = scmp.ne.s32.totalorder %s70, %s72
      %p76 = scmp.eq.s32.totalorder %s20, 0
      %p77 = por %p75, %p76
      %p78 = scmp.ne.s32.totalorder %s70, %s72
      %p79 = scmp.eq.s32.totalorder %s25, 1
      %p80 = por %p78, %p79
      %p81 = scmp.ne.s32.totalorder %s72, %s73
      %p82 = scmp.eq.s32.totalorder %s25, 0
      %p83 = por %p81, %p82
      %p84 = scmp.ne.s32.totalorder %s72, %s73
      %p85 = scmp.eq.s32.totalorder %s26, 1
      %p86 = por %p84, %p85
      %p88 = scmp.ne.s32.totalorder %s73, %s87
      %p89 = scmp.eq.s32.totalorder %s26, 0
      %p90 = por %p88, %p89
      %s92 = sadd.s32 %s91, 1
      %p95 = scmp.eq.s32.totalorder %s20, 1
      %p96 = scmp.ne.s32.totalorder %s91, %s93
      %p97 = scmp.eq.s32.totalorder %s20, 0
      %p98 = por %p96, %p97
      %p99 = scmp.ne.s32.totalorder %s91, %s93
      %p100 = scmp.eq.s32.totalorder %s25, 1
      %p101 = por %p99, %p100
      %p102 = scmp.ne.s32.totalorder %s93, %s94
      %p103 = scmp.eq.s32.totalorder %s25, 0
      %p104 = por %p102, %p103
      %p105 = scmp.ne.s32.totalorder %s93, %s94
      %p106 = scmp.eq.s32.totalorder %s26, 1
      %p107 = por %p105, %p106
      %p109 = scmp.ne.s32.totalorder %s94, %s108
      %p110 = scmp.eq.s32.totalorder %s26, 0
      %p111 = por %p109, %p110
      %s113 = sadd.s32 %s112, 1
      %p116 = scmp.eq.s32.totalorder %s20, 1
      %p117 = scmp.ne.s32.totalorder %s112, %s114
      %p118 = scmp.eq.s32.totalorder %s20, 0
      %p119 = por %p117, %p118
      %p120 = scmp.ne.s32.totalorder %s112, %s114
      %p121 = scmp.eq.s32.totalorder %s25, 1
      %p122 = por %p120, %p121
      %p123 = scmp.ne.s32.totalorder %s114, %s115
      %p124 = scmp.eq.s32.totalorder %s25, 0
      %p125 = por %p123, %p124
      %p126 = scmp.ne.s32.totalorder %s114, %s115
      %p127 = scmp.eq.s32.totalorder %s26, 1
      %p128 = por %p126, %p127
      %p130 = scmp.ne.s32.totalorder %s115, %s129
      %p131 = scmp.eq.s32.totalorder %s26, 0
      %p132 = por %p130, %p131
      %s134 = sadd.s32 %s133, 1
      %p137 = scmp.eq.s32.totalorder %s20, 1
      %p138 = scmp.ne.s32.totalorder %s133, %s135
      %p139 = scmp.eq.s32.totalorder %s20, 0
      %p140 = por %p138, %p139
      %p141 = scmp.ne.s32.totalorder %s133, %s135
      %p142 = scmp.eq.s32.totalorder %s25, 1
      %p143 = por %p141, %p142
      %p144 = scmp.ne.s32.totalorder %s135, %s136
      %p145 = scmp.eq.s32.totalorder %s25, 0
      %p146 = por %p144, %p145
      %p147 = scmp.ne.s32.totalorder %s135, %s136
      %p148 = scmp.eq.s32.totalorder %s26, 1
      %p149 = por %p147, %p148
      %p151 = scmp.ne.s32.totalorder %s136, %s150
      %p152 = scmp.eq.s32.totalorder %s26, 0
      %p153 = por %p151, %p152
      %s155 = sadd.s32 %s154, 1
      %p158 = scmp.eq.s32.totalorder %s20, 1
      %p159 = scmp.ne.s32.totalorder %s154, %s156
      %p160 = scmp.eq.s32.totalorder %s20, 0
      %p161 = por %p159, %p160
      %p162 = scmp.ne.s32.totalorder %s154, %s156
      %p163 = scmp.eq.s32.totalorder %s25, 1
      %p164 = por %p162, %p163
      %p165 = scmp.ne.s32.totalorder %s156, %s157
      %p166 = scmp.eq.s32.totalorder %s25, 0
      %p167 = por %p165, %p166
      %p168 = scmp.ne.s32.totalorder %s156, %s157
      %p169 = scmp.eq.s32.totalorder %s26, 1
      %p170 = por %p168, %p169
      %p172 = scmp.ne.s32.totalorder %s157, %s171
      %p173 = scmp.eq.s32.totalorder %s26, 0
      %p174 = por %p172, %p173
      %s176 = sadd.s32 %s175, 1
      %p179 = scmp.eq.s32.totalorder %s20, 1
      %p180 = scmp.ne.s32.totalorder %s175, %s177
      %p181 = scmp.eq.s32.totalorder %s20, 0
      %p182 = por %p180, %p181
      %p183 = scmp.ne.s32.totalorder %s175, %s177
      %p184 = scmp.eq.s32.totalorder %s25, 1
      %p185 = por %p183, %p184
      %p186 = scmp.ne.s32.totalorder %s177, %s178
      %p187 = scmp.eq.s32.totalorder %s25, 0
      %p188 = por %p186, %p187
      %p189 = scmp.ne.s32.totalorder %s177, %s178
      %p190 = scmp.eq.s32.totalorder %s26, 1
      %p191 = por %p189, %p190
      %p193 = scmp.ne.s32.totalorder %s178, %s192
      %p194 = scmp.eq.s32.totalorder %s26, 0
      %p195 = por %p193, %p194
      %s197 = sadd.s32 %s196, 1
      %p200 = scmp.eq.s32.totalorder %s20, 1
      %p201 = scmp.ne.s32.totalorder %s196, %s198
      %p202 = scmp.eq.s32.totalorder %s20, 0
      %p203 = por %p201, %p202
      %p204 = scmp.ne.s32.totalorder %s196, %s198
      %p205 = scmp.eq.s32.totalorder %s25, 1
      %p206 = por %p204, %p205
      %p207 = scmp.ne.s32.totalorder %s198, %s199
      %p208 = scmp.eq.s32.totalorder %s25, 0
      %p209 = por %p207, %p208
      %p210 = scmp.ne.s32.totalorder %s198, %s199
      %p211 = scmp.eq.s32.totalorder %s26, 1
      %p212 = por %p210, %p211
      %p214 = scmp.ne.s32.totalorder %s199, %s213
      %p215 = scmp.eq.s32.totalorder %s26, 0
      %p216 = por %p214, %p215
      %s218 = sadd.s32 %s217, 1
      %p221 = scmp.eq.s32.totalorder %s20, 1
      %p222 = scmp.ne.s32.totalorder %s217, %s219
      %p223 = scmp.eq.s32.totalorder %s20, 0
      %p224 = por %p222, %p223
      %p225 = scmp.ne.s32.totalorder %s217, %s219
      %p226 = scmp.eq.s32.totalorder %s25, 1
      %p227 = por %p225, %p226
      %p228 = scmp.ne.s32.totalorder %s219, %s220
      %p229 = scmp.eq.s32.totalorder %s25, 0
      %p230 = por %p228, %p229
      %p231 = scmp.ne.s32.totalorder %s219, %s220
      %p232 = scmp.eq.s32.totalorder %s26, 1
      %p233 = por %p231, %p232
      %p235 = scmp.ne.s32.totalorder %s220, %s234
      %p236 = scmp.eq.s32.totalorder %s26, 0
      %p237 = por %p235, %p236
      %s239 = sadd.s32 %s238, 1
      %p242 = scmp.eq.s32.totalorder %s20, 1
      %p243 = scmp.ne.s32.totalorder %s238, %s240
      %p244 = scmp.eq.s32.totalorder %s20, 0
      %p245 = por %p243, %p244
      %p246 = scmp.ne.s32.totalorder %s238, %s240
      %p247 = scmp.eq.s32.totalorder %s25, 1
      %p248 = por %p246, %p247
      %p249 = scmp.ne.s32.totalorder %s240, %s241
      %p250 = scmp.eq.s32.totalorder %s25, 0
      %p251 = por %p249, %p250
      %p252 = scmp.ne.s32.totalorder %s240, %s241
      %p253 = scmp.eq.s32.totalorder %s26, 1
      %p254 = por %p252, %p253
      %p256 = scmp.ne.s32.totalorder %s241, %s255
      %p257 = scmp.eq.s32.totalorder %s26, 0
      %p258 = por %p256, %p257
      %s259 = ssub.s32 %s20, %s27
      %p260 = scmp.eq.s32.totalorder %s259, 0
      %s262 = sadd.s32 %s261, 1
      %s263 = scalar_select %p260, %s261, %s262
      %p266 = pneg %p260
      %p267 = scmp.eq.s32.totalorder %s20, 1
      %p268 = por %p266, %p267
      %p269 = scmp.ne.s32.totalorder %s261, %s264
      %p270 = scmp.eq.s32.totalorder %s20, 0
      %p271 = por %p269, %p270
      %p272 = scmp.ne.s32.totalorder %s261, %s264
      %p273 = scmp.eq.s32.totalorder %s25, 1
      %p274 = por %p272, %p273
      %p275 = scmp.ne.s32.totalorder %s264, %s265
      %p276 = scmp.eq.s32.totalorder %s25, 0
      %p277 = por %p275, %p276
      %p278 = scmp.ne.s32.totalorder %s264, %s265
      %p279 = scmp.eq.s32.totalorder %s26, 1
      %p280 = por %p278, %p279
      %p282 = scmp.ne.s32.totalorder %s265, %s281
      %p283 = scmp.eq.s32.totalorder %s26, 0
      %p284 = por %p282, %p283
      %p285 = scmp.le.s32.totalorder 1, %s20
      %p286 = scmp.lt.s32.totalorder %s20, 3
      %p287 = pnand %p285, %p286
      %p288 = pneg %p287
      // Predicated region
      $region9: #{forward.1} parent=5 // pred_check
        _
      $region10: #{forward.1} parent=5 // pred_check_branch
        %290 = sbr.rel (%p287) target = $region12
      $region11: #{forward.1} parent=5 // pred_region
        %s291 = ssub.s32 %s20, 1
        // Predicated region
        $region13: #{forward.1} parent=11 // pred_check
          %p292 = pneg %p41
        $region14: #{forward.1} parent=11 // pred_check_branch
          %294 = sbr.rel (%p292) target = $region16
        $region15: #{forward.1} parent=11 // pred_region
          _
        $region16: #{forward.1} parent=11 // pred_fallthru
          _
        // Predicated region
        $region17: #{forward.1} parent=11 // pred_check
          %p295 = pneg %p62
        $region18: #{forward.1} parent=11 // pred_check_branch
          %297 = sbr.rel (%p295) target = $region20
        $region19: #{forward.1} parent=11 // pred_region
          _
        $region20: #{forward.1} parent=11 // pred_fallthru
          _
        // Predicated region
        $region21: #{forward.1} parent=11 // pred_check
          %p298 = pneg %p83
        $region22: #{forward.1} parent=11 // pred_check_branch
          %300 = sbr.rel (%p298) target = $region24
        $region23: #{forward.1} parent=11 // pred_region
          _
        $region24: #{forward.1} parent=11 // pred_fallthru
          _
        // Predicated region
        $region25: #{forward.1} parent=11 // pred_check
          %p301 = pneg %p104
        $region26: #{forward.1} parent=11 // pred_check_branch
          %303 = sbr.rel (%p301) target = $region28
        $region27: #{forward.1} parent=11 // pred_region
          _
        $region28: #{forward.1} parent=11 // pred_fallthru
          _
        // Predicated region
        $region29: #{forward.1} parent=11 // pred_check
          %p304 = pneg %p125
        $region30: #{forward.1} parent=11 // pred_check_branch
          %306 = sbr.rel (%p304) target = $region32
        $region31: #{forward.1} parent=11 // pred_region
          _
        $region32: #{forward.1} parent=11 // pred_fallthru
          _
        // Predicated region
        $region33: #{forward.1} parent=11 // pred_check
          %p307 = pneg %p146
        $region34: #{forward.1} parent=11 // pred_check_branch
          %309 = sbr.rel (%p307) target = $region36
        $region35: #{forward.1} parent=11 // pred_region
          _
        $region36: #{forward.1} parent=11 // pred_fallthru
          _
        // Predicated region
        $region37: #{forward.1} parent=11 // pred_check
          %p310 = pneg %p167
        $region38: #{forward.1} parent=11 // pred_check_branch
          %312 = sbr.rel (%p310) target = $region40
        $region39: #{forward.1} parent=11 // pred_region
          _
        $region40: #{forward.1} parent=11 // pred_fallthru
          _
        // Predicated region
        $region41: #{forward.1} parent=11 // pred_check
          %p313 = pneg %p188
        $region42: #{forward.1} parent=11 // pred_check_branch
          %315 = sbr.rel (%p313) target = $region44
        $region43: #{forward.1} parent=11 // pred_region
          _
        $region44: #{forward.1} parent=11 // pred_fallthru
          _
        // Predicated region
        $region45: #{forward.1} parent=11 // pred_check
          %p316 = pneg %p209
        $region46: #{forward.1} parent=11 // pred_check_branch
          %318 = sbr.rel (%p316) target = $region48
        $region47: #{forward.1} parent=11 // pred_region
          _
        $region48: #{forward.1} parent=11 // pred_fallthru
          _
        // Predicated region
        $region49: #{forward.1} parent=11 // pred_check
          %p319 = pneg %p230
        $region50: #{forward.1} parent=11 // pred_check_branch
          %321 = sbr.rel (%p319) target = $region52
        $region51: #{forward.1} parent=11 // pred_region
          _
        $region52: #{forward.1} parent=11 // pred_fallthru
          _
        // Predicated region
        $region53: #{forward.1} parent=11 // pred_check
          %p322 = pneg %p251
        $region54: #{forward.1} parent=11 // pred_check_branch
          %324 = sbr.rel (%p322) target = $region56
        $region55: #{forward.1} parent=11 // pred_region
          _
        $region56: #{forward.1} parent=11 // pred_fallthru
          _
      $region12: #{forward.1} parent=5 // pred_fallthru
        _
      %p325 = scmp.lt.s32.totalorder %s20, 2
      // Predicated region
      $region57: #{forward.1} parent=5 // pred_check
        %p326 = pneg %p325
      $region58: #{forward.1} parent=5 // pred_check_branch
        %328 = sbr.rel (%p326) target = $region60
      $region59: #{forward.1} parent=5 // pred_region
        _
      $region60: #{forward.1} parent=5 // pred_fallthru
        _
      %p329 = scmp.le.s32.totalorder 1, %s20
      %p330 = scmp.lt.s32.totalorder %s20, 3
      %p331 = pnand %p329, %p330
      %p332 = pneg %p331
      // Predicated region
      $region61: #{forward.1} parent=5 // pred_check
        _
      $region62: #{forward.1} parent=5 // pred_check_branch
        %334 = sbr.rel (%p331) target = $region64
      $region63: #{forward.1} parent=5 // pred_region
        %s335 = ssub.s32 %s20, 1
        %p336 = pneg %p41
        %p337 = pneg %p38
        %p338 = pneg %p62
        %p339 = pneg %p59
        %p340 = pneg %p83
        %p341 = pneg %p80
        %p342 = pneg %p104
        %p343 = pneg %p101
        %p344 = pneg %p125
        %p345 = pneg %p122
        %p346 = pneg %p146
        %p347 = pneg %p143
        %p348 = pneg %p167
        %p349 = pneg %p164
        %p350 = pneg %p188
        %p351 = pneg %p185
        %p352 = pneg %p209
        %p353 = pneg %p206
        %p354 = pneg %p230
        %p355 = pneg %p227
        %p356 = pneg %p251
        %p357 = pneg %p248
        %p358 = pneg %p277
        %p359 = pneg %p274
        %s360 = sand.u32 %s264, 1
        %s361 = scalar_lea.sflag [#allocation3], %s360
        %s362 = sand.u32 %s264, 1
        %s363 = smul.addr %s362, 16
        %s364 = scalar_lea.vmem [#allocation2], %s363
        %s365 = smul.u32 2, %s25
        %s367 = smul.u32 %s25, 16
        %s368 = sshra.s32 %s367, 3
        %s369 = sand.u32 %s367, 7
        %s370 = smul.addr %s368, 4
        %s371 = scalar_lea.vmem %s0, %s370
        %v372 = vld [vmem:[%s371] sm:$0xf]
        %v373 = vld [vmem:[%s371 + $0x4] sm:$0xf]
        %v374 = vld [vmem:[%s371 + $0x8] sm:$0xf]
        %v375 = vld [vmem:[%s371 + $0xc] sm:$0xf]
        %v376 = vunpack.c.l.bf16 %v372
        %v377 = vunpack.c.l.bf16 %v373
        %v378 = vunpack.c.l.bf16 %v374
        %v379 = vunpack.c.l.bf16 %v375
        %s380 = ssub.s32 %s367, 8
        %v381 = vlaneseq
        %v382 = vshrl.u32 %v381, 7
        %v383 = vadd.s32 %v382, 8
        %v384 = vadd.s32 %v382, 16
        %v385 = vadd.s32 %v382, 24
        %v386 = vstv %s380
        %v387 = vadd.s32 %v386, %v382
        %v388 = vadd.s32 %v386, %v383
        %v389 = vadd.s32 %v386, %v384
        %v390 = vadd.s32 %v386, %v385
        %vm391 = vcmp.lt.s32.totalorder %v387, 0
        %v392 = vsub.s32 0, %v387
        %v393 = vsel %vm391, %v392, %v387
        %v394 = vshrl.u32 %v393, 4
        %v395 = vand.u32 %v393, 15
        %v396 = vsub.s32 0, %v395
        %v397 = vsel %vm391, %v396, %v395
        %vm398 = vcmp.lt.s32.totalorder %v388, 0
        %v399 = vsub.s32 0, %v388
        %v400 = vsel %vm398, %v399, %v388
        %v401 = vshrl.u32 %v400, 4
        %v402 = vand.u32 %v400, 15
        %v403 = vsub.s32 0, %v402
        %v404 = vsel %vm398, %v403, %v402
        %vm405 = vcmp.lt.s32.totalorder %v389, 0
        %v406 = vsub.s32 0, %v389
        %v407 = vsel %vm405, %v406, %v389
        %v408 = vshrl.u32 %v407, 4
        %v409 = vand.u32 %v407, 15
        %v410 = vsub.s32 0, %v409
        %v411 = vsel %vm405, %v410, %v409
        %vm412 = vcmp.lt.s32.totalorder %v390, 0
        %v413 = vsub.s32 0, %v390
        %v414 = vsel %vm412, %v413, %v390
        %v415 = vshrl.u32 %v414, 4
        %v416 = vand.u32 %v414, 15
        %v417 = vsub.s32 0, %v416
        %v418 = vsel %vm412, %v417, %v416
        %vm419 = vcmp.ne.s32.totalorder %v397, 0
        %vm420 = vcmp.ne.s32.totalorder %v404, 0
        %vm421 = vcmp.ne.s32.totalorder %v411, 0
        %vm422 = vcmp.ne.s32.totalorder %v418, 0
        %vm423 = vcmp.lt.s32.totalorder %v397, 0
        %vm424 = vcmp.lt.s32.totalorder %v404, 0
        %vm425 = vcmp.lt.s32.totalorder %v411, 0
        %vm426 = vcmp.lt.s32.totalorder %v418, 0
        %vm427 = vmand %vm423, %vm419
        %vm428 = vmand %vm424, %vm420
        %vm429 = vmand %vm425, %vm421
        %vm430 = vmand %vm426, %vm422
        %v431 = vadd.s32 %v397, 16
        %v432 = vadd.s32 %v404, 16
        %v433 = vadd.s32 %v411, 16
        %v434 = vadd.s32 %v418, 16
        %v435 = vsel %vm427, %v431, %v397
        %v436 = vsel %vm428, %v432, %v404
        %v437 = vsel %vm429, %v433, %v411
        %v438 = vsel %vm430, %v434, %v418
        %vm439 = vcmp.ne.s32.totalorder %v435, 0
        %vm440 = vcmp.ne.s32.totalorder %v436, 0
        %vm441 = vcmp.ne.s32.totalorder %v437, 0
        %vm442 = vcmp.ne.s32.totalorder %v438, 0
        %vm443 = vcmp.ne.s32.totalorder %v435, 15
        %vm444 = vcmp.ne.s32.totalorder %v436, 15
        %vm445 = vcmp.ne.s32.totalorder %v437, 15
        %vm446 = vcmp.ne.s32.totalorder %v438, 15
        %v447 = vld [vmem:[%s1] sm:$0xf]
        %v448 = vld [vmem:[%s1 + $0x4] sm:$0x3]
        %v449 = vld [vmem:[%s2] sm:$0x1]
        %v450 = vrot.slane %v376, 7
        %v451 = vrot.slane %v377, 7
        %v452 = vrot.slane %v378, 7
        %v453 = vrot.slane %v379, 7
        %vm454 = vcmp.lt.s32.totalorder %v382, 1
        %v455 = vsel %vm454, %v452, %v453
        %v456 = vsel %vm454, %v451, %v452
        %v457 = vsel %vm454, %v450, %v451
        %v458 = vsel %vm454, %v453, %v450
        %v459 = vsel %vm439, 1, 0
        %v460 = vsel %vm440, 1, 0
        %v461 = vsel %vm441, 1, 0
        %v462 = vsel %vm442, 1, 0
        %vm463 = vcmp.eq.s32.totalorder %v459, 1
        %vm464 = vcmp.eq.s32.totalorder %v460, 1
        %vm465 = vcmp.eq.s32.totalorder %v461, 1
        %vm466 = vcmp.eq.s32.totalorder %v462, 1
        %v467 = vsel %vm463, %v458, 0.0
        %v468 = vsel %vm464, %v457, 0.0
        %v469 = vsel %vm465, %v456, 0.0
        %v470 = vsel %vm466, %v455, 0.0
        %v471 = vrot.slane %v376, 1
        %v472 = vrot.slane %v377, 1
        %v473 = vrot.slane %v378, 1
        %v474 = vrot.slane %v379, 1
        %vm475 = vcmp.lt.s32.totalorder %v382, 7
        %v476 = vsel %vm475, %v473, %v474
        %v477 = vsel %vm475, %v472, %v473
        %v478 = vsel %vm475, %v471, %v472
        %v479 = vsel %vm475, %v474, %v471
        %v480 = vsel %vm443, 1, 0
        %v481 = vsel %vm444, 1, 0
        %v482 = vsel %vm445, 1, 0
        %v483 = vsel %vm446, 1, 0
        %vm484 = vcmp.eq.s32.totalorder %v480, 1
        %vm485 = vcmp.eq.s32.totalorder %v481, 1
        %vm486 = vcmp.eq.s32.totalorder %v482, 1
        %vm487 = vcmp.eq.s32.totalorder %v483, 1
        %v488 = vsel %vm484, %v478, 0.0
        %v489 = vsel %vm485, %v477, 0.0
        %v490 = vsel %vm486, %v476, 0.0
        %v491 = vsel %vm487, %v479, 0.0
        %496 = vrot.lane.b32.xlu0 %v376, 4
        %v497 = vpop.permute.xlu0 %496
        %498 = vrot.lane.b32.xlu0 %v377, 4
        %v499 = vpop.permute.xlu0 %498
        %500 = vrot.lane.b32.xlu0 %v378, 4
        %v501 = vpop.permute.xlu0 %500
        %502 = vrot.lane.b32.xlu0 %v379, 4
        %v503 = vpop.permute.xlu0 %502
        %512 = vrot.lane.b32.xlu0 %v488, 8
        %v513 = vpop.permute.xlu0 %512
        %514 = vrot.lane.b32.xlu0 %v489, 8
        %v515 = vpop.permute.xlu0 %514
        %516 = vrot.lane.b32.xlu0 %v490, 8
        %v517 = vpop.permute.xlu0 %516
        %518 = vrot.lane.b32.xlu0 %v491, 8
        %v519 = vpop.permute.xlu0 %518
        %vm524 = vcmask 31744
        %v525 = vsel %vm524, %v467, %v497
        %v526 = vsel %vm524, %v468, %v499
        %v527 = vsel %vm524, %v469, %v501
        %v528 = vsel %vm524, %v470, %v503
        %vm529 = vcmask 64512
        %v530 = vsel %vm529, %v525, %v513
        %v531 = vsel %vm529, %v526, %v515
        %v532 = vsel %vm529, %v527, %v517
        %v533 = vsel %vm529, %v528, %v519
        %v534 = vpack.c.bf16 %v531, %v530
        %v535 = vpack.c.bf16 %v533, %v532
        %v537 = vlaneseq
        %v538 = vshrl.u32 %v537, 7
        %v539 = vsub.s32 0, %v538
        %v540 = vrot.slane %v449, %v539
        %v544 = vunpack.c.l.b16 %v447
        %v545 = vunpack.c.l.b16 %v448
        %v546 = vpack.c.b16 %v545, %v544
        %vm547 = vcmask 97280
        %v549 = vsel %vm547, %v534, 0
        %v552 = vsel %vm547, %v535, 0
        %vm554 = vcmask 1045504
        %v556 = vsel %vm554, %v546, 0
        %558 = vmatprep.subr.bf16.mxu0 0
        %559 = vmatpush1.bf16.msra.mxu0 0
        %560 = vmatprep.subr.bf16.mxu0 0
        %561 = vmatpush1.bf16.msra.mxu0 0
        %562 = vmatprep.subr.bf16.mxu0 0
        %563 = vmatpush1.bf16.msra.mxu0 0
        %564 = vmatprep.subr.bf16.mxu0 0
        %565 = vmatpush1.bf16.msra.mxu0 0
        %566 = vmatprep.subr.bf16.mxu0 0
        %567 = vmatpush1.bf16.msra.mxu0 0
        %568 = vmatprep.subr.bf16.mxu0 0
        %569 = vmatpush1.bf16.msra.mxu0 0
        %570 = vmatprep.subr.bf16.mxu0 0
        %571 = vmatpush1.bf16.msra.mxu0 0
        %572 = vmatprep.subr.bf16.mxu0 0
        %573 = vmatpush1.bf16.msra.mxu0 %v556
        %574 = vmatprep.subr.bf16.mxu0 0
        %575 = vmatpush2.bf16.msra.mxu0 0
        %576 = vmatprep.subr.bf16.mxu0 0
        %577 = vmatpush2.bf16.msra.mxu0 0
        %578 = vmatprep.subr.bf16.mxu0 0
        %579 = vmatpush2.bf16.msra.mxu0 0
        %580 = vmatprep.subr.bf16.mxu0 0
        %581 = vmatpush2.bf16.msra.mxu0 0
        %582 = vmatprep.subr.bf16.mxu0 0
        %583 = vmatpush2.bf16.msra.mxu0 0
        %584 = vmatprep.subr.bf16.mxu0 0
        %585 = vmatpush2.bf16.msra.mxu0 0
        %586 = vmatprep.subr.bf16.mxu0 0
        %587 = vmatpush2.bf16.msra.mxu0 0
        %588 = vmatprep.subr.bf16.mxu0 0
        %589 = vmatpush2.bf16.msra.mxu0 0
        %590 = vmatprep.mubr.bf16.mxu0 0
        %591 = vmatmul.mubr.bf16.gmra.mxu0 %v549
        %v592 = vpop.f32.mrf.mxu0
        %v593 = vadd.f32 %v540, %v592
        %v594 = vpop.f32.mrf.mxu0
        %v595 = vpop.f32.mrf.mxu0
        %v596 = vadd.f32 %v540, %v595
        %v597 = vpop.f32.mrf.mxu0
        %598 = vmatprep.mubr.bf16.mxu0 0
        %599 = vmatmul.mubr.bf16.gmra.mxu0 %v552
        %v600 = vpop.f32.mrf.mxu0
        %v601 = vadd.f32 %v540, %v600
        %v602 = vpop.f32.mrf.mxu0
        %v603 = vpop.f32.mrf.mxu0
        %v604 = vadd.f32 %v540, %v603
        %v605 = vpop.f32.mrf.mxu0
        %606 = vdwg.mxu0
        %vm607 = vcmp.gt.f32.partialorder %v593, 0.0
        %vm608 = vcmp.gt.f32.partialorder %v596, 0.0
        %vm609 = vcmp.gt.f32.partialorder %v601, 0.0
        %vm610 = vcmp.gt.f32.partialorder %v604, 0.0
        %v611 = vmul.f32 %v593, 0.2
        %v612 = vmul.f32 %v596, 0.2
        %v613 = vmul.f32 %v601, 0.2
        %v614 = vmul.f32 %v604, 0.2
        %v615 = vsel %vm607, %v593, %v611
        %v616 = vsel %vm608, %v596, %v612
        %v617 = vsel %vm609, %v601, %v613
        %v618 = vsel %vm610, %v604, %v614
        %v619 = vld [vmem:[%s3] sm:$0xf]
        %v620 = vld [vmem:[%s3 + $0x4] sm:$0xf]
        %v621 = vld [vmem:[%s3 + $0x8] sm:$0xf]
        %v622 = vld [vmem:[%s3 + $0xc] sm:$0xf]
        %v623 = vld [vmem:[%s3 + $0x10] sm:$0xf]
        %v624 = vld [vmem:[%s3 + $0x14] sm:$0xf]
        %v625 = vld [vmem:[%s4] sm:$0x1]
        %v626 = vrot.slane %v615, 7
        %v627 = vrot.slane %v616, 7
        %v628 = vrot.slane %v617, 7
        %v629 = vrot.slane %v618, 7
        %v630 = vsel %vm454, %v628, %v629
        %v631 = vsel %vm454, %v627, %v628
        %v632 = vsel %vm454, %v626, %v627
        %v633 = vsel %vm454, %v629, %v626
        %v634 = vsel %vm463, %v633, 0.0
        %v635 = vsel %vm464, %v632, 0.0
        %v636 = vsel %vm465, %v631, 0.0
        %v637 = vsel %vm466, %v630, 0.0
        %v638 = vrot.slane %v615, 1
        %v639 = vrot.slane %v616, 1
        %v640 = vrot.slane %v617, 1
        %v641 = vrot.slane %v618, 1
        %v642 = vsel %vm475, %v640, %v641
        %v643 = vsel %vm475, %v639, %v640
        %v644 = vsel %vm475, %v638, %v639
        %v645 = vsel %vm475, %v641, %v638
        %v646 = vsel %vm484, %v644, 0.0
        %v647 = vsel %vm485, %v643, 0.0
        %v648 = vsel %vm486, %v642, 0.0
        %v649 = vsel %vm487, %v645, 0.0
        %654 = vrot.lane.b32.xlu0 %v615, 16
        %v655 = vpop.permute.xlu0 %654
        %656 = vrot.lane.b32.xlu0 %v616, 16
        %v657 = vpop.permute.xlu0 %656
        %658 = vrot.lane.b32.xlu0 %v617, 16
        %v659 = vpop.permute.xlu0 %658
        %660 = vrot.lane.b32.xlu0 %v618, 16
        %v661 = vpop.permute.xlu0 %660
        %670 = vrot.lane.b32.xlu0 %v646, 32
        %v671 = vpop.permute.xlu0 %670
        %672 = vrot.lane.b32.xlu0 %v647, 32
        %v673 = vpop.permute.xlu0 %672
        %674 = vrot.lane.b32.xlu0 %v648, 32
        %v675 = vpop.permute.xlu0 %674
        %676 = vrot.lane.b32.xlu0 %v649, 32
        %v677 = vpop.permute.xlu0 %676
        %vm682 = vcmask 130048
        %v683 = vsel %vm682, %v634, %v655
        %v684 = vsel %vm682, %v635, %v657
        %v685 = vsel %vm682, %v636, %v659
        %v686 = vsel %vm682, %v637, %v661
        %vm687 = vcmask 261120
        %v688 = vsel %vm687, %v683, %v671
        %v689 = vsel %vm687, %v684, %v673
        %v690 = vsel %vm687, %v685, %v675
        %v691 = vsel %vm687, %v686, %v677
        %v692 = vpack.c.bf16 %v689, %v688
        %v693 = vpack.c.bf16 %v691, %v690
        %v695 = vlaneseq
        %v696 = vshrl.u32 %v695, 7
        %v697 = vsub.s32 0, %v696
        %v698 = vrot.slane %v625, %v697
        %v706 = vunpack.c.l.b16 %v619
        %v707 = vunpack.c.l.b16 %v620
        %v708 = vunpack.c.l.b16 %v621
        %v709 = vunpack.c.l.b16 %v622
        %v710 = vunpack.c.l.b16 %v623
        %v711 = vunpack.c.l.b16 %v624
        %v712 = vpack.c.b16 %v707, %v706
        %v713 = vpack.c.b16 %v709, %v708
        %v714 = vpack.c.b16 %v711, %v710
        %vm718 = vcmask 392192
        %v720 = vsel %vm718, %v692, 0
        %v723 = vsel %vm718, %v693, 0
        %725 = vmatprep.subr.bf16.mxu0 0
        %726 = vmatpush1.bf16.msra.mxu0 0
        %727 = vmatprep.subr.bf16.mxu0 0
        %728 = vmatpush1.bf16.msra.mxu0 0
        %729 = vmatprep.subr.bf16.mxu0 0
        %730 = vmatpush1.bf16.msra.mxu0 0
        %731 = vmatprep.subr.bf16.mxu0 0
        %732 = vmatpush1.bf16.msra.mxu0 0
        %733 = vmatprep.subr.bf16.mxu0 0
        %734 = vmatpush1.bf16.msra.mxu0 0
        %735 = vmatprep.subr.bf16.mxu0 0
        %736 = vmatpush1.bf16.msra.mxu0 %v714
        %737 = vmatprep.subr.bf16.mxu0 0
        %738 = vmatpush1.bf16.msra.mxu0 %v713
        %739 = vmatprep.subr.bf16.mxu0 0
        %740 = vmatpush1.bf16.msra.mxu0 %v712
        %741 = vmatprep.subr.bf16.mxu0 0
        %742 = vmatpush2.bf16.msra.mxu0 0
        %743 = vmatprep.subr.bf16.mxu0 0
        %744 = vmatpush2.bf16.msra.mxu0 0
        %745 = vmatprep.subr.bf16.mxu0 0
        %746 = vmatpush2.bf16.msra.mxu0 0
        %747 = vmatprep.subr.bf16.mxu0 0
        %748 = vmatpush2.bf16.msra.mxu0 0
        %749 = vmatprep.subr.bf16.mxu0 0
        %750 = vmatpush2.bf16.msra.mxu0 0
        %751 = vmatprep.subr.bf16.mxu0 0
        %752 = vmatpush2.bf16.msra.mxu0 0
        %753 = vmatprep.subr.bf16.mxu0 0
        %754 = vmatpush2.bf16.msra.mxu0 0
        %755 = vmatprep.subr.bf16.mxu0 0
        %756 = vmatpush2.bf16.msra.mxu0 0
        %757 = vmatprep.mubr.bf16.mxu0 0
        %758 = vmatmul.mubr.bf16.gmra.mxu0 %v720
        %v759 = vpop.f32.mrf.mxu0
        %v760 = vadd.f32 %v698, %v759
        %v761 = vpop.f32.mrf.mxu0
        %v762 = vpop.f32.mrf.mxu0
        %v763 = vadd.f32 %v698, %v762
        %v764 = vpop.f32.mrf.mxu0
        %765 = vmatprep.mubr.bf16.mxu0 0
        %766 = vmatmul.mubr.bf16.gmra.mxu0 %v723
        %v767 = vpop.f32.mrf.mxu0
        %v768 = vadd.f32 %v698, %v767
        %v769 = vpop.f32.mrf.mxu0
        %v770 = vpop.f32.mrf.mxu0
        %v771 = vadd.f32 %v698, %v770
        %v772 = vpop.f32.mrf.mxu0
        %773 = vdwg.mxu0
        %vm774 = vcmp.gt.f32.partialorder %v760, 0.0
        %vm775 = vcmp.gt.f32.partialorder %v763, 0.0
        %vm776 = vcmp.gt.f32.partialorder %v768, 0.0
        %vm777 = vcmp.gt.f32.partialorder %v771, 0.0
        %v778 = vmul.f32 %v760, 0.2
        %v779 = vmul.f32 %v763, 0.2
        %v780 = vmul.f32 %v768, 0.2
        %v781 = vmul.f32 %v771, 0.2
        %v782 = vsel %vm774, %v760, %v778
        %v783 = vsel %vm775, %v763, %v779
        %v784 = vsel %vm776, %v768, %v780
        %v785 = vsel %vm777, %v771, %v781
        %v786 = vld [vmem:[%s5] sm:$0xf]
        %v787 = vld [vmem:[%s5 + $0x4] sm:$0xf]
        %v788 = vld [vmem:[%s5 + $0x8] sm:$0xf]
        %v789 = vld [vmem:[%s5 + $0xc] sm:$0xf]
        %v790 = vld [vmem:[%s5 + $0x10] sm:$0xf]
        %v791 = vld [vmem:[%s5 + $0x14] sm:$0xf]
        %v792 = vld [vmem:[%s5 + $0x18] sm:$0xf]
        %v793 = vld [vmem:[%s5 + $0x1c] sm:$0xf]
        %v794 = vld [vmem:[%s5 + $0x20] sm:$0xf]
        %v795 = vld [vmem:[%s5 + $0x24] sm:$0xf]
        %v796 = vld [vmem:[%s5 + $0x28] sm:$0xf]
        %v797 = vld [vmem:[%s5 + $0x2c] sm:$0xf]
        %v798 = vld [vmem:[%s6] sm:$0x1]
        %v799 = vrot.slane %v782, 7
        %v800 = vrot.slane %v783, 7
        %v801 = vrot.slane %v784, 7
        %v802 = vrot.slane %v785, 7
        %v803 = vsel %vm454, %v801, %v802
        %v804 = vsel %vm454, %v800, %v801
        %v805 = vsel %vm454, %v799, %v800
        %v806 = vsel %vm454, %v802, %v799
        %v807 = vsel %vm463, %v806, 0.0
        %v808 = vsel %vm464, %v805, 0.0
        %v809 = vsel %vm465, %v804, 0.0
        %v810 = vsel %vm466, %v803, 0.0
        %v811 = vrot.slane %v782, 1
        %v812 = vrot.slane %v783, 1
        %v813 = vrot.slane %v784, 1
        %v814 = vrot.slane %v785, 1
        %v815 = vsel %vm475, %v813, %v814
        %v816 = vsel %vm475, %v812, %v813
        %v817 = vsel %vm475, %v811, %v812
        %v818 = vsel %vm475, %v814, %v811
        %v819 = vsel %vm484, %v817, 0.0
        %v820 = vsel %vm485, %v816, 0.0
        %v821 = vsel %vm486, %v815, 0.0
        %v822 = vsel %vm487, %v818, 0.0
        %827 = vrot.lane.b32.xlu0 %v782, 32
        %v828 = vpop.permute.xlu0 %827
        %829 = vrot.lane.b32.xlu0 %v783, 32
        %v830 = vpop.permute.xlu0 %829
        %831 = vrot.lane.b32.xlu0 %v784, 32
        %v832 = vpop.permute.xlu0 %831
        %833 = vrot.lane.b32.xlu0 %v785, 32
        %v834 = vpop.permute.xlu0 %833
        %843 = vrot.lane.b32.xlu0 %v819, 64
        %v844 = vpop.permute.xlu0 %843
        %845 = vrot.lane.b32.xlu0 %v820, 64
        %v846 = vpop.permute.xlu0 %845
        %847 = vrot.lane.b32.xlu0 %v821, 64
        %v848 = vpop.permute.xlu0 %847
        %849 = vrot.lane.b32.xlu0 %v822, 64
        %v850 = vpop.permute.xlu0 %849
        %v855 = vsel %vm687, %v807, %v828
        %v856 = vsel %vm687, %v808, %v830
        %v857 = vsel %vm687, %v809, %v832
        %v858 = vsel %vm687, %v810, %v834
        %vm859 = vcmask 523264
        %v860 = vsel %vm859, %v855, %v844
        %v861 = vsel %vm859, %v856, %v846
        %v862 = vsel %vm859, %v857, %v848
        %v863 = vsel %vm859, %v858, %v850
        %v864 = vpack.c.bf16 %v861, %v860
        %v865 = vpack.c.bf16 %v863, %v862
        %v867 = vlaneseq
        %v868 = vshrl.u32 %v867, 7
        %v869 = vsub.s32 0, %v868
        %v870 = vrot.slane %v798, %v869
        %v884 = vunpack.c.l.b16 %v786
        %v885 = vunpack.c.l.b16 %v787
        %v886 = vunpack.c.l.b16 %v788
        %v887 = vunpack.c.l.b16 %v789
        %v888 = vunpack.c.l.b16 %v790
        %v889 = vunpack.c.l.b16 %v791
        %v890 = vunpack.c.l.b16 %v792
        %v891 = vunpack.c.l.b16 %v793
        %v892 = vunpack.c.l.b16 %v794
        %v893 = vunpack.c.l.b16 %v795
        %v894 = vunpack.c.l.b16 %v796
        %v895 = vunpack.c.l.b16 %v797
        %v896 = vpack.c.b16 %v885, %v884
        %v897 = vpack.c.b16 %v887, %v886
        %v898 = vpack.c.b16 %v889, %v888
        %v899 = vpack.c.b16 %v891, %v890
        %v900 = vpack.c.b16 %v893, %v892
        %v901 = vpack.c.b16 %v895, %v894
        %vm908 = vcmask 785408
        %v910 = vsel %vm908, %v864, 0
        %v913 = vsel %vm908, %v865, 0
        %915 = vmatprep.subr.bf16.mxu0 0
        %916 = vmatpush1.bf16.msra.mxu0 0
        %917 = vmatprep.subr.bf16.mxu0 0
        %918 = vmatpush1.bf16.msra.mxu0 0
        %919 = vmatprep.subr.bf16.mxu0 0
        %920 = vmatpush1.bf16.msra.mxu0 %v901
        %921 = vmatprep.subr.bf16.mxu0 0
        %922 = vmatpush1.bf16.msra.mxu0 %v900
        %923 = vmatprep.subr.bf16.mxu0 0
        %924 = vmatpush1.bf16.msra.mxu0 %v899
        %925 = vmatprep.subr.bf16.mxu0 0
        %926 = vmatpush1.bf16.msra.mxu0 %v898
        %927 = vmatprep.subr.bf16.mxu0 0
        %928 = vmatpush1.bf16.msra.mxu0 %v897
        %929 = vmatprep.subr.bf16.mxu0 0
        %930 = vmatpush1.bf16.msra.mxu0 %v896
        %931 = vmatprep.subr.bf16.mxu0 0
        %932 = vmatpush2.bf16.msra.mxu0 0
        %933 = vmatprep.subr.bf16.mxu0 0
        %934 = vmatpush2.bf16.msra.mxu0 0
        %935 = vmatprep.subr.bf16.mxu0 0
        %936 = vmatpush2.bf16.msra.mxu0 0
        %937 = vmatprep.subr.bf16.mxu0 0
        %938 = vmatpush2.bf16.msra.mxu0 0
        %939 = vmatprep.subr.bf16.mxu0 0
        %940 = vmatpush2.bf16.msra.mxu0 0
        %941 = vmatprep.subr.bf16.mxu0 0
        %942 = vmatpush2.bf16.msra.mxu0 0
        %943 = vmatprep.subr.bf16.mxu0 0
        %944 = vmatpush2.bf16.msra.mxu0 0
        %945 = vmatprep.subr.bf16.mxu0 0
        %946 = vmatpush2.bf16.msra.mxu0 0
        %947 = vmatprep.mubr.bf16.mxu0 0
        %948 = vmatmul.mubr.bf16.gmra.mxu0 %v910
        %v949 = vpop.f32.mrf.mxu0
        %v950 = vadd.f32 %v870, %v949
        %v951 = vpop.f32.mrf.mxu0
        %v952 = vpop.f32.mrf.mxu0
        %v953 = vadd.f32 %v870, %v952
        %v954 = vpop.f32.mrf.mxu0
        %955 = vmatprep.mubr.bf16.mxu0 0
        %956 = vmatmul.mubr.bf16.gmra.mxu0 %v913
        %v957 = vpop.f32.mrf.mxu0
        %v958 = vadd.f32 %v870, %v957
        %v959 = vpop.f32.mrf.mxu0
        %v960 = vpop.f32.mrf.mxu0
        %v961 = vadd.f32 %v870, %v960
        %v962 = vpop.f32.mrf.mxu0
        %963 = vdwg.mxu0
        %vm964 = vcmp.gt.f32.partialorder %v950, 0.0
        %vm965 = vcmp.gt.f32.partialorder %v953, 0.0
        %vm966 = vcmp.gt.f32.partialorder %v958, 0.0
        %vm967 = vcmp.gt.f32.partialorder %v961, 0.0
        %v968 = vmul.f32 %v950, 0.2
        %v969 = vmul.f32 %v953, 0.2
        %v970 = vmul.f32 %v958, 0.2
        %v971 = vmul.f32 %v961, 0.2
        %v972 = vsel %vm964, %v950, %v968
        %v973 = vsel %vm965, %v953, %v969
        %v974 = vsel %vm966, %v958, %v970
        %v975 = vsel %vm967, %v961, %v971
        %v976 = vld [vmem:[%s7] sm:$0xf]
        %v977 = vld [vmem:[%s7 + $0x4] sm:$0xf]
        %v978 = vld [vmem:[%s7 + $0x8] sm:$0xf]
        %v979 = vld [vmem:[%s7 + $0xc] sm:$0xf]
        %v980 = vld [vmem:[%s7 + $0x10] sm:$0xf]
        %v981 = vld [vmem:[%s7 + $0x14] sm:$0xf]
        %v982 = vld [vmem:[%s7 + $0x18] sm:$0xf]
        %v983 = vld [vmem:[%s7 + $0x1c] sm:$0xf]
        %v984 = vld [vmem:[%s7 + $0x20] sm:$0xf]
        %v985 = vld [vmem:[%s7 + $0x24] sm:$0xf]
        %v986 = vld [vmem:[%s7 + $0x28] sm:$0xf]
        %v987 = vld [vmem:[%s7 + $0x2c] sm:$0xf]
        %v988 = vld [vmem:[%s8] sm:$0x1]
        %v989 = vrot.slane %v972, 7
        %v990 = vrot.slane %v973, 7
        %v991 = vrot.slane %v974, 7
        %v992 = vrot.slane %v975, 7
        %v993 = vsel %vm454, %v991, %v992
        %v994 = vsel %vm454, %v990, %v991
        %v995 = vsel %vm454, %v989, %v990
        %v996 = vsel %vm454, %v992, %v989
        %v997 = vsel %vm463, %v996, 0.0
        %v998 = vsel %vm464, %v995, 0.0
        %v999 = vsel %vm465, %v994, 0.0
        %v1000 = vsel %vm466, %v993, 0.0
        %v1001 = vrot.slane %v972, 1
        %v1002 = vrot.slane %v973, 1
        %v1003 = vrot.slane %v974, 1
        %v1004 = vrot.slane %v975, 1
        %v1005 = vsel %vm475, %v1003, %v1004
        %v1006 = vsel %vm475, %v1002, %v1003
        %v1007 = vsel %vm475, %v1001, %v1002
        %v1008 = vsel %vm475, %v1004, %v1001
        %v1009 = vsel %vm484, %v1007, 0.0
        %v1010 = vsel %vm485, %v1006, 0.0
        %v1011 = vsel %vm486, %v1005, 0.0
        %v1012 = vsel %vm487, %v1008, 0.0
        %1017 = vrot.lane.b32.xlu0 %v972, 32
        %v1018 = vpop.permute.xlu0 %1017
        %1019 = vrot.lane.b32.xlu0 %v973, 32
        %v1020 = vpop.permute.xlu0 %1019
        %1021 = vrot.lane.b32.xlu0 %v974, 32
        %v1022 = vpop.permute.xlu0 %1021
        %1023 = vrot.lane.b32.xlu0 %v975, 32
        %v1024 = vpop.permute.xlu0 %1023
        %1033 = vrot.lane.b32.xlu0 %v1009, 64
        %v1034 = vpop.permute.xlu0 %1033
        %1035 = vrot.lane.b32.xlu0 %v1010, 64
        %v1036 = vpop.permute.xlu0 %1035
        %1037 = vrot.lane.b32.xlu0 %v1011, 64
        %v1038 = vpop.permute.xlu0 %1037
        %1039 = vrot.lane.b32.xlu0 %v1012, 64
        %v1040 = vpop.permute.xlu0 %1039
        %v1045 = vsel %vm687, %v997, %v1018
        %v1046 = vsel %vm687, %v998, %v1020
        %v1047 = vsel %vm687, %v999, %v1022
        %v1048 = vsel %vm687, %v1000, %v1024
        %v1049 = vsel %vm859, %v1045, %v1034
        %v1050 = vsel %vm859, %v1046, %v1036
        %v1051 = vsel %vm859, %v1047, %v1038
        %v1052 = vsel %vm859, %v1048, %v1040
        %v1053 = vpack.c.bf16 %v1050, %v1049
        %v1054 = vpack.c.bf16 %v1052, %v1051
        %v1056 = vlaneseq
        %v1057 = vshrl.u32 %v1056, 7
        %v1058 = vsub.s32 0, %v1057
        %v1059 = vrot.slane %v988, %v1058
        %v1073 = vunpack.c.l.b16 %v976
        %v1074 = vunpack.c.l.b16 %v977
        %v1075 = vunpack.c.l.b16 %v978
        %v1076 = vunpack.c.l.b16 %v979
        %v1077 = vunpack.c.l.b16 %v980
        %v1078 = vunpack.c.l.b16 %v981
        %v1079 = vunpack.c.l.b16 %v982
        %v1080 = vunpack.c.l.b16 %v983
        %v1081 = vunpack.c.l.b16 %v984
        %v1082 = vunpack.c.l.b16 %v985
        %v1083 = vunpack.c.l.b16 %v986
        %v1084 = vunpack.c.l.b16 %v987
        %v1085 = vpack.c.b16 %v1074, %v1073
        %v1086 = vpack.c.b16 %v1076, %v1075
        %v1087 = vpack.c.b16 %v1078, %v1077
        %v1088 = vpack.c.b16 %v1080, %v1079
        %v1089 = vpack.c.b16 %v1082, %v1081
        %v1090 = vpack.c.b16 %v1084, %v1083
        %v1098 = vsel %vm908, %v1053, 0
        %v1101 = vsel %vm908, %v1054, 0
        %1103 = vmatprep.subr.bf16.mxu0 0
        %1104 = vmatpush1.bf16.msra.mxu0 0
        %1105 = vmatprep.subr.bf16.mxu0 0
        %1106 = vmatpush1.bf16.msra.mxu0 0
        %1107 = vmatprep.subr.bf16.mxu0 0
        %1108 = vmatpush1.bf16.msra.mxu0 %v1090
        %1109 = vmatprep.subr.bf16.mxu0 0
        %1110 = vmatpush1.bf16.msra.mxu0 %v1089
        %1111 = vmatprep.subr.bf16.mxu0 0
        %1112 = vmatpush1.bf16.msra.mxu0 %v1088
        %1113 = vmatprep.subr.bf16.mxu0 0
        %1114 = vmatpush1.bf16.msra.mxu0 %v1087
        %1115 = vmatprep.subr.bf16.mxu0 0
        %1116 = vmatpush1.bf16.msra.mxu0 %v1086
        %1117 = vmatprep.subr.bf16.mxu0 0
        %1118 = vmatpush1.bf16.msra.mxu0 %v1085
        %1119 = vmatprep.subr.bf16.mxu0 0
        %1120 = vmatpush2.bf16.msra.mxu0 0
        %1121 = vmatprep.subr.bf16.mxu0 0
        %1122 = vmatpush2.bf16.msra.mxu0 0
        %1123 = vmatprep.subr.bf16.mxu0 0
        %1124 = vmatpush2.bf16.msra.mxu0 0
        %1125 = vmatprep.subr.bf16.mxu0 0
        %1126 = vmatpush2.bf16.msra.mxu0 0
        %1127 = vmatprep.subr.bf16.mxu0 0
        %1128 = vmatpush2.bf16.msra.mxu0 0
        %1129 = vmatprep.subr.bf16.mxu0 0
        %1130 = vmatpush2.bf16.msra.mxu0 0
        %1131 = vmatprep.subr.bf16.mxu0 0
        %1132 = vmatpush2.bf16.msra.mxu0 0
        %1133 = vmatprep.subr.bf16.mxu0 0
        %1134 = vmatpush2.bf16.msra.mxu0 0
        %1135 = vmatprep.mubr.bf16.mxu0 0
        %1136 = vmatmul.mubr.bf16.gmra.mxu0 %v1098
        %v1137 = vpop.f32.mrf.mxu0
        %v1138 = vadd.f32 %v1059, %v1137
        %v1139 = vpop.f32.mrf.mxu0
        %v1140 = vpop.f32.mrf.mxu0
        %v1141 = vadd.f32 %v1059, %v1140
        %v1142 = vpop.f32.mrf.mxu0
        %1143 = vmatprep.mubr.bf16.mxu0 0
        %1144 = vmatmul.mubr.bf16.gmra.mxu0 %v1101
        %v1145 = vpop.f32.mrf.mxu0
        %v1146 = vadd.f32 %v1059, %v1145
        %v1147 = vpop.f32.mrf.mxu0
        %v1148 = vpop.f32.mrf.mxu0
        %v1149 = vadd.f32 %v1059, %v1148
        %v1150 = vpop.f32.mrf.mxu0
        %1151 = vdwg.mxu0
        %vm1152 = vcmp.gt.f32.partialorder %v1138, 0.0
        %vm1153 = vcmp.gt.f32.partialorder %v1141, 0.0
        %vm1154 = vcmp.gt.f32.partialorder %v1146, 0.0
        %vm1155 = vcmp.gt.f32.partialorder %v1149, 0.0
        %v1156 = vmul.f32 %v1138, 0.2
        %v1157 = vmul.f32 %v1141, 0.2
        %v1158 = vmul.f32 %v1146, 0.2
        %v1159 = vmul.f32 %v1149, 0.2
        %v1160 = vsel %vm1152, %v1138, %v1156
        %v1161 = vsel %vm1153, %v1141, %v1157
        %v1162 = vsel %vm1154, %v1146, %v1158
        %v1163 = vsel %vm1155, %v1149, %v1159
        %v1164 = vpack.c.bf16 %v1161, %v1160
        %v1165 = vpack.c.bf16 %v1163, %v1162
        %v1166 = vld [vmem:[%s9] sm:$0xf]
        %v1167 = vld [vmem:[%s9 + $0x4] sm:$0xf]
        %v1168 = vld [vmem:[%s10] sm:$0x1]
        %v1170 = vlaneseq
        %v1171 = vshrl.u32 %v1170, 7
        %v1172 = vsub.s32 0, %v1171
        %v1173 = vrot.slane %v1168, %v1172
        %v1177 = vunpack.c.l.b16 %v1166
        %v1178 = vunpack.c.l.b16 %v1167
        %v1179 = vpack.c.b16 %v1178, %v1177
        %v1182 = vsel %vm682, %v1164, 0
        %v1185 = vsel %vm682, %v1165, 0
        %1187 = vmatprep.subr.bf16.mxu0 0
        %1188 = vmatpush1.bf16.msra.mxu0 0
        %1189 = vmatprep.subr.bf16.mxu0 0
        %1190 = vmatpush1.bf16.msra.mxu0 0
        %1191 = vmatprep.subr.bf16.mxu0 0
        %1192 = vmatpush1.bf16.msra.mxu0 0
        %1193 = vmatprep.subr.bf16.mxu0 0
        %1194 = vmatpush1.bf16.msra.mxu0 0
        %1195 = vmatprep.subr.bf16.mxu0 0
        %1196 = vmatpush1.bf16.msra.mxu0 0
        %1197 = vmatprep.subr.bf16.mxu0 0
        %1198 = vmatpush1.bf16.msra.mxu0 0
        %1199 = vmatprep.subr.bf16.mxu0 0
        %1200 = vmatpush1.bf16.msra.mxu0 0
        %1201 = vmatprep.subr.bf16.mxu0 0
        %1202 = vmatpush1.bf16.msra.mxu0 %v1179
        %1203 = vmatprep.subr.bf16.mxu0 0
        %1204 = vmatpush2.bf16.msra.mxu0 0
        %1205 = vmatprep.subr.bf16.mxu0 0
        %1206 = vmatpush2.bf16.msra.mxu0 0
        %1207 = vmatprep.subr.bf16.mxu0 0
        %1208 = vmatpush2.bf16.msra.mxu0 0
        %1209 = vmatprep.subr.bf16.mxu0 0
        %1210 = vmatpush2.bf16.msra.mxu0 0
        %1211 = vmatprep.subr.bf16.mxu0 0
        %1212 = vmatpush2.bf16.msra.mxu0 0
        %1213 = vmatprep.subr.bf16.mxu0 0
        %1214 = vmatpush2.bf16.msra.mxu0 0
        %1215 = vmatprep.subr.bf16.mxu0 0
        %1216 = vmatpush2.bf16.msra.mxu0 0
        %1217 = vmatprep.subr.bf16.mxu0 0
        %1218 = vmatpush2.bf16.msra.mxu0 0
        %1219 = vmatprep.mubr.bf16.mxu0 0
        %1220 = vmatmul.mubr.bf16.gmra.mxu0 %v1182
        %v1221 = vpop.f32.mrf.mxu0
        %v1222 = vadd.f32 %v1173, %v1221
        %v1223 = vpop.f32.mrf.mxu0
        %v1224 = vpop.f32.mrf.mxu0
        %v1225 = vadd.f32 %v1173, %v1224
        %v1226 = vpop.f32.mrf.mxu0
        %1227 = vmatprep.mubr.bf16.mxu0 0
        %1228 = vmatmul.mubr.bf16.gmra.mxu0 %v1185
        %v1229 = vpop.f32.mrf.mxu0
        %v1230 = vadd.f32 %v1173, %v1229
        %v1231 = vpop.f32.mrf.mxu0
        %v1232 = vpop.f32.mrf.mxu0
        %v1233 = vadd.f32 %v1173, %v1232
        %v1234 = vpop.f32.mrf.mxu0
        %1235 = vdwg.mxu0
        %v1236 = vadd.f32 %v950, %v1222
        %v1237 = vadd.f32 %v953, %v1225
        %v1238 = vadd.f32 %v958, %v1230
        %v1239 = vadd.f32 %v961, %v1233
        %vm1240 = vcmp.gt.f32.partialorder %v1236, 0.0
        %vm1241 = vcmp.gt.f32.partialorder %v1237, 0.0
        %vm1242 = vcmp.gt.f32.partialorder %v1238, 0.0
        %vm1243 = vcmp.gt.f32.partialorder %v1239, 0.0
        %v1244 = vmul.f32 %v1236, 0.2
        %v1245 = vmul.f32 %v1237, 0.2
        %v1246 = vmul.f32 %v1238, 0.2
        %v1247 = vmul.f32 %v1239, 0.2
        %v1248 = vsel %vm1240, %v1236, %v1244
        %v1249 = vsel %vm1241, %v1237, %v1245
        %v1250 = vsel %vm1242, %v1238, %v1246
        %v1251 = vsel %vm1243, %v1239, %v1247
        %s1252 = scalar_lea.vmem %s7, 48
        %v1253 = vld [vmem:[%s1252] sm:$0xf]
        %v1254 = vld [vmem:[%s1252 + $0x4] sm:$0xf]
        %v1255 = vld [vmem:[%s1252 + $0x8] sm:$0xf]
        %v1256 = vld [vmem:[%s1252 + $0xc] sm:$0xf]
        %v1257 = vld [vmem:[%s1252 + $0x10] sm:$0xf]
        %v1258 = vld [vmem:[%s1252 + $0x14] sm:$0xf]
        %v1259 = vld [vmem:[%s1252 + $0x18] sm:$0xf]
        %v1260 = vld [vmem:[%s1252 + $0x1c] sm:$0xf]
        %v1261 = vld [vmem:[%s1252 + $0x20] sm:$0xf]
        %v1262 = vld [vmem:[%s1252 + $0x24] sm:$0xf]
        %v1263 = vld [vmem:[%s1252 + $0x28] sm:$0xf]
        %v1264 = vld [vmem:[%s1252 + $0x2c] sm:$0xf]
        %s1265 = scalar_lea.vmem %s8, 1
        %v1266 = vld [vmem:[%s1265] sm:$0x1]
        %v1267 = vrot.slane %v1248, 7
        %v1268 = vrot.slane %v1249, 7
        %v1269 = vrot.slane %v1250, 7
        %v1270 = vrot.slane %v1251, 7
        %v1271 = vsel %vm454, %v1269, %v1270
        %v1272 = vsel %vm454, %v1268, %v1269
        %v1273 = vsel %vm454, %v1267, %v1268
        %v1274 = vsel %vm454, %v1270, %v1267
        %v1275 = vsel %vm463, %v1274, 0.0
        %v1276 = vsel %vm464, %v1273, 0.0
        %v1277 = vsel %vm465, %v1272, 0.0
        %v1278 = vsel %vm466, %v1271, 0.0
        %v1279 = vrot.slane %v1248, 1
        %v1280 = vrot.slane %v1249, 1
        %v1281 = vrot.slane %v1250, 1
        %v1282 = vrot.slane %v1251, 1
        %v1283 = vsel %vm475, %v1281, %v1282
        %v1284 = vsel %vm475, %v1280, %v1281
        %v1285 = vsel %vm475, %v1279, %v1280
        %v1286 = vsel %vm475, %v1282, %v1279
        %v1287 = vsel %vm484, %v1285, 0.0
        %v1288 = vsel %vm485, %v1284, 0.0
        %v1289 = vsel %vm486, %v1283, 0.0
        %v1290 = vsel %vm487, %v1286, 0.0
        %1295 = vrot.lane.b32.xlu0 %v1248, 32
        %v1296 = vpop.permute.xlu0 %1295
        %1297 = vrot.lane.b32.xlu0 %v1249, 32
        %v1298 = vpop.permute.xlu0 %1297
        %1299 = vrot.lane.b32.xlu0 %v1250, 32
        %v1300 = vpop.permute.xlu0 %1299
        %1301 = vrot.lane.b32.xlu0 %v1251, 32
        %v1302 = vpop.permute.xlu0 %1301
        %1311 = vrot.lane.b32.xlu0 %v1287, 64
        %v1312 = vpop.permute.xlu0 %1311
        %1313 = vrot.lane.b32.xlu0 %v1288, 64
        %v1314 = vpop.permute.xlu0 %1313
        %1315 = vrot.lane.b32.xlu0 %v1289, 64
        %v1316 = vpop.permute.xlu0 %1315
        %1317 = vrot.lane.b32.xlu0 %v1290, 64
        %v1318 = vpop.permute.xlu0 %1317
        %v1323 = vsel %vm687, %v1275, %v1296
        %v1324 = vsel %vm687, %v1276, %v1298
        %v1325 = vsel %vm687, %v1277, %v1300
        %v1326 = vsel %vm687, %v1278, %v1302
        %v1327 = vsel %vm859, %v1323, %v1312
        %v1328 = vsel %vm859, %v1324, %v1314
        %v1329 = vsel %vm859, %v1325, %v1316
        %v1330 = vsel %vm859, %v1326, %v1318
        %v1331 = vpack.c.bf16 %v1328, %v1327
        %v1332 = vpack.c.bf16 %v1330, %v1329
        %v1334 = vlaneseq
        %v1335 = vshrl.u32 %v1334, 7
        %v1336 = vsub.s32 0, %v1335
        %v1337 = vrot.slane %v1266, %v1336
        %v1351 = vunpack.c.l.b16 %v1253
        %v1352 = vunpack.c.l.b16 %v1254
        %v1353 = vunpack.c.l.b16 %v1255
        %v1354 = vunpack.c.l.b16 %v1256
        %v1355 = vunpack.c.l.b16 %v1257
        %v1356 = vunpack.c.l.b16 %v1258
        %v1357 = vunpack.c.l.b16 %v1259
        %v1358 = vunpack.c.l.b16 %v1260
        %v1359 = vunpack.c.l.b16 %v1261
        %v1360 = vunpack.c.l.b16 %v1262
        %v1361 = vunpack.c.l.b16 %v1263
        %v1362 = vunpack.c.l.b16 %v1264
        %v1363 = vpack.c.b16 %v1352, %v1351
        %v1364 = vpack.c.b16 %v1354, %v1353
        %v1365 = vpack.c.b16 %v1356, %v1355
        %v1366 = vpack.c.b16 %v1358, %v1357
        %v1367 = vpack.c.b16 %v1360, %v1359
        %v1368 = vpack.c.b16 %v1362, %v1361
        %v1376 = vsel %vm908, %v1331, 0
        %v1379 = vsel %vm908, %v1332, 0
        %1381 = vmatprep.subr.bf16.mxu0 0
        %1382 = vmatpush1.bf16.msra.mxu0 0
        %1383 = vmatprep.subr.bf16.mxu0 0
        %1384 = vmatpush1.bf16.msra.mxu0 0
        %1385 = vmatprep.subr.bf16.mxu0 0
        %1386 = vmatpush1.bf16.msra.mxu0 %v1368
        %1387 = vmatprep.subr.bf16.mxu0 0
        %1388 = vmatpush1.bf16.msra.mxu0 %v1367
        %1389 = vmatprep.subr.bf16.mxu0 0
        %1390 = vmatpush1.bf16.msra.mxu0 %v1366
        %1391 = vmatprep.subr.bf16.mxu0 0
        %1392 = vmatpush1.bf16.msra.mxu0 %v1365
        %1393 = vmatprep.subr.bf16.mxu0 0
        %1394 = vmatpush1.bf16.msra.mxu0 %v1364
        %1395 = vmatprep.subr.bf16.mxu0 0
        %1396 = vmatpush1.bf16.msra.mxu0 %v1363
        %1397 = vmatprep.subr.bf16.mxu0 0
        %1398 = vmatpush2.bf16.msra.mxu0 0
        %1399 = vmatprep.subr.bf16.mxu0 0
        %1400 = vmatpush2.bf16.msra.mxu0 0
        %1401 = vmatprep.subr.bf16.mxu0 0
        %1402 = vmatpush2.bf16.msra.mxu0 0
        %1403 = vmatprep.subr.bf16.mxu0 0
        %1404 = vmatpush2.bf16.msra.mxu0 0
        %1405 = vmatprep.subr.bf16.mxu0 0
        %1406 = vmatpush2.bf16.msra.mxu0 0
        %1407 = vmatprep.subr.bf16.mxu0 0
        %1408 = vmatpush2.bf16.msra.mxu0 0
        %1409 = vmatprep.subr.bf16.mxu0 0
        %1410 = vmatpush2.bf16.msra.mxu0 0
        %1411 = vmatprep.subr.bf16.mxu0 0
        %1412 = vmatpush2.bf16.msra.mxu0 0
        %1413 = vmatprep.mubr.bf16.mxu0 0
        %1414 = vmatmul.mubr.bf16.gmra.mxu0 %v1376
        %v1415 = vpop.f32.mrf.mxu0
        %v1416 = vadd.f32 %v1337, %v1415
        %v1417 = vpop.f32.mrf.mxu0
        %v1418 = vpop.f32.mrf.mxu0
        %v1419 = vadd.f32 %v1337, %v1418
        %v1420 = vpop.f32.mrf.mxu0
        %1421 = vmatprep.mubr.bf16.mxu0 0
        %1422 = vmatmul.mubr.bf16.gmra.mxu0 %v1379
        %v1423 = vpop.f32.mrf.mxu0
        %v1424 = vadd.f32 %v1337, %v1423
        %v1425 = vpop.f32.mrf.mxu0
        %v1426 = vpop.f32.mrf.mxu0
        %v1427 = vadd.f32 %v1337, %v1426
        %v1428 = vpop.f32.mrf.mxu0
        %1429 = vdwg.mxu0
        %vm1430 = vcmp.gt.f32.partialorder %v1416, 0.0
        %vm1431 = vcmp.gt.f32.partialorder %v1419, 0.0
        %vm1432 = vcmp.gt.f32.partialorder %v1424, 0.0
        %vm1433 = vcmp.gt.f32.partialorder %v1427, 0.0
        %v1434 = vmul.f32 %v1416, 0.2
        %v1435 = vmul.f32 %v1419, 0.2
        %v1436 = vmul.f32 %v1424, 0.2
        %v1437 = vmul.f32 %v1427, 0.2
        %v1438 = vsel %vm1430, %v1416, %v1434
        %v1439 = vsel %vm1431, %v1419, %v1435
        %v1440 = vsel %vm1432, %v1424, %v1436
        %v1441 = vsel %vm1433, %v1427, %v1437
        %v1442 = vpack.c.bf16 %v1439, %v1438
        %v1443 = vpack.c.bf16 %v1441, %v1440
        %s1444 = scalar_lea.vmem %s9, 8
        %v1445 = vld [vmem:[%s1444] sm:$0xf]
        %v1446 = vld [vmem:[%s1444 + $0x4] sm:$0xf]
        %s1447 = scalar_lea.vmem %s10, 1
        %v1448 = vld [vmem:[%s1447] sm:$0x1]
        %v1450 = vlaneseq
        %v1451 = vshrl.u32 %v1450, 7
        %v1452 = vsub.s32 0, %v1451
        %v1453 = vrot.slane %v1448, %v1452
        %v1457 = vunpack.c.l.b16 %v1445
        %v1458 = vunpack.c.l.b16 %v1446
        %v1459 = vpack.c.b16 %v1458, %v1457
        %v1462 = vsel %vm682, %v1442, 0
        %v1465 = vsel %vm682, %v1443, 0
        %1467 = vmatprep.subr.bf16.mxu0 0
        %1468 = vmatpush1.bf16.msra.mxu0 0
        %1469 = vmatprep.subr.bf16.mxu0 0
        %1470 = vmatpush1.bf16.msra.mxu0 0
        %1471 = vmatprep.subr.bf16.mxu0 0
        %1472 = vmatpush1.bf16.msra.mxu0 0
        %1473 = vmatprep.subr.bf16.mxu0 0
        %1474 = vmatpush1.bf16.msra.mxu0 0
        %1475 = vmatprep.subr.bf16.mxu0 0
        %1476 = vmatpush1.bf16.msra.mxu0 0
        %1477 = vmatprep.subr.bf16.mxu0 0
        %1478 = vmatpush1.bf16.msra.mxu0 0
        %1479 = vmatprep.subr.bf16.mxu0 0
        %1480 = vmatpush1.bf16.msra.mxu0 0
        %1481 = vmatprep.subr.bf16.mxu0 0
        %1482 = vmatpush1.bf16.msra.mxu0 %v1459
        %1483 = vmatprep.subr.bf16.mxu0 0
        %1484 = vmatpush2.bf16.msra.mxu0 0
        %1485 = vmatprep.subr.bf16.mxu0 0
        %1486 = vmatpush2.bf16.msra.mxu0 0
        %1487 = vmatprep.subr.bf16.mxu0 0
        %1488 = vmatpush2.bf16.msra.mxu0 0
        %1489 = vmatprep.subr.bf16.mxu0 0
        %1490 = vmatpush2.bf16.msra.mxu0 0
        %1491 = vmatprep.subr.bf16.mxu0 0
        %1492 = vmatpush2.bf16.msra.mxu0 0
        %1493 = vmatprep.subr.bf16.mxu0 0
        %1494 = vmatpush2.bf16.msra.mxu0 0
        %1495 = vmatprep.subr.bf16.mxu0 0
        %1496 = vmatpush2.bf16.msra.mxu0 0
        %1497 = vmatprep.subr.bf16.mxu0 0
        %1498 = vmatpush2.bf16.msra.mxu0 0
        %1499 = vmatprep.mubr.bf16.mxu0 0
        %1500 = vmatmul.mubr.bf16.gmra.mxu0 %v1462
        %v1501 = vpop.f32.mrf.mxu0
        %v1502 = vpop.f32.mrf.mxu0
        %v1503 = vpop.f32.mrf.mxu0
        %v1504 = vadd.f32 %v1453, %v1503
        %v1505 = vpop.f32.mrf.mxu0
        %1506 = vmatprep.mubr.bf16.mxu0 0
        %1507 = vmatmul.mubr.bf16.gmra.mxu0 %v1465
        %v1508 = vpop.f32.mrf.mxu0
        %v1509 = vadd.f32 %v1453, %v1508
        %v1510 = vpop.f32.mrf.mxu0
        %v1511 = vpop.f32.mrf.mxu0
        %v1512 = vpop.f32.mrf.mxu0
        %1513 = vdwg.mxu0
        %v1514 = vadd.f32 %v1237, %v1504
        %v1515 = vadd.f32 %v1238, %v1509
        %vm1516 = vcmp.gt.f32.partialorder %v1514, 0.0
        %vm1517 = vcmp.gt.f32.partialorder %v1515, 0.0
        %v1518 = vmul.f32 %v1514, 0.2
        %v1519 = vmul.f32 %v1515, 0.2
        %v1520 = vsel %vm1516, %v1514, %v1518
        %v1521 = vsel %vm1517, %v1515, %v1519
        %1522 = vst.msk [vmem:[%s364] sm:$0xff] %vm687, %v1520
        %1523 = vst.msk [vmem:[%s364 + $0x8] sm:$0xff] %vm687, %v1521
        %s1524 = sand.u32 %s264, 1
        %s1525 = scalar_lea.sflag [#allocation3], %s1524
        %s1526 = sand.u32 %s264, 1
        %s1527 = smul.addr %s1526, 16
        %s1528 = scalar_lea.vmem [#allocation2], %s1527
        // Predicated region
        $region65: #{forward.1} parent=63 // pred_check
          %p1529 = pneg %p274
        $region66: #{forward.1} parent=63 // pred_check_branch
          %1531 = sbr.rel (%p1529) target = $region68
        $region67: #{forward.1} parent=63 // pred_region
          %s1532 = smul.u32 2, %s25
          %s1534 = ssub.s32 256, 256
          %1535 = vsyncadd %s1525, %s1534
          %s1536 = smul.addr %s1532, 128
          %s1537 = scalar_lea.hbm %s11, %s1536
          %s1538 = sshll.u32 %s1528, 4
          %s1539 = int_to_ptr.vmem [resolvable:$true] %s1538
          %1544 = dma.vmem_to_hbm [thread:$0]  %s1539, 256, %s1537, %s1525, 128, 128, 8
        $region68: #{forward.1} parent=63 // pred_fallthru
          _
      $region64: #{forward.1} parent=5 // pred_fallthru
        _
      %p1545 = scmp.le.s32.totalorder 2, %s20
      // Predicated region
      $region69: #{forward.1} parent=5 // pred_check
        %p1546 = pneg %p1545
      $region70: #{forward.1} parent=5 // pred_check_branch
        %1548 = sbr.rel (%p1546) target = $region72
      $region71: #{forward.1} parent=5 // pred_region
        %s1549 = ssub.s32 %s20, 2
        // Predicated region
        $region73: #{forward.1} parent=71 // pred_check
          %p1550 = pneg %p280
        $region74: #{forward.1} parent=71 // pred_check_branch
          %1552 = sbr.rel (%p1550) target = $region76
        $region75: #{forward.1} parent=71 // pred_region
          %s1553 = sand.u32 %s265, 1
          %s1554 = scalar_lea.sflag [#allocation3], %s1553
          %s1555 = sand.u32 %s265, 1
          %s1556 = smul.addr %s1555, 16
          %s1557 = scalar_lea.vmem [#allocation2], %s1556
          %1558 = dma.done %s1554, 256
        $region76: #{forward.1} parent=71 // pred_fallthru
          _
      $region72: #{forward.1} parent=5 // pred_fallthru
        _
    $region6: #{forward.1} parent=1 // loop_footer
      %s24 = sadd.s32 1, %s20
    $region7: #{forward.1} parent=1 // loop_footer_branch
      %19 = sbr.rel target = $region3
    $region8: #{forward.1} parent=1 // loop_exit
      _
    %1559 = vsyncpa [#allocation3], 1
    %s1560 = scalar_lea.sflag [#allocation3], 1
    %1561 = vsyncpa %s1560, 1

</llo_original>
